<compile_context>
chip_gen: v7x
topology: tpu7x:2x2x1
jax: 0.10.0
libtpu: 0.0.40
codegen_flags: <defaults>
</compile_context>

<pallas_src>
import functools

import jax
import jax.numpy as jnp
from jax import lax
from jax.experimental import pallas as pl
from jax.experimental.pallas import tpu as pltpu


# ----------------------------------------------------------------------------
# Pallas kernel: one full bidirectional LSTM layer, grid=(1,).
# ----------------------------------------------------------------------------
def _bidir_lstm_layer_kernel(x_ref, wih_f_ref, whh_f_ref, b_f_ref,
                             wih_b_ref, whh_b_ref, b_b_ref,
                             out_ref, gx_f_scr, gx_b_scr,
                             *, seq_len, batch):
    T, B = seq_len, batch
    H = whh_f_ref.shape[0]

    # ---- Hoisted input projection: one large MXU matmul per direction, with
    # the (b_ih + b_hh) bias folded in so the loop never re-adds/broadcasts it.
    x_bf16 = x_ref[...].astype(jnp.bfloat16)                    # (T*B, D)
    gx_f_scr[...] = (
        jnp.dot(x_bf16, wih_f_ref[...], preferred_element_type=jnp.float32)
        + b_f_ref[...])                                         # (T*B, 4H) f32
    gx_b_scr[...] = (
        jnp.dot(x_bf16, wih_b_ref[...], preferred_element_type=jnp.float32)
        + b_b_ref[...])

    # Recurrent weights stay resident in vregs/VMEM for the whole loop.
    whh_f = whh_f_ref[...]                                      # (H, 4H) bf16
    whh_b = whh_b_ref[...]

    def cell(gates, c):
        # PyTorch gate order: i, f, g, o.
        # NOTE: 4H is a multiple of 128 here; individual gate slices are 32
        # lanes wide (sub-vreg), acceptable at these shapes.
        i_g = jax.nn.sigmoid(gates[:, 0:H])
        f_g = jax.nn.sigmoid(gates[:, H:2 * H])
        g_g = jnp.tanh(gates[:, 2 * H:3 * H])
        o_g = jax.nn.sigmoid(gates[:, 3 * H:4 * H])
        c_new = f_g * c + i_g * g_g
        h_new = o_g * jnp.tanh(c_new)
        return h_new, c_new

    def step(t, carry):
        h_f, c_f, h_b, c_b = carry

        # Forward direction processes timestep t.
        row_f = pl.multiple_of(t * B, B)
        g_f = gx_f_scr[pl.ds(row_f, B), :] + jnp.dot(
            h_f.astype(whh_f.dtype), whh_f, preferred_element_type=jnp.float32)
        h_f, c_f = cell(g_f, c_f)
        out_ref[pl.ds(row_f, B), pl.ds(0, H)] = h_f.astype(out_ref.dtype)

        # Backward direction processes timestep T-1-t.
        row_b = pl.multiple_of((T - 1 - t) * B, B)
        g_b = gx_b_scr[pl.ds(row_b, B), :] + jnp.dot(
            h_b.astype(whh_b.dtype), whh_b, preferred_element_type=jnp.float32)
        h_b, c_b = cell(g_b, c_b)
        out_ref[pl.ds(row_b, B), pl.ds(H, H)] = h_b.astype(out_ref.dtype)

        return h_f, c_f, h_b, c_b

    zeros = jnp.zeros((B, H), jnp.float32)
    lax.fori_loop(0, T, step, (zeros, zeros, zeros, zeros),
                  unroll=bool(T <= 32))


def _bidir_lstm_layer(x_tbd, p_fwd, p_bwd, hidden_size):
    """x_tbd: (T, B, D_in) f32 -> (T, B, 2H) f32 (both directions, fused)."""
    T, B, D = x_tbd.shape
    H = hidden_size
    x2 = x_tbd.reshape(T * B, D)                   # fold time into sublane axis

    m = T * B
    flops = 2 * (2 * m * D * 4 * H + 2 * m * H * 4 * H)         # both dirs
    transcendentals = 2 * m * 5 * H                              # 3 sigmoid + 2 tanh
    bytes_accessed = (m * D * 4                                  # x (f32)
                      + 2 * ((D + H) * 4 * H * 2 + 4 * H * 4)    # bf16 W + f32 b
                      + m * 2 * H * 4)                           # out (f32)
    cost = pl.CostEstimate(flops=flops, transcendentals=transcendentals,
                           bytes_accessed=bytes_accessed)

    kernel = functools.partial(_bidir_lstm_layer_kernel, seq_len=T, batch=B)

    out2 = pl.pallas_call(
        kernel,
        out_shape=jax.ShapeDtypeStruct((T * B, 2 * H), jnp.float32),
        grid_spec=pltpu.PrefetchScalarGridSpec(
            num_scalar_prefetch=0,
            grid=(1,),
            in_specs=[
                pl.BlockSpec((T * B, D), lambda i: (0, 0)),      # x (flattened)
                pl.BlockSpec((D, 4 * H), lambda i: (0, 0)),      # W_ih fwd (bf16)
                pl.BlockSpec((H, 4 * H), lambda i: (0, 0)),      # W_hh fwd (bf16)
                pl.BlockSpec((1, 4 * H), lambda i: (0, 0)),      # bias fwd (f32)
                pl.BlockSpec((D, 4 * H), lambda i: (0, 0)),      # W_ih bwd
                pl.BlockSpec((H, 4 * H), lambda i: (0, 0)),      # W_hh bwd
                pl.BlockSpec((1, 4 * H), lambda i: (0, 0)),      # bias bwd
            ],
            out_specs=pl.BlockSpec((T * B, 2 * H), lambda i: (0, 0)),
            scratch_shapes=[
                pltpu.VMEM((T * B, 4 * H), jnp.float32),   # precomputed x-gates fwd
                pltpu.VMEM((T * B, 4 * H), jnp.float32),   # precomputed x-gates bwd
            ]),
        compiler_params=pltpu.CompilerParams(
            dimension_semantics=("arbitrary",)),   # single sequential grid step
        cost_estimate=cost,
    )(x2, p_fwd["w_ih"], p_fwd["w_hh"], p_fwd["b"],
      p_bwd["w_ih"], p_bwd["w_hh"], p_bwd["b"])

    return out2.reshape(T, B, 2 * H)


# ----------------------------------------------------------------------------
# Parameter init (PyTorch shapes; uniform(-1/sqrt(H), 1/sqrt(H)); bf16 weights).
# ----------------------------------------------------------------------------
def init_params(key, num_words, num_layers, hidden_size):
    H = hidden_size
    scale = 1.0 / (H ** 0.5)
    params = {}

    key, k_emb = jax.random.split(key)
    params["embedding"] = jax.random.normal(k_emb, (num_words, H), jnp.float32)

    layers = []
    for layer in range(num_layers):
        d_in = H if layer == 0 else 2 * H
        dirs = []
        for _ in range(2):  # forward, backward
            key, k1, k2, k3, k4 = jax.random.split(key, 5)
            # Stored transposed for (M, D) @ (D, 4H) matmuls; bf16 for the MXU.
            w_ih = jax.random.uniform(k1, (d_in, 4 * H), jnp.float32, -scale, scale)
            w_hh = jax.random.uniform(k2, (H, 4 * H), jnp.float32, -scale, scale)
            b_ih = jax.random.uniform(k3, (4 * H,), jnp.float32, -scale, scale)
            b_hh = jax.random.uniform(k4, (4 * H,), jnp.float32, -scale, scale)
            dirs.append({
                "w_ih": w_ih.astype(jnp.bfloat16),
                "w_hh": w_hh.astype(jnp.bfloat16),
                "b": (b_ih + b_hh).reshape(1, 4 * H),   # f32, folded bias
            })
        layers.append(dirs)
    params["lstm"] = layers
    return params


# ----------------------------------------------------------------------------
# Full forward: embedding lookup + stacked bidirectional LSTM.
# ----------------------------------------------------------------------------
def lstm_sentence_encoding(token_ids, params, num_layers, hidden_size):
    """token_ids: (B, T) int32 -> (B, T, 2*hidden_size) float32."""
    emb = jnp.take(params["embedding"], token_ids, axis=0)   # (B, T, H) glue
    x = jnp.transpose(emb, (1, 0, 2))                        # (T, B, H) time-major
    for layer in range(num_layers):
        p_fwd, p_bwd = params["lstm"][layer]
        x = _bidir_lstm_layer(x, p_fwd, p_bwd, hidden_size)  # (T, B, 2H)
        # TODO(synk): inter-layer dropout (dropout=0 in the spec, so a no-op).
    return jnp.transpose(x, (1, 0, 2))                       # (B, T, 2H)


# ----------------------------------------------------------------------------
# Pure-JAX reference (same bf16 rounding of matmul inputs, f32 accumulation).
# ----------------------------------------------------------------------------
def _reference_forward(token_ids, params, num_layers, hidden_size):
    H = hidden_size
    emb = jnp.take(params["embedding"], token_ids, axis=0)
    x = jnp.transpose(emb, (1, 0, 2))                        # (T, B, H)

    def run_dir(x_tbd, p, reverse):
        w_ih = p["w_ih"].astype(jnp.float32)
        w_hh = p["w_hh"].astype(jnp.float32)
        b = p["b"].astype(jnp.float32)
        xs = x_tbd[::-1] if reverse else x_tbd
        B = x_tbd.shape[1]

        def step(carry, x_t):
            h, c = carry
            g = (x_t.astype(jnp.bfloat16).astype(jnp.float32) @ w_ih
                 + h.astype(jnp.bfloat16).astype(jnp.float32) @ w_hh + b)
            i = jax.nn.sigmoid(g[:, 0:H])
            f = jax.nn.sigmoid(g[:, H:2 * H])
            gg = jnp.tanh(g[:, 2 * H:3 * H])
            o = jax.nn.sigmoid(g[:, 3 * H:4 * H])
            c = f * c + i * gg
            h = o * jnp.tanh(c)
            return (h, c), h

        init = (jnp.zeros((B, H), jnp.float32), jnp.zeros((B, H), jnp.float32))
        _, hs = lax.scan(step, init, xs)
        return hs[::-1] if reverse else hs

    for layer in range(num_layers):
        p_fwd, p_bwd = params["lstm"][layer]
        hf = run_dir(x, p_fwd, reverse=False)
        hb = run_dir(x, p_bwd, reverse=True)
        x = jnp.concatenate([hf, hb], axis=-1)
    return jnp.transpose(x, (1, 0, 2))


if __name__ == "__main__":
    num_words = 100
    num_layers = 2
    hidden_size = 32
    batch = 2
    seq = 8

    key = jax.random.PRNGKey(0)
    key, k_tok = jax.random.split(key)
    token_ids = jax.random.randint(k_tok, (batch, seq), 0, num_words, jnp.int32)

    params = init_params(key, num_words, num_layers, hidden_size)

    fwd = jax.jit(functools.partial(lstm_sentence_encoding,
                                    num_layers=num_layers,
                                    hidden_size=hidden_size))
    out = fwd(token_ids, params)
    jax.block_until_ready(out)

    assert out.shape == (batch, seq, 2 * hidden_size), out.shape
    assert out.dtype == jnp.float32

    ref = _reference_forward(token_ids, params, num_layers, hidden_size)
    jax.block_until_ready(ref)
    max_err = float(jnp.max(jnp.abs(out - ref)))
    assert max_err < 3e-2, f"max abs error vs reference: {max_err}"

    print("KERNEL_OK")
</pallas_src>

<mosaic_0001>
module attributes {stable_mosaic.version = 11 : i64} {
  func.func @_bidir_lstm_layer_kernel(%arg0: i32, %arg1: memref<16x32xf32, #tpu.memory_space<vmem>>, %arg2: memref<32x128xbf16, #tpu.memory_space<vmem>>, %arg3: memref<32x128xbf16, #tpu.memory_space<vmem>>, %arg4: memref<1x128xf32, #tpu.memory_space<vmem>>, %arg5: memref<32x128xbf16, #tpu.memory_space<vmem>>, %arg6: memref<32x128xbf16, #tpu.memory_space<vmem>>, %arg7: memref<1x128xf32, #tpu.memory_space<vmem>>, %arg8: memref<16x64xf32, #tpu.memory_space<vmem>>, %arg9: memref<16x128xf32, #tpu.memory_space<vmem>>, %arg10: memref<16x128xf32, #tpu.memory_space<vmem>>) attributes {dimension_semantics = [#tpu.dimension_semantics<arbitrary>], iteration_bounds = array<i64: 1>, scalar_prefetch = 0 : i64, scratch_operands = 2 : i64, tpu.core_type = #tpu.core_type<tc>, window_params = [{pipeline_mode = #tpu.pipeline_mode<synchronous>, transform_indices = @transform_0, window_bounds = array<i64: 16, 32>}, {pipeline_mode = #tpu.pipeline_mode<synchronous>, transform_indices = @transform_1, window_bounds = array<i64: 32, 128>}, {pipeline_mode = #tpu.pipeline_mode<synchronous>, transform_indices = @transform_2, window_bounds = array<i64: 32, 128>}, {pipeline_mode = #tpu.pipeline_mode<synchronous>, transform_indices = @transform_3, window_bounds = array<i64: 1, 128>}, {pipeline_mode = #tpu.pipeline_mode<synchronous>, transform_indices = @transform_4, window_bounds = array<i64: 32, 128>}, {pipeline_mode = #tpu.pipeline_mode<synchronous>, transform_indices = @transform_5, window_bounds = array<i64: 32, 128>}, {pipeline_mode = #tpu.pipeline_mode<synchronous>, transform_indices = @transform_6, window_bounds = array<i64: 1, 128>}, {pipeline_mode = #tpu.pipeline_mode<synchronous>, transform_indices = @transform_7, window_bounds = array<i64: 16, 64>}]} {
    %c0 = arith.constant 0 : index
    %c0_0 = arith.constant 0 : index
    %0 = vector.load %arg1[%c0, %c0_0] : memref<16x32xf32, #tpu.memory_space<vmem>>, vector<16x32xf32>
    %1 = arith.truncf %0 : vector<16x32xf32> to vector<16x32xbf16>
    %c0_1 = arith.constant 0 : index
    %c0_2 = arith.constant 0 : index
    %2 = vector.load %arg2[%c0_1, %c0_2] : memref<32x128xbf16, #tpu.memory_space<vmem>>, vector<32x128xbf16>
    %cst = arith.constant dense<0.000000e+00> : vector<16x128xf32>
    %3 = tpu.matmul %1, %2, %cst {dimension_numbers = #tpu.dot_dimension_numbers<[1], [0], [0], [1], [0, 0, 1, 1], [], []>} : vector<16x32xbf16>, vector<32x128xbf16>, vector<16x128xf32> -> vector<16x128xf32>
    %c0_3 = arith.constant 0 : index
    %c0_4 = arith.constant 0 : index
    %4 = vector.load %arg4[%c0_3, %c0_4] : memref<1x128xf32, #tpu.memory_space<vmem>>, vector<1x128xf32>
    %5 = vector.broadcast %4 : vector<1x128xf32> to vector<16x128xf32>
    %6 = arith.addf %3, %5 : vector<16x128xf32>
    %c0_5 = arith.constant 0 : index
    %c0_6 = arith.constant 0 : index
    %7 = vector.load %arg9[%c0_5, %c0_6] : memref<16x128xf32, #tpu.memory_space<vmem>>, vector<16x128xf32>
    tpu.vector_store %arg9[%c0_5, %c0_6], %6 {strides = array<i32>} : memref<16x128xf32, #tpu.memory_space<vmem>>, vector<16x128xf32>,
    %c0_7 = arith.constant 0 : index
    %c0_8 = arith.constant 0 : index
    %8 = vector.load %arg5[%c0_7, %c0_8] : memref<32x128xbf16, #tpu.memory_space<vmem>>, vector<32x128xbf16>
    %cst_9 = arith.constant dense<0.000000e+00> : vector<16x128xf32>
    %9 = tpu.matmul %1, %8, %cst_9 {dimension_numbers = #tpu.dot_dimension_numbers<[1], [0], [0], [1], [0, 0, 1, 1], [], []>} : vector<16x32xbf16>, vector<32x128xbf16>, vector<16x128xf32> -> vector<16x128xf32>
    %c0_10 = arith.constant 0 : index
    %c0_11 = arith.constant 0 : index
    %10 = vector.load %arg7[%c0_10, %c0_11] : memref<1x128xf32, #tpu.memory_space<vmem>>, vector<1x128xf32>
    %11 = vector.broadcast %10 : vector<1x128xf32> to vector<16x128xf32>
    %12 = arith.addf %9, %11 : vector<16x128xf32>
    %c0_12 = arith.constant 0 : index
    %c0_13 = arith.constant 0 : index
    %13 = vector.load %arg10[%c0_12, %c0_13] : memref<16x128xf32, #tpu.memory_space<vmem>>, vector<16x128xf32>
    tpu.vector_store %arg10[%c0_12, %c0_13], %12 {strides = array<i32>} : memref<16x128xf32, #tpu.memory_space<vmem>>, vector<16x128xf32>,
    %c0_14 = arith.constant 0 : index
    %c0_15 = arith.constant 0 : index
    %14 = vector.load %arg3[%c0_14, %c0_15] : memref<32x128xbf16, #tpu.memory_space<vmem>>, vector<32x128xbf16>
    %c0_16 = arith.constant 0 : index
    %c0_17 = arith.constant 0 : index
    %15 = vector.load %arg6[%c0_16, %c0_17] : memref<32x128xbf16, #tpu.memory_space<vmem>>, vector<32x128xbf16>
    %cst_18 = arith.constant 0.000000e+00 : f32
    %16 = vector.broadcast %cst_18 : f32 to vector<2x32xf32>
    %c0_i32 = arith.constant 0 : i32
    %c2_i32 = arith.constant 2 : i32
    %17 = arith.muli %c0_i32, %c2_i32 : i32
    %18 = tpu.assume_multiple %17, 2 : i32
    %19 = arith.index_cast %18 : i32 to index
    %c0_19 = arith.constant 0 : index
    %20 = vector.load %arg9[%19, %c0_19] : memref<16x128xf32, #tpu.memory_space<vmem>>, vector<2x128xf32>
    %21 = arith.truncf %16 : vector<2x32xf32> to vector<2x32xbf16>
    %cst_20 = arith.constant dense<0.000000e+00> : vector<2x128xf32>
    %22 = tpu.matmul %21, %14, %cst_20 {dimension_numbers = #tpu.dot_dimension_numbers<[1], [0], [0], [1], [0, 0, 1, 1], [], []>} : vector<2x32xbf16>, vector<32x128xbf16>, vector<2x128xf32> -> vector<2x128xf32>
    %23 = arith.addf %20, %22 : vector<2x128xf32>
    %24 = vector.extract_strided_slice %23 {offsets = [0, 0], sizes = [2, 32], strides = [1, 1]} : vector<2x128xf32> to vector<2x32xf32>
    %25 = arith.negf %24 : vector<2x32xf32>
    %26 = math.exp %25 : vector<2x32xf32>
    %cst_21 = arith.constant 1.000000e+00 : f32
    %27 = vector.broadcast %cst_21 : f32 to vector<2x32xf32>
    %28 = arith.addf %27, %26 : vector<2x32xf32>
    %29 = arith.divf %27, %28 : vector<2x32xf32>
    %30 = vector.extract_strided_slice %23 {offsets = [0, 32], sizes = [2, 32], strides = [1, 1]} : vector<2x128xf32> to vector<2x32xf32>
    %31 = arith.negf %30 : vector<2x32xf32>
    %32 = math.exp %31 : vector<2x32xf32>
    %cst_22 = arith.constant 1.000000e+00 : f32
    %33 = vector.broadcast %cst_22 : f32 to vector<2x32xf32>
    %34 = arith.addf %33, %32 : vector<2x32xf32>
    %35 = arith.divf %33, %34 : vector<2x32xf32>
    %36 = vector.extract_strided_slice %23 {offsets = [0, 64], sizes = [2, 32], strides = [1, 1]} : vector<2x128xf32> to vector<2x32xf32>
    %37 = math.tanh %36 : vector<2x32xf32>
    %38 = vector.extract_strided_slice %23 {offsets = [0, 96], sizes = [2, 32], strides = [1, 1]} : vector<2x128xf32> to vector<2x32xf32>
    %39 = arith.negf %38 : vector<2x32xf32>
    %40 = math.exp %39 : vector<2x32xf32>
    %cst_23 = arith.constant 1.000000e+00 : f32
    %41 = vector.broadcast %cst_23 : f32 to vector<2x32xf32>
    %42 = arith.addf %41, %40 : vector<2x32xf32>
    %43 = arith.divf %41, %42 : vector<2x32xf32>
    %44 = arith.mulf %35, %16 : vector<2x32xf32>
    %45 = arith.mulf %29, %37 : vector<2x32xf32>
    %46 = arith.addf %44, %45 : vector<2x32xf32>
    %47 = math.tanh %46 : vector<2x32xf32>
    %48 = arith.mulf %43, %47 : vector<2x32xf32>
    %49 = arith.index_cast %18 : i32 to index
    %c0_24 = arith.constant 0 : index
    %50 = vector.load %arg8[%49, %c0_24] : memref<16x64xf32, #tpu.memory_space<vmem>>, vector<2x32xf32>
    tpu.vector_store %arg8[%49, %c0_24], %48 {strides = array<i32>} : memref<16x64xf32, #tpu.memory_space<vmem>>, vector<2x32xf32>,
    %c7_i32 = arith.constant 7 : i32
    %51 = arith.subi %c7_i32, %c0_i32 : i32
    %c2_i32_25 = arith.constant 2 : i32
    %52 = arith.muli %51, %c2_i32_25 : i32
    %53 = tpu.assume_multiple %52, 2 : i32
    %54 = arith.index_cast %53 : i32 to index
    %c0_26 = arith.constant 0 : index
    %55 = vector.load %arg10[%54, %c0_26] : memref<16x128xf32, #tpu.memory_space<vmem>>, vector<2x128xf32>
    %56 = arith.truncf %16 : vector<2x32xf32> to vector<2x32xbf16>
    %cst_27 = arith.constant dense<0.000000e+00> : vector<2x128xf32>
    %57 = tpu.matmul %56, %15, %cst_27 {dimension_numbers = #tpu.dot_dimension_numbers<[1], [0], [0], [1], [0, 0, 1, 1], [], []>} : vector<2x32xbf16>, vector<32x128xbf16>, vector<2x128xf32> -> vector<2x128xf32>
    %58 = arith.addf %55, %57 : vector<2x128xf32>
    %59 = vector.extract_strided_slice %58 {offsets = [0, 0], sizes = [2, 32], strides = [1, 1]} : vector<2x128xf32> to vector<2x32xf32>
    %60 = arith.negf %59 : vector<2x32xf32>
    %61 = math.exp %60 : vector<2x32xf32>
    %cst_28 = arith.constant 1.000000e+00 : f32
    %62 = vector.broadcast %cst_28 : f32 to vector<2x32xf32>
    %63 = arith.addf %62, %61 : vector<2x32xf32>
    %64 = arith.divf %62, %63 : vector<2x32xf32>
    %65 = vector.extract_strided_slice %58 {offsets = [0, 32], sizes = [2, 32], strides = [1, 1]} : vector<2x128xf32> to vector<2x32xf32>
    %66 = arith.negf %65 : vector<2x32xf32>
    %67 = math.exp %66 : vector<2x32xf32>
    %cst_29 = arith.constant 1.000000e+00 : f32
    %68 = vector.broadcast %cst_29 : f32 to vector<2x32xf32>
    %69 = arith.addf %68, %67 : vector<2x32xf32>
    %70 = arith.divf %68, %69 : vector<2x32xf32>
    %71 = vector.extract_strided_slice %58 {offsets = [0, 64], sizes = [2, 32], strides = [1, 1]} : vector<2x128xf32> to vector<2x32xf32>
    %72 = math.tanh %71 : vector<2x32xf32>
    %73 = vector.extract_strided_slice %58 {offsets = [0, 96], sizes = [2, 32], strides = [1, 1]} : vector<2x128xf32> to vector<2x32xf32>
    %74 = arith.negf %73 : vector<2x32xf32>
    %75 = math.exp %74 : vector<2x32xf32>
    %cst_30 = arith.constant 1.000000e+00 : f32
    %76 = vector.broadcast %cst_30 : f32 to vector<2x32xf32>
    %77 = arith.addf %76, %75 : vector<2x32xf32>
    %78 = arith.divf %76, %77 : vector<2x32xf32>
    %79 = arith.mulf %70, %16 : vector<2x32xf32>
    %80 = arith.mulf %64, %72 : vector<2x32xf32>
    %81 = arith.addf %79, %80 : vector<2x32xf32>
    %82 = math.tanh %81 : vector<2x32xf32>
    %83 = arith.mulf %78, %82 : vector<2x32xf32>
    %84 = arith.index_cast %53 : i32 to index
    %c32 = arith.constant 32 : index
    %85 = vector.load %arg8[%84, %c32] : memref<16x64xf32, #tpu.memory_space<vmem>>, vector<2x32xf32>
    tpu.vector_store %arg8[%84, %c32], %83 {strides = array<i32>} : memref<16x64xf32, #tpu.memory_space<vmem>>, vector<2x32xf32>,
    %c1_i32 = arith.constant 1 : i32
    %c2_i32_31 = arith.constant 2 : i32
    %86 = arith.muli %c1_i32, %c2_i32_31 : i32
    %87 = tpu.assume_multiple %86, 2 : i32
    %88 = arith.index_cast %87 : i32 to index
    %c0_32 = arith.constant 0 : index
    %89 = vector.load %arg9[%88, %c0_32] : memref<16x128xf32, #tpu.memory_space<vmem>>, vector<2x128xf32>
    %90 = arith.truncf %48 : vector<2x32xf32> to vector<2x32xbf16>
    %cst_33 = arith.constant dense<0.000000e+00> : vector<2x128xf32>
    %91 = tpu.matmul %90, %14, %cst_33 {dimension_numbers = #tpu.dot_dimension_numbers<[1], [0], [0], [1], [0, 0, 1, 1], [], []>} : vector<2x32xbf16>, vector<32x128xbf16>, vector<2x128xf32> -> vector<2x128xf32>
    %92 = arith.addf %89, %91 : vector<2x128xf32>
    %93 = vector.extract_strided_slice %92 {offsets = [0, 0], sizes = [2, 32], strides = [1, 1]} : vector<2x128xf32> to vector<2x32xf32>
    %94 = arith.negf %93 : vector<2x32xf32>
    %95 = math.exp %94 : vector<2x32xf32>
    %cst_34 = arith.constant 1.000000e+00 : f32
    %96 = vector.broadcast %cst_34 : f32 to vector<2x32xf32>
    %97 = arith.addf %96, %95 : vector<2x32xf32>
    %98 = arith.divf %96, %97 : vector<2x32xf32>
    %99 = vector.extract_strided_slice %92 {offsets = [0, 32], sizes = [2, 32], strides = [1, 1]} : vector<2x128xf32> to vector<2x32xf32>
    %100 = arith.negf %99 : vector<2x32xf32>
    %101 = math.exp %100 : vector<2x32xf32>
    %cst_35 = arith.constant 1.000000e+00 : f32
    %102 = vector.broadcast %cst_35 : f32 to vector<2x32xf32>
    %103 = arith.addf %102, %101 : vector<2x32xf32>
    %104 = arith.divf %102, %103 : vector<2x32xf32>
    %105 = vector.extract_strided_slice %92 {offsets = [0, 64], sizes = [2, 32], strides = [1, 1]} : vector<2x128xf32> to vector<2x32xf32>
    %106 = math.tanh %105 : vector<2x32xf32>
    %107 = vector.extract_strided_slice %92 {offsets = [0, 96], sizes = [2, 32], strides = [1, 1]} : vector<2x128xf32> to vector<2x32xf32>
    %108 = arith.negf %107 : vector<2x32xf32>
    %109 = math.exp %108 : vector<2x32xf32>
    %cst_36 = arith.constant 1.000000e+00 : f32
    %110 = vector.broadcast %cst_36 : f32 to vector<2x32xf32>
    %111 = arith.addf %110, %109 : vector<2x32xf32>
    %112 = arith.divf %110, %111 : vector<2x32xf32>
    %113 = arith.mulf %104, %46 : vector<2x32xf32>
    %114 = arith.mulf %98, %106 : vector<2x32xf32>
    %115 = arith.addf %113, %114 : vector<2x32xf32>
    %116 = math.tanh %115 : vector<2x32xf32>
    %117 = arith.mulf %112, %116 : vector<2x32xf32>
    %118 = arith.index_cast %87 : i32 to index
    %c0_37 = arith.constant 0 : index
    %119 = vector.load %arg8[%118, %c0_37] : memref<16x64xf32, #tpu.memory_space<vmem>>, vector<2x32xf32>
    tpu.vector_store %arg8[%118, %c0_37], %117 {strides = array<i32>} : memref<16x64xf32, #tpu.memory_space<vmem>>, vector<2x32xf32>,
    %c7_i32_38 = arith.constant 7 : i32
    %120 = arith.subi %c7_i32_38, %c1_i32 : i32
    %c2_i32_39 = arith.constant 2 : i32
    %121 = arith.muli %120, %c2_i32_39 : i32
    %122 = tpu.assume_multiple %121, 2 : i32
    %123 = arith.index_cast %122 : i32 to index
    %c0_40 = arith.constant 0 : index
    %124 = vector.load %arg10[%123, %c0_40] : memref<16x128xf32, #tpu.memory_space<vmem>>, vector<2x128xf32>
    %125 = arith.truncf %83 : vector<2x32xf32> to vector<2x32xbf16>
    %cst_41 = arith.constant dense<0.000000e+00> : vector<2x128xf32>
    %126 = tpu.matmul %125, %15, %cst_41 {dimension_numbers = #tpu.dot_dimension_numbers<[1], [0], [0], [1], [0, 0, 1, 1], [], []>} : vector<2x32xbf16>, vector<32x128xbf16>, vector<2x128xf32> -> vector<2x128xf32>
    %127 = arith.addf %124, %126 : vector<2x128xf32>
    %128 = vector.extract_strided_slice %127 {offsets = [0, 0], sizes = [2, 32], strides = [1, 1]} : vector<2x128xf32> to vector<2x32xf32>
    %129 = arith.negf %128 : vector<2x32xf32>
    %130 = math.exp %129 : vector<2x32xf32>
    %cst_42 = arith.constant 1.000000e+00 : f32
    %131 = vector.broadcast %cst_42 : f32 to vector<2x32xf32>
    %132 = arith.addf %131, %130 : vector<2x32xf32>
    %133 = arith.divf %131, %132 : vector<2x32xf32>
    %134 = vector.extract_strided_slice %127 {offsets = [0, 32], sizes = [2, 32], strides = [1, 1]} : vector<2x128xf32> to vector<2x32xf32>
    %135 = arith.negf %134 : vector<2x32xf32>
    %136 = math.exp %135 : vector<2x32xf32>
    %cst_43 = arith.constant 1.000000e+00 : f32
    %137 = vector.broadcast %cst_43 : f32 to vector<2x32xf32>
    %138 = arith.addf %137, %136 : vector<2x32xf32>
    %139 = arith.divf %137, %138 : vector<2x32xf32>
    %140 = vector.extract_strided_slice %127 {offsets = [0, 64], sizes = [2, 32], strides = [1, 1]} : vector<2x128xf32> to vector<2x32xf32>
    %141 = math.tanh %140 : vector<2x32xf32>
    %142 = vector.extract_strided_slice %127 {offsets = [0, 96], sizes = [2, 32], strides = [1, 1]} : vector<2x128xf32> to vector<2x32xf32>
    %143 = arith.negf %142 : vector<2x32xf32>
    %144 = math.exp %143 : vector<2x32xf32>
    %cst_44 = arith.constant 1.000000e+00 : f32
    %145 = vector.broadcast %cst_44 : f32 to vector<2x32xf32>
    %146 = arith.addf %145, %144 : vector<2x32xf32>
    %147 = arith.divf %145, %146 : vector<2x32xf32>
    %148 = arith.mulf %139, %81 : vector<2x32xf32>
    %149 = arith.mulf %133, %141 : vector<2x32xf32>
    %150 = arith.addf %148, %149 : vector<2x32xf32>
    %151 = math.tanh %150 : vector<2x32xf32>
    %152 = arith.mulf %147, %151 : vector<2x32xf32>
    %153 = arith.index_cast %122 : i32 to index
    %c32_45 = arith.constant 32 : index
    %154 = vector.load %arg8[%153, %c32_45] : memref<16x64xf32, #tpu.memory_space<vmem>>, vector<2x32xf32>
    tpu.vector_store %arg8[%153, %c32_45], %152 {strides = array<i32>} : memref<16x64xf32, #tpu.memory_space<vmem>>, vector<2x32xf32>,
    %c2_i32_46 = arith.constant 2 : i32
    %c2_i32_47 = arith.constant 2 : i32
    %155 = arith.muli %c2_i32_46, %c2_i32_47 : i32
    %156 = tpu.assume_multiple %155, 2 : i32
    %157 = arith.index_cast %156 : i32 to index
    %c0_48 = arith.constant 0 : index
    %158 = vector.load %arg9[%157, %c0_48] : memref<16x128xf32, #tpu.memory_space<vmem>>, vector<2x128xf32>
    %159 = arith.truncf %117 : vector<2x32xf32> to vector<2x32xbf16>
    %cst_49 = arith.constant dense<0.000000e+00> : vector<2x128xf32>
    %160 = tpu.matmul %159, %14, %cst_49 {dimension_numbers = #tpu.dot_dimension_numbers<[1], [0], [0], [1], [0, 0, 1, 1], [], []>} : vector<2x32xbf16>, vector<32x128xbf16>, vector<2x128xf32> -> vector<2x128xf32>
    %161 = arith.addf %158, %160 : vector<2x128xf32>
    %162 = vector.extract_strided_slice %161 {offsets = [0, 0], sizes = [2, 32], strides = [1, 1]} : vector<2x128xf32> to vector<2x32xf32>
    %163 = arith.negf %162 : vector<2x32xf32>
    %164 = math.exp %163 : vector<2x32xf32>
    %cst_50 = arith.constant 1.000000e+00 : f32
    %165 = vector.broadcast %cst_50 : f32 to vector<2x32xf32>
    %166 = arith.addf %165, %164 : vector<2x32xf32>
    %167 = arith.divf %165, %166 : vector<2x32xf32>
    %168 = vector.extract_strided_slice %161 {offsets = [0, 32], sizes = [2, 32], strides = [1, 1]} : vector<2x128xf32> to vector<2x32xf32>
    %169 = arith.negf %168 : vector<2x32xf32>
    %170 = math.exp %169 : vector<2x32xf32>
    %cst_51 = arith.constant 1.000000e+00 : f32
    %171 = vector.broadcast %cst_51 : f32 to vector<2x32xf32>
    %172 = arith.addf %171, %170 : vector<2x32xf32>
    %173 = arith.divf %171, %172 : vector<2x32xf32>
    %174 = vector.extract_strided_slice %161 {offsets = [0, 64], sizes = [2, 32], strides = [1, 1]} : vector<2x128xf32> to vector<2x32xf32>
    %175 = math.tanh %174 : vector<2x32xf32>
    %176 = vector.extract_strided_slice %161 {offsets = [0, 96], sizes = [2, 32], strides = [1, 1]} : vector<2x128xf32> to vector<2x32xf32>
    %177 = arith.negf %176 : vector<2x32xf32>
    %178 = math.exp %177 : vector<2x32xf32>
    %cst_52 = arith.constant 1.000000e+00 : f32
    %179 = vector.broadcast %cst_52 : f32 to vector<2x32xf32>
    %180 = arith.addf %179, %178 : vector<2x32xf32>
    %181 = arith.divf %179, %180 : vector<2x32xf32>
    %182 = arith.mulf %173, %115 : vector<2x32xf32>
    %183 = arith.mulf %167, %175 : vector<2x32xf32>
    %184 = arith.addf %182, %183 : vector<2x32xf32>
    %185 = math.tanh %184 : vector<2x32xf32>
    %186 = arith.mulf %181, %185 : vector<2x32xf32>
    %187 = arith.index_cast %156 : i32 to index
    %c0_53 = arith.constant 0 : index
    %188 = vector.load %arg8[%187, %c0_53] : memref<16x64xf32, #tpu.memory_space<vmem>>, vector<2x32xf32>
    tpu.vector_store %arg8[%187, %c0_53], %186 {strides = array<i32>} : memref<16x64xf32, #tpu.memory_space<vmem>>, vector<2x32xf32>,
    %c7_i32_54 = arith.constant 7 : i32
    %189 = arith.subi %c7_i32_54, %c2_i32_46 : i32
    %c2_i32_55 = arith.constant 2 : i32
    %190 = arith.muli %189, %c2_i32_55 : i32
    %191 = tpu.assume_multiple %190, 2 : i32
    %192 = arith.index_cast %191 : i32 to index
    %c0_56 = arith.constant 0 : index
    %193 = vector.load %arg10[%192, %c0_56] : memref<16x128xf32, #tpu.memory_space<vmem>>, vector<2x128xf32>
    %194 = arith.truncf %152 : vector<2x32xf32> to vector<2x32xbf16>
    %cst_57 = arith.constant dense<0.000000e+00> : vector<2x128xf32>
    %195 = tpu.matmul %194, %15, %cst_57 {dimension_numbers = #tpu.dot_dimension_numbers<[1], [0], [0], [1], [0, 0, 1, 1], [], []>} : vector<2x32xbf16>, vector<32x128xbf16>, vector<2x128xf32> -> vector<2x128xf32>
    %196 = arith.addf %193, %195 : vector<2x128xf32>
    %197 = vector.extract_strided_slice %196 {offsets = [0, 0], sizes = [2, 32], strides = [1, 1]} : vector<2x128xf32> to vector<2x32xf32>
    %198 = arith.negf %197 : vector<2x32xf32>
    %199 = math.exp %198 : vector<2x32xf32>
    %cst_58 = arith.constant 1.000000e+00 : f32
    %200 = vector.broadcast %cst_58 : f32 to vector<2x32xf32>
    %201 = arith.addf %200, %199 : vector<2x32xf32>
    %202 = arith.divf %200, %201 : vector<2x32xf32>
    %203 = vector.extract_strided_slice %196 {offsets = [0, 32], sizes = [2, 32], strides = [1, 1]} : vector<2x128xf32> to vector<2x32xf32>
    %204 = arith.negf %203 : vector<2x32xf32>
    %205 = math.exp %204 : vector<2x32xf32>
    %cst_59 = arith.constant 1.000000e+00 : f32
    %206 = vector.broadcast %cst_59 : f32 to vector<2x32xf32>
    %207 = arith.addf %206, %205 : vector<2x32xf32>
    %208 = arith.divf %206, %207 : vector<2x32xf32>
    %209 = vector.extract_strided_slice %196 {offsets = [0, 64], sizes = [2, 32], strides = [1, 1]} : vector<2x128xf32> to vector<2x32xf32>
    %210 = math.tanh %209 : vector<2x32xf32>
    %211 = vector.extract_strided_slice %196 {offsets = [0, 96], sizes = [2, 32], strides = [1, 1]} : vector<2x128xf32> to vector<2x32xf32>
    %212 = arith.negf %211 : vector<2x32xf32>
    %213 = math.exp %212 : vector<2x32xf32>
    %cst_60 = arith.constant 1.000000e+00 : f32
    %214 = vector.broadcast %cst_60 : f32 to vector<2x32xf32>
    %215 = arith.addf %214, %213 : vector<2x32xf32>
    %216 = arith.divf %214, %215 : vector<2x32xf32>
    %217 = arith.mulf %208, %150 : vector<2x32xf32>
    %218 = arith.mulf %202, %210 : vector<2x32xf32>
    %219 = arith.addf %217, %218 : vector<2x32xf32>
    %220 = math.tanh %219 : vector<2x32xf32>
    %221 = arith.mulf %216, %220 : vector<2x32xf32>
    %222 = arith.index_cast %191 : i32 to index
    %c32_61 = arith.constant 32 : index
    %223 = vector.load %arg8[%222, %c32_61] : memref<16x64xf32, #tpu.memory_space<vmem>>, vector<2x32xf32>
    tpu.vector_store %arg8[%222, %c32_61], %221 {strides = array<i32>} : memref<16x64xf32, #tpu.memory_space<vmem>>, vector<2x32xf32>,
    %c3_i32 = arith.constant 3 : i32
    %c2_i32_62 = arith.constant 2 : i32
    %224 = arith.muli %c3_i32, %c2_i32_62 : i32
    %225 = tpu.assume_multiple %224, 2 : i32
    %226 = arith.index_cast %225 : i32 to index
    %c0_63 = arith.constant 0 : index
    %227 = vector.load %arg9[%226, %c0_63] : memref<16x128xf32, #tpu.memory_space<vmem>>, vector<2x128xf32>
    %228 = arith.truncf %186 : vector<2x32xf32> to vector<2x32xbf16>
    %cst_64 = arith.constant dense<0.000000e+00> : vector<2x128xf32>
    %229 = tpu.matmul %228, %14, %cst_64 {dimension_numbers = #tpu.dot_dimension_numbers<[1], [0], [0], [1], [0, 0, 1, 1], [], []>} : vector<2x32xbf16>, vector<32x128xbf16>, vector<2x128xf32> -> vector<2x128xf32>
    %230 = arith.addf %227, %229 : vector<2x128xf32>
    %231 = vector.extract_strided_slice %230 {offsets = [0, 0], sizes = [2, 32], strides = [1, 1]} : vector<2x128xf32> to vector<2x32xf32>
    %232 = arith.negf %231 : vector<2x32xf32>
    %233 = math.exp %232 : vector<2x32xf32>
    %cst_65 = arith.constant 1.000000e+00 : f32
    %234 = vector.broadcast %cst_65 : f32 to vector<2x32xf32>
    %235 = arith.addf %234, %233 : vector<2x32xf32>
    %236 = arith.divf %234, %235 : vector<2x32xf32>
    %237 = vector.extract_strided_slice %230 {offsets = [0, 32], sizes = [2, 32], strides = [1, 1]} : vector<2x128xf32> to vector<2x32xf32>
    %238 = arith.negf %237 : vector<2x32xf32>
    %239 = math.exp %238 : vector<2x32xf32>
    %cst_66 = arith.constant 1.000000e+00 : f32
    %240 = vector.broadcast %cst_66 : f32 to vector<2x32xf32>
    %241 = arith.addf %240, %239 : vector<2x32xf32>
    %242 = arith.divf %240, %241 : vector<2x32xf32>
    %243 = vector.extract_strided_slice %230 {offsets = [0, 64], sizes = [2, 32], strides = [1, 1]} : vector<2x128xf32> to vector<2x32xf32>
    %244 = math.tanh %243 : vector<2x32xf32>
    %245 = vector.extract_strided_slice %230 {offsets = [0, 96], sizes = [2, 32], strides = [1, 1]} : vector<2x128xf32> to vector<2x32xf32>
    %246 = arith.negf %245 : vector<2x32xf32>
    %247 = math.exp %246 : vector<2x32xf32>
    %cst_67 = arith.constant 1.000000e+00 : f32
    %248 = vector.broadcast %cst_67 : f32 to vector<2x32xf32>
    %249 = arith.addf %248, %247 : vector<2x32xf32>
    %250 = arith.divf %248, %249 : vector<2x32xf32>
    %251 = arith.mulf %242, %184 : vector<2x32xf32>
    %252 = arith.mulf %236, %244 : vector<2x32xf32>
    %253 = arith.addf %251, %252 : vector<2x32xf32>
    %254 = math.tanh %253 : vector<2x32xf32>
    %255 = arith.mulf %250, %254 : vector<2x32xf32>
    %256 = arith.index_cast %225 : i32 to index
    %c0_68 = arith.constant 0 : index
    %257 = vector.load %arg8[%256, %c0_68] : memref<16x64xf32, #tpu.memory_space<vmem>>, vector<2x32xf32>
    tpu.vector_store %arg8[%256, %c0_68], %255 {strides = array<i32>} : memref<16x64xf32, #tpu.memory_space<vmem>>, vector<2x32xf32>,
    %c7_i32_69 = arith.constant 7 : i32
    %258 = arith.subi %c7_i32_69, %c3_i32 : i32
    %c2_i32_70 = arith.constant 2 : i32
    %259 = arith.muli %258, %c2_i32_70 : i32
    %260 = tpu.assume_multiple %259, 2 : i32
    %261 = arith.index_cast %260 : i32 to index
    %c0_71 = arith.constant 0 : index
    %262 = vector.load %arg10[%261, %c0_71] : memref<16x128xf32, #tpu.memory_space<vmem>>, vector<2x128xf32>
    %263 = arith.truncf %221 : vector<2x32xf32> to vector<2x32xbf16>
    %cst_72 = arith.constant dense<0.000000e+00> : vector<2x128xf32>
    %264 = tpu.matmul %263, %15, %cst_72 {dimension_numbers = #tpu.dot_dimension_numbers<[1], [0], [0], [1], [0, 0, 1, 1], [], []>} : vector<2x32xbf16>, vector<32x128xbf16>, vector<2x128xf32> -> vector<2x128xf32>
    %265 = arith.addf %262, %264 : vector<2x128xf32>
    %266 = vector.extract_strided_slice %265 {offsets = [0, 0], sizes = [2, 32], strides = [1, 1]} : vector<2x128xf32> to vector<2x32xf32>
    %267 = arith.negf %266 : vector<2x32xf32>
    %268 = math.exp %267 : vector<2x32xf32>
    %cst_73 = arith.constant 1.000000e+00 : f32
    %269 = vector.broadcast %cst_73 : f32 to vector<2x32xf32>
    %270 = arith.addf %269, %268 : vector<2x32xf32>
    %271 = arith.divf %269, %270 : vector<2x32xf32>
    %272 = vector.extract_strided_slice %265 {offsets = [0, 32], sizes = [2, 32], strides = [1, 1]} : vector<2x128xf32> to vector<2x32xf32>
    %273 = arith.negf %272 : vector<2x32xf32>
    %274 = math.exp %273 : vector<2x32xf32>
    %cst_74 = arith.constant 1.000000e+00 : f32
    %275 = vector.broadcast %cst_74 : f32 to vector<2x32xf32>
    %276 = arith.addf %275, %274 : vector<2x32xf32>
    %277 = arith.divf %275, %276 : vector<2x32xf32>
    %278 = vector.extract_strided_slice %265 {offsets = [0, 64], sizes = [2, 32], strides = [1, 1]} : vector<2x128xf32> to vector<2x32xf32>
    %279 = math.tanh %278 : vector<2x32xf32>
    %280 = vector.extract_strided_slice %265 {offsets = [0, 96], sizes = [2, 32], strides = [1, 1]} : vector<2x128xf32> to vector<2x32xf32>
    %281 = arith.negf %280 : vector<2x32xf32>
    %282 = math.exp %281 : vector<2x32xf32>
    %cst_75 = arith.constant 1.000000e+00 : f32
    %283 = vector.broadcast %cst_75 : f32 to vector<2x32xf32>
    %284 = arith.addf %283, %282 : vector<2x32xf32>
    %285 = arith.divf %283, %284 : vector<2x32xf32>
    %286 = arith.mulf %277, %219 : vector<2x32xf32>
    %287 = arith.mulf %271, %279 : vector<2x32xf32>
    %288 = arith.addf %286, %287 : vector<2x32xf32>
    %289 = math.tanh %288 : vector<2x32xf32>
    %290 = arith.mulf %285, %289 : vector<2x32xf32>
    %291 = arith.index_cast %260 : i32 to index
    %c32_76 = arith.constant 32 : index
    %292 = vector.load %arg8[%291, %c32_76] : memref<16x64xf32, #tpu.memory_space<vmem>>, vector<2x32xf32>
    tpu.vector_store %arg8[%291, %c32_76], %290 {strides = array<i32>} : memref<16x64xf32, #tpu.memory_space<vmem>>, vector<2x32xf32>,
    %c4_i32 = arith.constant 4 : i32
    %c2_i32_77 = arith.constant 2 : i32
    %293 = arith.muli %c4_i32, %c2_i32_77 : i32
    %294 = tpu.assume_multiple %293, 2 : i32
    %295 = arith.index_cast %294 : i32 to index
    %c0_78 = arith.constant 0 : index
    %296 = vector.load %arg9[%295, %c0_78] : memref<16x128xf32, #tpu.memory_space<vmem>>, vector<2x128xf32>
    %297 = arith.truncf %255 : vector<2x32xf32> to vector<2x32xbf16>
    %cst_79 = arith.constant dense<0.000000e+00> : vector<2x128xf32>
    %298 = tpu.matmul %297, %14, %cst_79 {dimension_numbers = #tpu.dot_dimension_numbers<[1], [0], [0], [1], [0, 0, 1, 1], [], []>} : vector<2x32xbf16>, vector<32x128xbf16>, vector<2x128xf32> -> vector<2x128xf32>
    %299 = arith.addf %296, %298 : vector<2x128xf32>
    %300 = vector.extract_strided_slice %299 {offsets = [0, 0], sizes = [2, 32], strides = [1, 1]} : vector<2x128xf32> to vector<2x32xf32>
    %301 = arith.negf %300 : vector<2x32xf32>
    %302 = math.exp %301 : vector<2x32xf32>
    %cst_80 = arith.constant 1.000000e+00 : f32
    %303 = vector.broadcast %cst_80 : f32 to vector<2x32xf32>
    %304 = arith.addf %303, %302 : vector<2x32xf32>
    %305 = arith.divf %303, %304 : vector<2x32xf32>
    %306 = vector.extract_strided_slice %299 {offsets = [0, 32], sizes = [2, 32], strides = [1, 1]} : vector<2x128xf32> to vector<2x32xf32>
    %307 = arith.negf %306 : vector<2x32xf32>
    %308 = math.exp %307 : vector<2x32xf32>
    %cst_81 = arith.constant 1.000000e+00 : f32
    %309 = vector.broadcast %cst_81 : f32 to vector<2x32xf32>
    %310 = arith.addf %309, %308 : vector<2x32xf32>
    %311 = arith.divf %309, %310 : vector<2x32xf32>
    %312 = vector.extract_strided_slice %299 {offsets = [0, 64], sizes = [2, 32], strides = [1, 1]} : vector<2x128xf32> to vector<2x32xf32>
    %313 = math.tanh %312 : vector<2x32xf32>
    %314 = vector.extract_strided_slice %299 {offsets = [0, 96], sizes = [2, 32], strides = [1, 1]} : vector<2x128xf32> to vector<2x32xf32>
    %315 = arith.negf %314 : vector<2x32xf32>
    %316 = math.exp %315 : vector<2x32xf32>
    %cst_82 = arith.constant 1.000000e+00 : f32
    %317 = vector.broadcast %cst_82 : f32 to vector<2x32xf32>
    %318 = arith.addf %317, %316 : vector<2x32xf32>
    %319 = arith.divf %317, %318 : vector<2x32xf32>
    %320 = arith.mulf %311, %253 : vector<2x32xf32>
    %321 = arith.mulf %305, %313 : vector<2x32xf32>
    %322 = arith.addf %320, %321 : vector<2x32xf32>
    %323 = math.tanh %322 : vector<2x32xf32>
    %324 = arith.mulf %319, %323 : vector<2x32xf32>
    %325 = arith.index_cast %294 : i32 to index
    %c0_83 = arith.constant 0 : index
    %326 = vector.load %arg8[%325, %c0_83] : memref<16x64xf32, #tpu.memory_space<vmem>>, vector<2x32xf32>
    tpu.vector_store %arg8[%325, %c0_83], %324 {strides = array<i32>} : memref<16x64xf32, #tpu.memory_space<vmem>>, vector<2x32xf32>,
    %c7_i32_84 = arith.constant 7 : i32
    %327 = arith.subi %c7_i32_84, %c4_i32 : i32
    %c2_i32_85 = arith.constant 2 : i32
    %328 = arith.muli %327, %c2_i32_85 : i32
    %329 = tpu.assume_multiple %328, 2 : i32
    %330 = arith.index_cast %329 : i32 to index
    %c0_86 = arith.constant 0 : index
    %331 = vector.load %arg10[%330, %c0_86] : memref<16x128xf32, #tpu.memory_space<vmem>>, vector<2x128xf32>
    %332 = arith.truncf %290 : vector<2x32xf32> to vector<2x32xbf16>
    %cst_87 = arith.constant dense<0.000000e+00> : vector<2x128xf32>
    %333 = tpu.matmul %332, %15, %cst_87 {dimension_numbers = #tpu.dot_dimension_numbers<[1], [0], [0], [1], [0, 0, 1, 1], [], []>} : vector<2x32xbf16>, vector<32x128xbf16>, vector<2x128xf32> -> vector<2x128xf32>
    %334 = arith.addf %331, %333 : vector<2x128xf32>
    %335 = vector.extract_strided_slice %334 {offsets = [0, 0], sizes = [2, 32], strides = [1, 1]} : vector<2x128xf32> to vector<2x32xf32>
    %336 = arith.negf %335 : vector<2x32xf32>
    %337 = math.exp %336 : vector<2x32xf32>
    %cst_88 = arith.constant 1.000000e+00 : f32
    %338 = vector.broadcast %cst_88 : f32 to vector<2x32xf32>
    %339 = arith.addf %338, %337 : vector<2x32xf32>
    %340 = arith.divf %338, %339 : vector<2x32xf32>
    %341 = vector.extract_strided_slice %334 {offsets = [0, 32], sizes = [2, 32], strides = [1, 1]} : vector<2x128xf32> to vector<2x32xf32>
    %342 = arith.negf %341 : vector<2x32xf32>
    %343 = math.exp %342 : vector<2x32xf32>
    %cst_89 = arith.constant 1.000000e+00 : f32
    %344 = vector.broadcast %cst_89 : f32 to vector<2x32xf32>
    %345 = arith.addf %344, %343 : vector<2x32xf32>
    %346 = arith.divf %344, %345 : vector<2x32xf32>
    %347 = vector.extract_strided_slice %334 {offsets = [0, 64], sizes = [2, 32], strides = [1, 1]} : vector<2x128xf32> to vector<2x32xf32>
    %348 = math.tanh %347 : vector<2x32xf32>
    %349 = vector.extract_strided_slice %334 {offsets = [0, 96], sizes = [2, 32], strides = [1, 1]} : vector<2x128xf32> to vector<2x32xf32>
    %350 = arith.negf %349 : vector<2x32xf32>
    %351 = math.exp %350 : vector<2x32xf32>
    %cst_90 = arith.constant 1.000000e+00 : f32
    %352 = vector.broadcast %cst_90 : f32 to vector<2x32xf32>
    %353 = arith.addf %352, %351 : vector<2x32xf32>
    %354 = arith.divf %352, %353 : vector<2x32xf32>
    %355 = arith.mulf %346, %288 : vector<2x32xf32>
    %356 = arith.mulf %340, %348 : vector<2x32xf32>
    %357 = arith.addf %355, %356 : vector<2x32xf32>
    %358 = math.tanh %357 : vector<2x32xf32>
    %359 = arith.mulf %354, %358 : vector<2x32xf32>
    %360 = arith.index_cast %329 : i32 to index
    %c32_91 = arith.constant 32 : index
    %361 = vector.load %arg8[%360, %c32_91] : memref<16x64xf32, #tpu.memory_space<vmem>>, vector<2x32xf32>
    tpu.vector_store %arg8[%360, %c32_91], %359 {strides = array<i32>} : memref<16x64xf32, #tpu.memory_space<vmem>>, vector<2x32xf32>,
    %c5_i32 = arith.constant 5 : i32
    %c2_i32_92 = arith.constant 2 : i32
    %362 = arith.muli %c5_i32, %c2_i32_92 : i32
    %363 = tpu.assume_multiple %362, 2 : i32
    %364 = arith.index_cast %363 : i32 to index
    %c0_93 = arith.constant 0 : index
    %365 = vector.load %arg9[%364, %c0_93] : memref<16x128xf32, #tpu.memory_space<vmem>>, vector<2x128xf32>
    %366 = arith.truncf %324 : vector<2x32xf32> to vector<2x32xbf16>
    %cst_94 = arith.constant dense<0.000000e+00> : vector<2x128xf32>
    %367 = tpu.matmul %366, %14, %cst_94 {dimension_numbers = #tpu.dot_dimension_numbers<[1], [0], [0], [1], [0, 0, 1, 1], [], []>} : vector<2x32xbf16>, vector<32x128xbf16>, vector<2x128xf32> -> vector<2x128xf32>
    %368 = arith.addf %365, %367 : vector<2x128xf32>
    %369 = vector.extract_strided_slice %368 {offsets = [0, 0], sizes = [2, 32], strides = [1, 1]} : vector<2x128xf32> to vector<2x32xf32>
    %370 = arith.negf %369 : vector<2x32xf32>
    %371 = math.exp %370 : vector<2x32xf32>
    %cst_95 = arith.constant 1.000000e+00 : f32
    %372 = vector.broadcast %cst_95 : f32 to vector<2x32xf32>
    %373 = arith.addf %372, %371 : vector<2x32xf32>
    %374 = arith.divf %372, %373 : vector<2x32xf32>
    %375 = vector.extract_strided_slice %368 {offsets = [0, 32], sizes = [2, 32], strides = [1, 1]} : vector<2x128xf32> to vector<2x32xf32>
    %376 = arith.negf %375 : vector<2x32xf32>
    %377 = math.exp %376 : vector<2x32xf32>
    %cst_96 = arith.constant 1.000000e+00 : f32
    %378 = vector.broadcast %cst_96 : f32 to vector<2x32xf32>
    %379 = arith.addf %378, %377 : vector<2x32xf32>
    %380 = arith.divf %378, %379 : vector<2x32xf32>
    %381 = vector.extract_strided_slice %368 {offsets = [0, 64], sizes = [2, 32], strides = [1, 1]} : vector<2x128xf32> to vector<2x32xf32>
    %382 = math.tanh %381 : vector<2x32xf32>
    %383 = vector.extract_strided_slice %368 {offsets = [0, 96], sizes = [2, 32], strides = [1, 1]} : vector<2x128xf32> to vector<2x32xf32>
    %384 = arith.negf %383 : vector<2x32xf32>
    %385 = math.exp %384 : vector<2x32xf32>
    %cst_97 = arith.constant 1.000000e+00 : f32
    %386 = vector.broadcast %cst_97 : f32 to vector<2x32xf32>
    %387 = arith.addf %386, %385 : vector<2x32xf32>
    %388 = arith.divf %386, %387 : vector<2x32xf32>
    %389 = arith.mulf %380, %322 : vector<2x32xf32>
    %390 = arith.mulf %374, %382 : vector<2x32xf32>
    %391 = arith.addf %389, %390 : vector<2x32xf32>
    %392 = math.tanh %391 : vector<2x32xf32>
    %393 = arith.mulf %388, %392 : vector<2x32xf32>
    %394 = arith.index_cast %363 : i32 to index
    %c0_98 = arith.constant 0 : index
    %395 = vector.load %arg8[%394, %c0_98] : memref<16x64xf32, #tpu.memory_space<vmem>>, vector<2x32xf32>
    tpu.vector_store %arg8[%394, %c0_98], %393 {strides = array<i32>} : memref<16x64xf32, #tpu.memory_space<vmem>>, vector<2x32xf32>,
    %c7_i32_99 = arith.constant 7 : i32
    %396 = arith.subi %c7_i32_99, %c5_i32 : i32
    %c2_i32_100 = arith.constant 2 : i32
    %397 = arith.muli %396, %c2_i32_100 : i32
    %398 = tpu.assume_multiple %397, 2 : i32
    %399 = arith.index_cast %398 : i32 to index
    %c0_101 = arith.constant 0 : index
    %400 = vector.load %arg10[%399, %c0_101] : memref<16x128xf32, #tpu.memory_space<vmem>>, vector<2x128xf32>
    %401 = arith.truncf %359 : vector<2x32xf32> to vector<2x32xbf16>
    %cst_102 = arith.constant dense<0.000000e+00> : vector<2x128xf32>
    %402 = tpu.matmul %401, %15, %cst_102 {dimension_numbers = #tpu.dot_dimension_numbers<[1], [0], [0], [1], [0, 0, 1, 1], [], []>} : vector<2x32xbf16>, vector<32x128xbf16>, vector<2x128xf32> -> vector<2x128xf32>
    %403 = arith.addf %400, %402 : vector<2x128xf32>
    %404 = vector.extract_strided_slice %403 {offsets = [0, 0], sizes = [2, 32], strides = [1, 1]} : vector<2x128xf32> to vector<2x32xf32>
    %405 = arith.negf %404 : vector<2x32xf32>
    %406 = math.exp %405 : vector<2x32xf32>
    %cst_103 = arith.constant 1.000000e+00 : f32
    %407 = vector.broadcast %cst_103 : f32 to vector<2x32xf32>
    %408 = arith.addf %407, %406 : vector<2x32xf32>
    %409 = arith.divf %407, %408 : vector<2x32xf32>
    %410 = vector.extract_strided_slice %403 {offsets = [0, 32], sizes = [2, 32], strides = [1, 1]} : vector<2x128xf32> to vector<2x32xf32>
    %411 = arith.negf %410 : vector<2x32xf32>
    %412 = math.exp %411 : vector<2x32xf32>
    %cst_104 = arith.constant 1.000000e+00 : f32
    %413 = vector.broadcast %cst_104 : f32 to vector<2x32xf32>
    %414 = arith.addf %413, %412 : vector<2x32xf32>
    %415 = arith.divf %413, %414 : vector<2x32xf32>
    %416 = vector.extract_strided_slice %403 {offsets = [0, 64], sizes = [2, 32], strides = [1, 1]} : vector<2x128xf32> to vector<2x32xf32>
    %417 = math.tanh %416 : vector<2x32xf32>
    %418 = vector.extract_strided_slice %403 {offsets = [0, 96], sizes = [2, 32], strides = [1, 1]} : vector<2x128xf32> to vector<2x32xf32>
    %419 = arith.negf %418 : vector<2x32xf32>
    %420 = math.exp %419 : vector<2x32xf32>
    %cst_105 = arith.constant 1.000000e+00 : f32
    %421 = vector.broadcast %cst_105 : f32 to vector<2x32xf32>
    %422 = arith.addf %421, %420 : vector<2x32xf32>
    %423 = arith.divf %421, %422 : vector<2x32xf32>
    %424 = arith.mulf %415, %357 : vector<2x32xf32>
    %425 = arith.mulf %409, %417 : vector<2x32xf32>
    %426 = arith.addf %424, %425 : vector<2x32xf32>
    %427 = math.tanh %426 : vector<2x32xf32>
    %428 = arith.mulf %423, %427 : vector<2x32xf32>
    %429 = arith.index_cast %398 : i32 to index
    %c32_106 = arith.constant 32 : index
    %430 = vector.load %arg8[%429, %c32_106] : memref<16x64xf32, #tpu.memory_space<vmem>>, vector<2x32xf32>
    tpu.vector_store %arg8[%429, %c32_106], %428 {strides = array<i32>} : memref<16x64xf32, #tpu.memory_space<vmem>>, vector<2x32xf32>,
    %c6_i32 = arith.constant 6 : i32
    %c2_i32_107 = arith.constant 2 : i32
    %431 = arith.muli %c6_i32, %c2_i32_107 : i32
    %432 = tpu.assume_multiple %431, 2 : i32
    %433 = arith.index_cast %432 : i32 to index
    %c0_108 = arith.constant 0 : index
    %434 = vector.load %arg9[%433, %c0_108] : memref<16x128xf32, #tpu.memory_space<vmem>>, vector<2x128xf32>
    %435 = arith.truncf %393 : vector<2x32xf32> to vector<2x32xbf16>
    %cst_109 = arith.constant dense<0.000000e+00> : vector<2x128xf32>
    %436 = tpu.matmul %435, %14, %cst_109 {dimension_numbers = #tpu.dot_dimension_numbers<[1], [0], [0], [1], [0, 0, 1, 1], [], []>} : vector<2x32xbf16>, vector<32x128xbf16>, vector<2x128xf32> -> vector<2x128xf32>
    %437 = arith.addf %434, %436 : vector<2x128xf32>
    %438 = vector.extract_strided_slice %437 {offsets = [0, 0], sizes = [2, 32], strides = [1, 1]} : vector<2x128xf32> to vector<2x32xf32>
    %439 = arith.negf %438 : vector<2x32xf32>
    %440 = math.exp %439 : vector<2x32xf32>
    %cst_110 = arith.constant 1.000000e+00 : f32
    %441 = vector.broadcast %cst_110 : f32 to vector<2x32xf32>
    %442 = arith.addf %441, %440 : vector<2x32xf32>
    %443 = arith.divf %441, %442 : vector<2x32xf32>
    %444 = vector.extract_strided_slice %437 {offsets = [0, 32], sizes = [2, 32], strides = [1, 1]} : vector<2x128xf32> to vector<2x32xf32>
    %445 = arith.negf %444 : vector<2x32xf32>
    %446 = math.exp %445 : vector<2x32xf32>
    %cst_111 = arith.constant 1.000000e+00 : f32
    %447 = vector.broadcast %cst_111 : f32 to vector<2x32xf32>
    %448 = arith.addf %447, %446 : vector<2x32xf32>
    %449 = arith.divf %447, %448 : vector<2x32xf32>
    %450 = vector.extract_strided_slice %437 {offsets = [0, 64], sizes = [2, 32], strides = [1, 1]} : vector<2x128xf32> to vector<2x32xf32>
    %451 = math.tanh %450 : vector<2x32xf32>
    %452 = vector.extract_strided_slice %437 {offsets = [0, 96], sizes = [2, 32], strides = [1, 1]} : vector<2x128xf32> to vector<2x32xf32>
    %453 = arith.negf %452 : vector<2x32xf32>
    %454 = math.exp %453 : vector<2x32xf32>
    %cst_112 = arith.constant 1.000000e+00 : f32
    %455 = vector.broadcast %cst_112 : f32 to vector<2x32xf32>
    %456 = arith.addf %455, %454 : vector<2x32xf32>
    %457 = arith.divf %455, %456 : vector<2x32xf32>
    %458 = arith.mulf %449, %391 : vector<2x32xf32>
    %459 = arith.mulf %443, %451 : vector<2x32xf32>
    %460 = arith.addf %458, %459 : vector<2x32xf32>
    %461 = math.tanh %460 : vector<2x32xf32>
    %462 = arith.mulf %457, %461 : vector<2x32xf32>
    %463 = arith.index_cast %432 : i32 to index
    %c0_113 = arith.constant 0 : index
    %464 = vector.load %arg8[%463, %c0_113] : memref<16x64xf32, #tpu.memory_space<vmem>>, vector<2x32xf32>
    tpu.vector_store %arg8[%463, %c0_113], %462 {strides = array<i32>} : memref<16x64xf32, #tpu.memory_space<vmem>>, vector<2x32xf32>,
    %c7_i32_114 = arith.constant 7 : i32
    %465 = arith.subi %c7_i32_114, %c6_i32 : i32
    %c2_i32_115 = arith.constant 2 : i32
    %466 = arith.muli %465, %c2_i32_115 : i32
    %467 = tpu.assume_multiple %466, 2 : i32
    %468 = arith.index_cast %467 : i32 to index
    %c0_116 = arith.constant 0 : index
    %469 = vector.load %arg10[%468, %c0_116] : memref<16x128xf32, #tpu.memory_space<vmem>>, vector<2x128xf32>
    %470 = arith.truncf %428 : vector<2x32xf32> to vector<2x32xbf16>
    %cst_117 = arith.constant dense<0.000000e+00> : vector<2x128xf32>
    %471 = tpu.matmul %470, %15, %cst_117 {dimension_numbers = #tpu.dot_dimension_numbers<[1], [0], [0], [1], [0, 0, 1, 1], [], []>} : vector<2x32xbf16>, vector<32x128xbf16>, vector<2x128xf32> -> vector<2x128xf32>
    %472 = arith.addf %469, %471 : vector<2x128xf32>
    %473 = vector.extract_strided_slice %472 {offsets = [0, 0], sizes = [2, 32], strides = [1, 1]} : vector<2x128xf32> to vector<2x32xf32>
    %474 = arith.negf %473 : vector<2x32xf32>
    %475 = math.exp %474 : vector<2x32xf32>
    %cst_118 = arith.constant 1.000000e+00 : f32
    %476 = vector.broadcast %cst_118 : f32 to vector<2x32xf32>
    %477 = arith.addf %476, %475 : vector<2x32xf32>
    %478 = arith.divf %476, %477 : vector<2x32xf32>
    %479 = vector.extract_strided_slice %472 {offsets = [0, 32], sizes = [2, 32], strides = [1, 1]} : vector<2x128xf32> to vector<2x32xf32>
    %480 = arith.negf %479 : vector<2x32xf32>
    %481 = math.exp %480 : vector<2x32xf32>
    %cst_119 = arith.constant 1.000000e+00 : f32
    %482 = vector.broadcast %cst_119 : f32 to vector<2x32xf32>
    %483 = arith.addf %482, %481 : vector<2x32xf32>
    %484 = arith.divf %482, %483 : vector<2x32xf32>
    %485 = vector.extract_strided_slice %472 {offsets = [0, 64], sizes = [2, 32], strides = [1, 1]} : vector<2x128xf32> to vector<2x32xf32>
    %486 = math.tanh %485 : vector<2x32xf32>
    %487 = vector.extract_strided_slice %472 {offsets = [0, 96], sizes = [2, 32], strides = [1, 1]} : vector<2x128xf32> to vector<2x32xf32>
    %488 = arith.negf %487 : vector<2x32xf32>
    %489 = math.exp %488 : vector<2x32xf32>
    %cst_120 = arith.constant 1.000000e+00 : f32
    %490 = vector.broadcast %cst_120 : f32 to vector<2x32xf32>
    %491 = arith.addf %490, %489 : vector<2x32xf32>
    %492 = arith.divf %490, %491 : vector<2x32xf32>
    %493 = arith.mulf %484, %426 : vector<2x32xf32>
    %494 = arith.mulf %478, %486 : vector<2x32xf32>
    %495 = arith.addf %493, %494 : vector<2x32xf32>
    %496 = math.tanh %495 : vector<2x32xf32>
    %497 = arith.mulf %492, %496 : vector<2x32xf32>
    %498 = arith.index_cast %467 : i32 to index
    %c32_121 = arith.constant 32 : index
    %499 = vector.load %arg8[%498, %c32_121] : memref<16x64xf32, #tpu.memory_space<vmem>>, vector<2x32xf32>
    tpu.vector_store %arg8[%498, %c32_121], %497 {strides = array<i32>} : memref<16x64xf32, #tpu.memory_space<vmem>>, vector<2x32xf32>,
    %c7_i32_122 = arith.constant 7 : i32
    %c2_i32_123 = arith.constant 2 : i32
    %500 = arith.muli %c7_i32_122, %c2_i32_123 : i32
    %501 = tpu.assume_multiple %500, 2 : i32
    %502 = arith.index_cast %501 : i32 to index
    %c0_124 = arith.constant 0 : index
    %503 = vector.load %arg9[%502, %c0_124] : memref<16x128xf32, #tpu.memory_space<vmem>>, vector<2x128xf32>
    %504 = arith.truncf %462 : vector<2x32xf32> to vector<2x32xbf16>
    %cst_125 = arith.constant dense<0.000000e+00> : vector<2x128xf32>
    %505 = tpu.matmul %504, %14, %cst_125 {dimension_numbers = #tpu.dot_dimension_numbers<[1], [0], [0], [1], [0, 0, 1, 1], [], []>} : vector<2x32xbf16>, vector<32x128xbf16>, vector<2x128xf32> -> vector<2x128xf32>
    %506 = arith.addf %503, %505 : vector<2x128xf32>
    %507 = vector.extract_strided_slice %506 {offsets = [0, 0], sizes = [2, 32], strides = [1, 1]} : vector<2x128xf32> to vector<2x32xf32>
    %508 = arith.negf %507 : vector<2x32xf32>
    %509 = math.exp %508 : vector<2x32xf32>
    %cst_126 = arith.constant 1.000000e+00 : f32
    %510 = vector.broadcast %cst_126 : f32 to vector<2x32xf32>
    %511 = arith.addf %510, %509 : vector<2x32xf32>
    %512 = arith.divf %510, %511 : vector<2x32xf32>
    %513 = vector.extract_strided_slice %506 {offsets = [0, 32], sizes = [2, 32], strides = [1, 1]} : vector<2x128xf32> to vector<2x32xf32>
    %514 = arith.negf %513 : vector<2x32xf32>
    %515 = math.exp %514 : vector<2x32xf32>
    %cst_127 = arith.constant 1.000000e+00 : f32
    %516 = vector.broadcast %cst_127 : f32 to vector<2x32xf32>
    %517 = arith.addf %516, %515 : vector<2x32xf32>
    %518 = arith.divf %516, %517 : vector<2x32xf32>
    %519 = vector.extract_strided_slice %506 {offsets = [0, 64], sizes = [2, 32], strides = [1, 1]} : vector<2x128xf32> to vector<2x32xf32>
    %520 = math.tanh %519 : vector<2x32xf32>
    %521 = vector.extract_strided_slice %506 {offsets = [0, 96], sizes = [2, 32], strides = [1, 1]} : vector<2x128xf32> to vector<2x32xf32>
    %522 = arith.negf %521 : vector<2x32xf32>
    %523 = math.exp %522 : vector<2x32xf32>
    %cst_128 = arith.constant 1.000000e+00 : f32
    %524 = vector.broadcast %cst_128 : f32 to vector<2x32xf32>
    %525 = arith.addf %524, %523 : vector<2x32xf32>
    %526 = arith.divf %524, %525 : vector<2x32xf32>
    %527 = arith.mulf %518, %460 : vector<2x32xf32>
    %528 = arith.mulf %512, %520 : vector<2x32xf32>
    %529 = arith.addf %527, %528 : vector<2x32xf32>
    %530 = math.tanh %529 : vector<2x32xf32>
    %531 = arith.mulf %526, %530 : vector<2x32xf32>
    %532 = arith.index_cast %501 : i32 to index
    %c0_129 = arith.constant 0 : index
    %533 = vector.load %arg8[%532, %c0_129] : memref<16x64xf32, #tpu.memory_space<vmem>>, vector<2x32xf32>
    tpu.vector_store %arg8[%532, %c0_129], %531 {strides = array<i32>} : memref<16x64xf32, #tpu.memory_space<vmem>>, vector<2x32xf32>,
    %c7_i32_130 = arith.constant 7 : i32
    %534 = arith.subi %c7_i32_130, %c7_i32_122 : i32
    %c2_i32_131 = arith.constant 2 : i32
    %535 = arith.muli %534, %c2_i32_131 : i32
    %536 = tpu.assume_multiple %535, 2 : i32
    %537 = arith.index_cast %536 : i32 to index
    %c0_132 = arith.constant 0 : index
    %538 = vector.load %arg10[%537, %c0_132] : memref<16x128xf32, #tpu.memory_space<vmem>>, vector<2x128xf32>
    %539 = arith.truncf %497 : vector<2x32xf32> to vector<2x32xbf16>
    %cst_133 = arith.constant dense<0.000000e+00> : vector<2x128xf32>
    %540 = tpu.matmul %539, %15, %cst_133 {dimension_numbers = #tpu.dot_dimension_numbers<[1], [0], [0], [1], [0, 0, 1, 1], [], []>} : vector<2x32xbf16>, vector<32x128xbf16>, vector<2x128xf32> -> vector<2x128xf32>
    %541 = arith.addf %538, %540 : vector<2x128xf32>
    %542 = vector.extract_strided_slice %541 {offsets = [0, 0], sizes = [2, 32], strides = [1, 1]} : vector<2x128xf32> to vector<2x32xf32>
    %543 = arith.negf %542 : vector<2x32xf32>
    %544 = math.exp %543 : vector<2x32xf32>
    %cst_134 = arith.constant 1.000000e+00 : f32
    %545 = vector.broadcast %cst_134 : f32 to vector<2x32xf32>
    %546 = arith.addf %545, %544 : vector<2x32xf32>
    %547 = arith.divf %545, %546 : vector<2x32xf32>
    %548 = vector.extract_strided_slice %541 {offsets = [0, 32], sizes = [2, 32], strides = [1, 1]} : vector<2x128xf32> to vector<2x32xf32>
    %549 = arith.negf %548 : vector<2x32xf32>
    %550 = math.exp %549 : vector<2x32xf32>
    %cst_135 = arith.constant 1.000000e+00 : f32
    %551 = vector.broadcast %cst_135 : f32 to vector<2x32xf32>
    %552 = arith.addf %551, %550 : vector<2x32xf32>
    %553 = arith.divf %551, %552 : vector<2x32xf32>
    %554 = vector.extract_strided_slice %541 {offsets = [0, 64], sizes = [2, 32], strides = [1, 1]} : vector<2x128xf32> to vector<2x32xf32>
    %555 = math.tanh %554 : vector<2x32xf32>
    %556 = vector.extract_strided_slice %541 {offsets = [0, 96], sizes = [2, 32], strides = [1, 1]} : vector<2x128xf32> to vector<2x32xf32>
    %557 = arith.negf %556 : vector<2x32xf32>
    %558 = math.exp %557 : vector<2x32xf32>
    %cst_136 = arith.constant 1.000000e+00 : f32
    %559 = vector.broadcast %cst_136 : f32 to vector<2x32xf32>
    %560 = arith.addf %559, %558 : vector<2x32xf32>
    %561 = arith.divf %559, %560 : vector<2x32xf32>
    %562 = arith.mulf %553, %495 : vector<2x32xf32>
    %563 = arith.mulf %547, %555 : vector<2x32xf32>
    %564 = arith.addf %562, %563 : vector<2x32xf32>
    %565 = math.tanh %564 : vector<2x32xf32>
    %566 = arith.mulf %561, %565 : vector<2x32xf32>
    %567 = arith.index_cast %536 : i32 to index
    %c32_137 = arith.constant 32 : index
    %568 = vector.load %arg8[%567, %c32_137] : memref<16x64xf32, #tpu.memory_space<vmem>>, vector<2x32xf32>
    tpu.vector_store %arg8[%567, %c32_137], %566 {strides = array<i32>} : memref<16x64xf32, #tpu.memory_space<vmem>>, vector<2x32xf32>,
    %c8_i32 = arith.constant 8 : i32
    return
  }
  func.func @transform_0(%arg0: i32) -> (i32, i32) {
    %c0_i32 = arith.constant 0 : i32
    %c0_i32_0 = arith.constant 0 : i32
    %c0_i32_1 = arith.constant 0 : i32
    return %c0_i32, %c0_i32_0 : i32, i32
  }
  func.func @transform_1(%arg0: i32) -> (i32, i32) {
    %c0_i32 = arith.constant 0 : i32
    %c0_i32_0 = arith.constant 0 : i32
    %c0_i32_1 = arith.constant 0 : i32
    return %c0_i32, %c0_i32_0 : i32, i32
  }
  func.func @transform_2(%arg0: i32) -> (i32, i32) {
    %c0_i32 = arith.constant 0 : i32
    %c0_i32_0 = arith.constant 0 : i32
    %c0_i32_1 = arith.constant 0 : i32
    return %c0_i32, %c0_i32_0 : i32, i32
  }
  func.func @transform_3(%arg0: i32) -> (i32, i32) {
    %c0_i32 = arith.constant 0 : i32
    %c0_i32_0 = arith.constant 0 : i32
    %c0_i32_1 = arith.constant 0 : i32
    return %c0_i32, %c0_i32_0 : i32, i32
  }
  func.func @transform_4(%arg0: i32) -> (i32, i32) {
    %c0_i32 = arith.constant 0 : i32
    %c0_i32_0 = arith.constant 0 : i32
    %c0_i32_1 = arith.constant 0 : i32
    return %c0_i32, %c0_i32_0 : i32, i32
  }
  func.func @transform_5(%arg0: i32) -> (i32, i32) {
    %c0_i32 = arith.constant 0 : i32
    %c0_i32_0 = arith.constant 0 : i32
    %c0_i32_1 = arith.constant 0 : i32
    return %c0_i32, %c0_i32_0 : i32, i32
  }
  func.func @transform_6(%arg0: i32) -> (i32, i32) {
    %c0_i32 = arith.constant 0 : i32
    %c0_i32_0 = arith.constant 0 : i32
    %c0_i32_1 = arith.constant 0 : i32
    return %c0_i32, %c0_i32_0 : i32, i32
  }
  func.func @transform_7(%arg0: i32) -> (i32, i32) {
    %c0_i32 = arith.constant 0 : i32
    %c0_i32_0 = arith.constant 0 : i32
    %c0_i32_1 = arith.constant 0 : i32
    return %c0_i32, %c0_i32_0 : i32, i32
  }
}

module attributes {stable_mosaic.version = 11 : i64} {
  func.func @_bidir_lstm_layer_kernel(%arg0: i32, %arg1: memref<16x64xf32, #tpu.memory_space<vmem>>, %arg2: memref<64x128xbf16, #tpu.memory_space<vmem>>, %arg3: memref<32x128xbf16, #tpu.memory_space<vmem>>, %arg4: memref<1x128xf32, #tpu.memory_space<vmem>>, %arg5: memref<64x128xbf16, #tpu.memory_space<vmem>>, %arg6: memref<32x128xbf16, #tpu.memory_space<vmem>>, %arg7: memref<1x128xf32, #tpu.memory_space<vmem>>, %arg8: memref<16x64xf32, #tpu.memory_space<vmem>>, %arg9: memref<16x128xf32, #tpu.memory_space<vmem>>, %arg10: memref<16x128xf32, #tpu.memory_space<vmem>>) attributes {dimension_semantics = [#tpu.dimension_semantics<arbitrary>], iteration_bounds = array<i64: 1>, scalar_prefetch = 0 : i64, scratch_operands = 2 : i64, tpu.core_type = #tpu.core_type<tc>, window_params = [{pipeline_mode = #tpu.pipeline_mode<synchronous>, transform_indices = @transform_0, window_bounds = array<i64: 16, 64>}, {pipeline_mode = #tpu.pipeline_mode<synchronous>, transform_indices = @transform_1, window_bounds = array<i64: 64, 128>}, {pipeline_mode = #tpu.pipeline_mode<synchronous>, transform_indices = @transform_2, window_bounds = array<i64: 32, 128>}, {pipeline_mode = #tpu.pipeline_mode<synchronous>, transform_indices = @transform_3, window_bounds = array<i64: 1, 128>}, {pipeline_mode = #tpu.pipeline_mode<synchronous>, transform_indices = @transform_4, window_bounds = array<i64: 64, 128>}, {pipeline_mode = #tpu.pipeline_mode<synchronous>, transform_indices = @transform_5, window_bounds = array<i64: 32, 128>}, {pipeline_mode = #tpu.pipeline_mode<synchronous>, transform_indices = @transform_6, window_bounds = array<i64: 1, 128>}, {pipeline_mode = #tpu.pipeline_mode<synchronous>, transform_indices = @transform_7, window_bounds = array<i64: 16, 64>}]} {
    %c0 = arith.constant 0 : index
    %c0_0 = arith.constant 0 : index
    %0 = vector.load %arg1[%c0, %c0_0] : memref<16x64xf32, #tpu.memory_space<vmem>>, vector<16x64xf32>
    %1 = arith.truncf %0 : vector<16x64xf32> to vector<16x64xbf16>
    %c0_1 = arith.constant 0 : index
    %c0_2 = arith.constant 0 : index
    %2 = vector.load %arg2[%c0_1, %c0_2] : memref<64x128xbf16, #tpu.memory_space<vmem>>, vector<64x128xbf16>
    %cst = arith.constant dense<0.000000e+00> : vector<16x128xf32>
    %3 = tpu.matmul %1, %2, %cst {dimension_numbers = #tpu.dot_dimension_numbers<[1], [0], [0], [1], [0, 0, 1, 1], [], []>} : vector<16x64xbf16>, vector<64x128xbf16>, vector<16x128xf32> -> vector<16x128xf32>
    %c0_3 = arith.constant 0 : index
    %c0_4 = arith.constant 0 : index
    %4 = vector.load %arg4[%c0_3, %c0_4] : memref<1x128xf32, #tpu.memory_space<vmem>>, vector<1x128xf32>
    %5 = vector.broadcast %4 : vector<1x128xf32> to vector<16x128xf32>
    %6 = arith.addf %3, %5 : vector<16x128xf32>
    %c0_5 = arith.constant 0 : index
    %c0_6 = arith.constant 0 : index
    %7 = vector.load %arg9[%c0_5, %c0_6] : memref<16x128xf32, #tpu.memory_space<vmem>>, vector<16x128xf32>
    tpu.vector_store %arg9[%c0_5, %c0_6], %6 {strides = array<i32>} : memref<16x128xf32, #tpu.memory_space<vmem>>, vector<16x128xf32>,
    %c0_7 = arith.constant 0 : index
    %c0_8 = arith.constant 0 : index
    %8 = vector.load %arg5[%c0_7, %c0_8] : memref<64x128xbf16, #tpu.memory_space<vmem>>, vector<64x128xbf16>
    %cst_9 = arith.constant dense<0.000000e+00> : vector<16x128xf32>
    %9 = tpu.matmul %1, %8, %cst_9 {dimension_numbers = #tpu.dot_dimension_numbers<[1], [0], [0], [1], [0, 0, 1, 1], [], []>} : vector<16x64xbf16>, vector<64x128xbf16>, vector<16x128xf32> -> vector<16x128xf32>
    %c0_10 = arith.constant 0 : index
    %c0_11 = arith.constant 0 : index
    %10 = vector.load %arg7[%c0_10, %c0_11] : memref<1x128xf32, #tpu.memory_space<vmem>>, vector<1x128xf32>
    %11 = vector.broadcast %10 : vector<1x128xf32> to vector<16x128xf32>
    %12 = arith.addf %9, %11 : vector<16x128xf32>
    %c0_12 = arith.constant 0 : index
    %c0_13 = arith.constant 0 : index
    %13 = vector.load %arg10[%c0_12, %c0_13] : memref<16x128xf32, #tpu.memory_space<vmem>>, vector<16x128xf32>
    tpu.vector_store %arg10[%c0_12, %c0_13], %12 {strides = array<i32>} : memref<16x128xf32, #tpu.memory_space<vmem>>, vector<16x128xf32>,
    %c0_14 = arith.constant 0 : index
    %c0_15 = arith.constant 0 : index
    %14 = vector.load %arg3[%c0_14, %c0_15] : memref<32x128xbf16, #tpu.memory_space<vmem>>, vector<32x128xbf16>
    %c0_16 = arith.constant 0 : index
    %c0_17 = arith.constant 0 : index
    %15 = vector.load %arg6[%c0_16, %c0_17] : memref<32x128xbf16, #tpu.memory_space<vmem>>, vector<32x128xbf16>
    %cst_18 = arith.constant 0.000000e+00 : f32
    %16 = vector.broadcast %cst_18 : f32 to vector<2x32xf32>
    %c0_i32 = arith.constant 0 : i32
    %c2_i32 = arith.constant 2 : i32
    %17 = arith.muli %c0_i32, %c2_i32 : i32
    %18 = tpu.assume_multiple %17, 2 : i32
    %19 = arith.index_cast %18 : i32 to index
    %c0_19 = arith.constant 0 : index
    %20 = vector.load %arg9[%19, %c0_19] : memref<16x128xf32, #tpu.memory_space<vmem>>, vector<2x128xf32>
    %21 = arith.truncf %16 : vector<2x32xf32> to vector<2x32xbf16>
    %cst_20 = arith.constant dense<0.000000e+00> : vector<2x128xf32>
    %22 = tpu.matmul %21, %14, %cst_20 {dimension_numbers = #tpu.dot_dimension_numbers<[1], [0], [0], [1], [0, 0, 1, 1], [], []>} : vector<2x32xbf16>, vector<32x128xbf16>, vector<2x128xf32> -> vector<2x128xf32>
    %23 = arith.addf %20, %22 : vector<2x128xf32>
    %24 = vector.extract_strided_slice %23 {offsets = [0, 0], sizes = [2, 32], strides = [1, 1]} : vector<2x128xf32> to vector<2x32xf32>
    %25 = arith.negf %24 : vector<2x32xf32>
    %26 = math.exp %25 : vector<2x32xf32>
    %cst_21 = arith.constant 1.000000e+00 : f32
    %27 = vector.broadcast %cst_21 : f32 to vector<2x32xf32>
    %28 = arith.addf %27, %26 : vector<2x32xf32>
    %29 = arith.divf %27, %28 : vector<2x32xf32>
    %30 = vector.extract_strided_slice %23 {offsets = [0, 32], sizes = [2, 32], strides = [1, 1]} : vector<2x128xf32> to vector<2x32xf32>
    %31 = arith.negf %30 : vector<2x32xf32>
    %32 = math.exp %31 : vector<2x32xf32>
    %cst_22 = arith.constant 1.000000e+00 : f32
    %33 = vector.broadcast %cst_22 : f32 to vector<2x32xf32>
    %34 = arith.addf %33, %32 : vector<2x32xf32>
    %35 = arith.divf %33, %34 : vector<2x32xf32>
    %36 = vector.extract_strided_slice %23 {offsets = [0, 64], sizes = [2, 32], strides = [1, 1]} : vector<2x128xf32> to vector<2x32xf32>
    %37 = math.tanh %36 : vector<2x32xf32>
    %38 = vector.extract_strided_slice %23 {offsets = [0, 96], sizes = [2, 32], strides = [1, 1]} : vector<2x128xf32> to vector<2x32xf32>
    %39 = arith.negf %38 : vector<2x32xf32>
    %40 = math.exp %39 : vector<2x32xf32>
    %cst_23 = arith.constant 1.000000e+00 : f32
    %41 = vector.broadcast %cst_23 : f32 to vector<2x32xf32>
    %42 = arith.addf %41, %40 : vector<2x32xf32>
    %43 = arith.divf %41, %42 : vector<2x32xf32>
    %44 = arith.mulf %35, %16 : vector<2x32xf32>
    %45 = arith.mulf %29, %37 : vector<2x32xf32>
    %46 = arith.addf %44, %45 : vector<2x32xf32>
    %47 = math.tanh %46 : vector<2x32xf32>
    %48 = arith.mulf %43, %47 : vector<2x32xf32>
    %49 = arith.index_cast %18 : i32 to index
    %c0_24 = arith.constant 0 : index
    %50 = vector.load %arg8[%49, %c0_24] : memref<16x64xf32, #tpu.memory_space<vmem>>, vector<2x32xf32>
    tpu.vector_store %arg8[%49, %c0_24], %48 {strides = array<i32>} : memref<16x64xf32, #tpu.memory_space<vmem>>, vector<2x32xf32>,
    %c7_i32 = arith.constant 7 : i32
    %51 = arith.subi %c7_i32, %c0_i32 : i32
    %c2_i32_25 = arith.constant 2 : i32
    %52 = arith.muli %51, %c2_i32_25 : i32
    %53 = tpu.assume_multiple %52, 2 : i32
    %54 = arith.index_cast %53 : i32 to index
    %c0_26 = arith.constant 0 : index
    %55 = vector.load %arg10[%54, %c0_26] : memref<16x128xf32, #tpu.memory_space<vmem>>, vector<2x128xf32>
    %56 = arith.truncf %16 : vector<2x32xf32> to vector<2x32xbf16>
    %cst_27 = arith.constant dense<0.000000e+00> : vector<2x128xf32>
    %57 = tpu.matmul %56, %15, %cst_27 {dimension_numbers = #tpu.dot_dimension_numbers<[1], [0], [0], [1], [0, 0, 1, 1], [], []>} : vector<2x32xbf16>, vector<32x128xbf16>, vector<2x128xf32> -> vector<2x128xf32>
    %58 = arith.addf %55, %57 : vector<2x128xf32>
    %59 = vector.extract_strided_slice %58 {offsets = [0, 0], sizes = [2, 32], strides = [1, 1]} : vector<2x128xf32> to vector<2x32xf32>
    %60 = arith.negf %59 : vector<2x32xf32>
    %61 = math.exp %60 : vector<2x32xf32>
    %cst_28 = arith.constant 1.000000e+00 : f32
    %62 = vector.broadcast %cst_28 : f32 to vector<2x32xf32>
    %63 = arith.addf %62, %61 : vector<2x32xf32>
    %64 = arith.divf %62, %63 : vector<2x32xf32>
    %65 = vector.extract_strided_slice %58 {offsets = [0, 32], sizes = [2, 32], strides = [1, 1]} : vector<2x128xf32> to vector<2x32xf32>
    %66 = arith.negf %65 : vector<2x32xf32>
    %67 = math.exp %66 : vector<2x32xf32>
    %cst_29 = arith.constant 1.000000e+00 : f32
    %68 = vector.broadcast %cst_29 : f32 to vector<2x32xf32>
    %69 = arith.addf %68, %67 : vector<2x32xf32>
    %70 = arith.divf %68, %69 : vector<2x32xf32>
    %71 = vector.extract_strided_slice %58 {offsets = [0, 64], sizes = [2, 32], strides = [1, 1]} : vector<2x128xf32> to vector<2x32xf32>
    %72 = math.tanh %71 : vector<2x32xf32>
    %73 = vector.extract_strided_slice %58 {offsets = [0, 96], sizes = [2, 32], strides = [1, 1]} : vector<2x128xf32> to vector<2x32xf32>
    %74 = arith.negf %73 : vector<2x32xf32>
    %75 = math.exp %74 : vector<2x32xf32>
    %cst_30 = arith.constant 1.000000e+00 : f32
    %76 = vector.broadcast %cst_30 : f32 to vector<2x32xf32>
    %77 = arith.addf %76, %75 : vector<2x32xf32>
    %78 = arith.divf %76, %77 : vector<2x32xf32>
    %79 = arith.mulf %70, %16 : vector<2x32xf32>
    %80 = arith.mulf %64, %72 : vector<2x32xf32>
    %81 = arith.addf %79, %80 : vector<2x32xf32>
    %82 = math.tanh %81 : vector<2x32xf32>
    %83 = arith.mulf %78, %82 : vector<2x32xf32>
    %84 = arith.index_cast %53 : i32 to index
    %c32 = arith.constant 32 : index
    %85 = vector.load %arg8[%84, %c32] : memref<16x64xf32, #tpu.memory_space<vmem>>, vector<2x32xf32>
    tpu.vector_store %arg8[%84, %c32], %83 {strides = array<i32>} : memref<16x64xf32, #tpu.memory_space<vmem>>, vector<2x32xf32>,
    %c1_i32 = arith.constant 1 : i32
    %c2_i32_31 = arith.constant 2 : i32
    %86 = arith.muli %c1_i32, %c2_i32_31 : i32
    %87 = tpu.assume_multiple %86, 2 : i32
    %88 = arith.index_cast %87 : i32 to index
    %c0_32 = arith.constant 0 : index
    %89 = vector.load %arg9[%88, %c0_32] : memref<16x128xf32, #tpu.memory_space<vmem>>, vector<2x128xf32>
    %90 = arith.truncf %48 : vector<2x32xf32> to vector<2x32xbf16>
    %cst_33 = arith.constant dense<0.000000e+00> : vector<2x128xf32>
    %91 = tpu.matmul %90, %14, %cst_33 {dimension_numbers = #tpu.dot_dimension_numbers<[1], [0], [0], [1], [0, 0, 1, 1], [], []>} : vector<2x32xbf16>, vector<32x128xbf16>, vector<2x128xf32> -> vector<2x128xf32>
    %92 = arith.addf %89, %91 : vector<2x128xf32>
    %93 = vector.extract_strided_slice %92 {offsets = [0, 0], sizes = [2, 32], strides = [1, 1]} : vector<2x128xf32> to vector<2x32xf32>
    %94 = arith.negf %93 : vector<2x32xf32>
    %95 = math.exp %94 : vector<2x32xf32>
    %cst_34 = arith.constant 1.000000e+00 : f32
    %96 = vector.broadcast %cst_34 : f32 to vector<2x32xf32>
    %97 = arith.addf %96, %95 : vector<2x32xf32>
    %98 = arith.divf %96, %97 : vector<2x32xf32>
    %99 = vector.extract_strided_slice %92 {offsets = [0, 32], sizes = [2, 32], strides = [1, 1]} : vector<2x128xf32> to vector<2x32xf32>
    %100 = arith.negf %99 : vector<2x32xf32>
    %101 = math.exp %100 : vector<2x32xf32>
    %cst_35 = arith.constant 1.000000e+00 : f32
    %102 = vector.broadcast %cst_35 : f32 to vector<2x32xf32>
    %103 = arith.addf %102, %101 : vector<2x32xf32>
    %104 = arith.divf %102, %103 : vector<2x32xf32>
    %105 = vector.extract_strided_slice %92 {offsets = [0, 64], sizes = [2, 32], strides = [1, 1]} : vector<2x128xf32> to vector<2x32xf32>
    %106 = math.tanh %105 : vector<2x32xf32>
    %107 = vector.extract_strided_slice %92 {offsets = [0, 96], sizes = [2, 32], strides = [1, 1]} : vector<2x128xf32> to vector<2x32xf32>
    %108 = arith.negf %107 : vector<2x32xf32>
    %109 = math.exp %108 : vector<2x32xf32>
    %cst_36 = arith.constant 1.000000e+00 : f32
    %110 = vector.broadcast %cst_36 : f32 to vector<2x32xf32>
    %111 = arith.addf %110, %109 : vector<2x32xf32>
    %112 = arith.divf %110, %111 : vector<2x32xf32>
    %113 = arith.mulf %104, %46 : vector<2x32xf32>
    %114 = arith.mulf %98, %106 : vector<2x32xf32>
    %115 = arith.addf %113, %114 : vector<2x32xf32>
    %116 = math.tanh %115 : vector<2x32xf32>
    %117 = arith.mulf %112, %116 : vector<2x32xf32>
    %118 = arith.index_cast %87 : i32 to index
    %c0_37 = arith.constant 0 : index
    %119 = vector.load %arg8[%118, %c0_37] : memref<16x64xf32, #tpu.memory_space<vmem>>, vector<2x32xf32>
    tpu.vector_store %arg8[%118, %c0_37], %117 {strides = array<i32>} : memref<16x64xf32, #tpu.memory_space<vmem>>, vector<2x32xf32>,
    %c7_i32_38 = arith.constant 7 : i32
    %120 = arith.subi %c7_i32_38, %c1_i32 : i32
    %c2_i32_39 = arith.constant 2 : i32
    %121 = arith.muli %120, %c2_i32_39 : i32
    %122 = tpu.assume_multiple %121, 2 : i32
    %123 = arith.index_cast %122 : i32 to index
    %c0_40 = arith.constant 0 : index
    %124 = vector.load %arg10[%123, %c0_40] : memref<16x128xf32, #tpu.memory_space<vmem>>, vector<2x128xf32>
    %125 = arith.truncf %83 : vector<2x32xf32> to vector<2x32xbf16>
    %cst_41 = arith.constant dense<0.000000e+00> : vector<2x128xf32>
    %126 = tpu.matmul %125, %15, %cst_41 {dimension_numbers = #tpu.dot_dimension_numbers<[1], [0], [0], [1], [0, 0, 1, 1], [], []>} : vector<2x32xbf16>, vector<32x128xbf16>, vector<2x128xf32> -> vector<2x128xf32>
    %127 = arith.addf %124, %126 : vector<2x128xf32>
    %128 = vector.extract_strided_slice %127 {offsets = [0, 0], sizes = [2, 32], strides = [1, 1]} : vector<2x128xf32> to vector<2x32xf32>
    %129 = arith.negf %128 : vector<2x32xf32>
    %130 = math.exp %129 : vector<2x32xf32>
    %cst_42 = arith.constant 1.000000e+00 : f32
    %131 = vector.broadcast %cst_42 : f32 to vector<2x32xf32>
    %132 = arith.addf %131, %130 : vector<2x32xf32>
    %133 = arith.divf %131, %132 : vector<2x32xf32>
    %134 = vector.extract_strided_slice %127 {offsets = [0, 32], sizes = [2, 32], strides = [1, 1]} : vector<2x128xf32> to vector<2x32xf32>
    %135 = arith.negf %134 : vector<2x32xf32>
    %136 = math.exp %135 : vector<2x32xf32>
    %cst_43 = arith.constant 1.000000e+00 : f32
    %137 = vector.broadcast %cst_43 : f32 to vector<2x32xf32>
    %138 = arith.addf %137, %136 : vector<2x32xf32>
    %139 = arith.divf %137, %138 : vector<2x32xf32>
    %140 = vector.extract_strided_slice %127 {offsets = [0, 64], sizes = [2, 32], strides = [1, 1]} : vector<2x128xf32> to vector<2x32xf32>
    %141 = math.tanh %140 : vector<2x32xf32>
    %142 = vector.extract_strided_slice %127 {offsets = [0, 96], sizes = [2, 32], strides = [1, 1]} : vector<2x128xf32> to vector<2x32xf32>
    %143 = arith.negf %142 : vector<2x32xf32>
    %144 = math.exp %143 : vector<2x32xf32>
    %cst_44 = arith.constant 1.000000e+00 : f32
    %145 = vector.broadcast %cst_44 : f32 to vector<2x32xf32>
    %146 = arith.addf %145, %144 : vector<2x32xf32>
    %147 = arith.divf %145, %146 : vector<2x32xf32>
    %148 = arith.mulf %139, %81 : vector<2x32xf32>
    %149 = arith.mulf %133, %141 : vector<2x32xf32>
    %150 = arith.addf %148, %149 : vector<2x32xf32>
    %151 = math.tanh %150 : vector<2x32xf32>
    %152 = arith.mulf %147, %151 : vector<2x32xf32>
    %153 = arith.index_cast %122 : i32 to index
    %c32_45 = arith.constant 32 : index
    %154 = vector.load %arg8[%153, %c32_45] : memref<16x64xf32, #tpu.memory_space<vmem>>, vector<2x32xf32>
    tpu.vector_store %arg8[%153, %c32_45], %152 {strides = array<i32>} : memref<16x64xf32, #tpu.memory_space<vmem>>, vector<2x32xf32>,
    %c2_i32_46 = arith.constant 2 : i32
    %c2_i32_47 = arith.constant 2 : i32
    %155 = arith.muli %c2_i32_46, %c2_i32_47 : i32
    %156 = tpu.assume_multiple %155, 2 : i32
    %157 = arith.index_cast %156 : i32 to index
    %c0_48 = arith.constant 0 : index
    %158 = vector.load %arg9[%157, %c0_48] : memref<16x128xf32, #tpu.memory_space<vmem>>, vector<2x128xf32>
    %159 = arith.truncf %117 : vector<2x32xf32> to vector<2x32xbf16>
    %cst_49 = arith.constant dense<0.000000e+00> : vector<2x128xf32>
    %160 = tpu.matmul %159, %14, %cst_49 {dimension_numbers = #tpu.dot_dimension_numbers<[1], [0], [0], [1], [0, 0, 1, 1], [], []>} : vector<2x32xbf16>, vector<32x128xbf16>, vector<2x128xf32> -> vector<2x128xf32>
    %161 = arith.addf %158, %160 : vector<2x128xf32>
    %162 = vector.extract_strided_slice %161 {offsets = [0, 0], sizes = [2, 32], strides = [1, 1]} : vector<2x128xf32> to vector<2x32xf32>
    %163 = arith.negf %162 : vector<2x32xf32>
    %164 = math.exp %163 : vector<2x32xf32>
    %cst_50 = arith.constant 1.000000e+00 : f32
    %165 = vector.broadcast %cst_50 : f32 to vector<2x32xf32>
    %166 = arith.addf %165, %164 : vector<2x32xf32>
    %167 = arith.divf %165, %166 : vector<2x32xf32>
    %168 = vector.extract_strided_slice %161 {offsets = [0, 32], sizes = [2, 32], strides = [1, 1]} : vector<2x128xf32> to vector<2x32xf32>
    %169 = arith.negf %168 : vector<2x32xf32>
    %170 = math.exp %169 : vector<2x32xf32>
    %cst_51 = arith.constant 1.000000e+00 : f32
    %171 = vector.broadcast %cst_51 : f32 to vector<2x32xf32>
    %172 = arith.addf %171, %170 : vector<2x32xf32>
    %173 = arith.divf %171, %172 : vector<2x32xf32>
    %174 = vector.extract_strided_slice %161 {offsets = [0, 64], sizes = [2, 32], strides = [1, 1]} : vector<2x128xf32> to vector<2x32xf32>
    %175 = math.tanh %174 : vector<2x32xf32>
    %176 = vector.extract_strided_slice %161 {offsets = [0, 96], sizes = [2, 32], strides = [1, 1]} : vector<2x128xf32> to vector<2x32xf32>
    %177 = arith.negf %176 : vector<2x32xf32>
    %178 = math.exp %177 : vector<2x32xf32>
    %cst_52 = arith.constant 1.000000e+00 : f32
    %179 = vector.broadcast %cst_52 : f32 to vector<2x32xf32>
    %180 = arith.addf %179, %178 : vector<2x32xf32>
    %181 = arith.divf %179, %180 : vector<2x32xf32>
    %182 = arith.mulf %173, %115 : vector<2x32xf32>
    %183 = arith.mulf %167, %175 : vector<2x32xf32>
    %184 = arith.addf %182, %183 : vector<2x32xf32>
    %185 = math.tanh %184 : vector<2x32xf32>
    %186 = arith.mulf %181, %185 : vector<2x32xf32>
    %187 = arith.index_cast %156 : i32 to index
    %c0_53 = arith.constant 0 : index
    %188 = vector.load %arg8[%187, %c0_53] : memref<16x64xf32, #tpu.memory_space<vmem>>, vector<2x32xf32>
    tpu.vector_store %arg8[%187, %c0_53], %186 {strides = array<i32>} : memref<16x64xf32, #tpu.memory_space<vmem>>, vector<2x32xf32>,
    %c7_i32_54 = arith.constant 7 : i32
    %189 = arith.subi %c7_i32_54, %c2_i32_46 : i32
    %c2_i32_55 = arith.constant 2 : i32
    %190 = arith.muli %189, %c2_i32_55 : i32
    %191 = tpu.assume_multiple %190, 2 : i32
    %192 = arith.index_cast %191 : i32 to index
    %c0_56 = arith.constant 0 : index
    %193 = vector.load %arg10[%192, %c0_56] : memref<16x128xf32, #tpu.memory_space<vmem>>, vector<2x128xf32>
    %194 = arith.truncf %152 : vector<2x32xf32> to vector<2x32xbf16>
    %cst_57 = arith.constant dense<0.000000e+00> : vector<2x128xf32>
    %195 = tpu.matmul %194, %15, %cst_57 {dimension_numbers = #tpu.dot_dimension_numbers<[1], [0], [0], [1], [0, 0, 1, 1], [], []>} : vector<2x32xbf16>, vector<32x128xbf16>, vector<2x128xf32> -> vector<2x128xf32>
    %196 = arith.addf %193, %195 : vector<2x128xf32>
    %197 = vector.extract_strided_slice %196 {offsets = [0, 0], sizes = [2, 32], strides = [1, 1]} : vector<2x128xf32> to vector<2x32xf32>
    %198 = arith.negf %197 : vector<2x32xf32>
    %199 = math.exp %198 : vector<2x32xf32>
    %cst_58 = arith.constant 1.000000e+00 : f32
    %200 = vector.broadcast %cst_58 : f32 to vector<2x32xf32>
    %201 = arith.addf %200, %199 : vector<2x32xf32>
    %202 = arith.divf %200, %201 : vector<2x32xf32>
    %203 = vector.extract_strided_slice %196 {offsets = [0, 32], sizes = [2, 32], strides = [1, 1]} : vector<2x128xf32> to vector<2x32xf32>
    %204 = arith.negf %203 : vector<2x32xf32>
    %205 = math.exp %204 : vector<2x32xf32>
    %cst_59 = arith.constant 1.000000e+00 : f32
    %206 = vector.broadcast %cst_59 : f32 to vector<2x32xf32>
    %207 = arith.addf %206, %205 : vector<2x32xf32>
    %208 = arith.divf %206, %207 : vector<2x32xf32>
    %209 = vector.extract_strided_slice %196 {offsets = [0, 64], sizes = [2, 32], strides = [1, 1]} : vector<2x128xf32> to vector<2x32xf32>
    %210 = math.tanh %209 : vector<2x32xf32>
    %211 = vector.extract_strided_slice %196 {offsets = [0, 96], sizes = [2, 32], strides = [1, 1]} : vector<2x128xf32> to vector<2x32xf32>
    %212 = arith.negf %211 : vector<2x32xf32>
    %213 = math.exp %212 : vector<2x32xf32>
    %cst_60 = arith.constant 1.000000e+00 : f32
    %214 = vector.broadcast %cst_60 : f32 to vector<2x32xf32>
    %215 = arith.addf %214, %213 : vector<2x32xf32>
    %216 = arith.divf %214, %215 : vector<2x32xf32>
    %217 = arith.mulf %208, %150 : vector<2x32xf32>
    %218 = arith.mulf %202, %210 : vector<2x32xf32>
    %219 = arith.addf %217, %218 : vector<2x32xf32>
    %220 = math.tanh %219 : vector<2x32xf32>
    %221 = arith.mulf %216, %220 : vector<2x32xf32>
    %222 = arith.index_cast %191 : i32 to index
    %c32_61 = arith.constant 32 : index
    %223 = vector.load %arg8[%222, %c32_61] : memref<16x64xf32, #tpu.memory_space<vmem>>, vector<2x32xf32>
    tpu.vector_store %arg8[%222, %c32_61], %221 {strides = array<i32>} : memref<16x64xf32, #tpu.memory_space<vmem>>, vector<2x32xf32>,
    %c3_i32 = arith.constant 3 : i32
    %c2_i32_62 = arith.constant 2 : i32
    %224 = arith.muli %c3_i32, %c2_i32_62 : i32
    %225 = tpu.assume_multiple %224, 2 : i32
    %226 = arith.index_cast %225 : i32 to index
    %c0_63 = arith.constant 0 : index
    %227 = vector.load %arg9[%226, %c0_63] : memref<16x128xf32, #tpu.memory_space<vmem>>, vector<2x128xf32>
    %228 = arith.truncf %186 : vector<2x32xf32> to vector<2x32xbf16>
    %cst_64 = arith.constant dense<0.000000e+00> : vector<2x128xf32>
    %229 = tpu.matmul %228, %14, %cst_64 {dimension_numbers = #tpu.dot_dimension_numbers<[1], [0], [0], [1], [0, 0, 1, 1], [], []>} : vector<2x32xbf16>, vector<32x128xbf16>, vector<2x128xf32> -> vector<2x128xf32>
    %230 = arith.addf %227, %229 : vector<2x128xf32>
    %231 = vector.extract_strided_slice %230 {offsets = [0, 0], sizes = [2, 32], strides = [1, 1]} : vector<2x128xf32> to vector<2x32xf32>
    %232 = arith.negf %231 : vector<2x32xf32>
    %233 = math.exp %232 : vector<2x32xf32>
    %cst_65 = arith.constant 1.000000e+00 : f32
    %234 = vector.broadcast %cst_65 : f32 to vector<2x32xf32>
    %235 = arith.addf %234, %233 : vector<2x32xf32>
    %236 = arith.divf %234, %235 : vector<2x32xf32>
    %237 = vector.extract_strided_slice %230 {offsets = [0, 32], sizes = [2, 32], strides = [1, 1]} : vector<2x128xf32> to vector<2x32xf32>
    %238 = arith.negf %237 : vector<2x32xf32>
    %239 = math.exp %238 : vector<2x32xf32>
    %cst_66 = arith.constant 1.000000e+00 : f32
    %240 = vector.broadcast %cst_66 : f32 to vector<2x32xf32>
    %241 = arith.addf %240, %239 : vector<2x32xf32>
    %242 = arith.divf %240, %241 : vector<2x32xf32>
    %243 = vector.extract_strided_slice %230 {offsets = [0, 64], sizes = [2, 32], strides = [1, 1]} : vector<2x128xf32> to vector<2x32xf32>
    %244 = math.tanh %243 : vector<2x32xf32>
    %245 = vector.extract_strided_slice %230 {offsets = [0, 96], sizes = [2, 32], strides = [1, 1]} : vector<2x128xf32> to vector<2x32xf32>
    %246 = arith.negf %245 : vector<2x32xf32>
    %247 = math.exp %246 : vector<2x32xf32>
    %cst_67 = arith.constant 1.000000e+00 : f32
    %248 = vector.broadcast %cst_67 : f32 to vector<2x32xf32>
    %249 = arith.addf %248, %247 : vector<2x32xf32>
    %250 = arith.divf %248, %249 : vector<2x32xf32>
    %251 = arith.mulf %242, %184 : vector<2x32xf32>
    %252 = arith.mulf %236, %244 : vector<2x32xf32>
    %253 = arith.addf %251, %252 : vector<2x32xf32>
    %254 = math.tanh %253 : vector<2x32xf32>
    %255 = arith.mulf %250, %254 : vector<2x32xf32>
    %256 = arith.index_cast %225 : i32 to index
    %c0_68 = arith.constant 0 : index
    %257 = vector.load %arg8[%256, %c0_68] : memref<16x64xf32, #tpu.memory_space<vmem>>, vector<2x32xf32>
    tpu.vector_store %arg8[%256, %c0_68], %255 {strides = array<i32>} : memref<16x64xf32, #tpu.memory_space<vmem>>, vector<2x32xf32>,
    %c7_i32_69 = arith.constant 7 : i32
    %258 = arith.subi %c7_i32_69, %c3_i32 : i32
    %c2_i32_70 = arith.constant 2 : i32
    %259 = arith.muli %258, %c2_i32_70 : i32
    %260 = tpu.assume_multiple %259, 2 : i32
    %261 = arith.index_cast %260 : i32 to index
    %c0_71 = arith.constant 0 : index
    %262 = vector.load %arg10[%261, %c0_71] : memref<16x128xf32, #tpu.memory_space<vmem>>, vector<2x128xf32>
    %263 = arith.truncf %221 : vector<2x32xf32> to vector<2x32xbf16>
    %cst_72 = arith.constant dense<0.000000e+00> : vector<2x128xf32>
    %264 = tpu.matmul %263, %15, %cst_72 {dimension_numbers = #tpu.dot_dimension_numbers<[1], [0], [0], [1], [0, 0, 1, 1], [], []>} : vector<2x32xbf16>, vector<32x128xbf16>, vector<2x128xf32> -> vector<2x128xf32>
    %265 = arith.addf %262, %264 : vector<2x128xf32>
    %266 = vector.extract_strided_slice %265 {offsets = [0, 0], sizes = [2, 32], strides = [1, 1]} : vector<2x128xf32> to vector<2x32xf32>
    %267 = arith.negf %266 : vector<2x32xf32>
    %268 = math.exp %267 : vector<2x32xf32>
    %cst_73 = arith.constant 1.000000e+00 : f32
    %269 = vector.broadcast %cst_73 : f32 to vector<2x32xf32>
    %270 = arith.addf %269, %268 : vector<2x32xf32>
    %271 = arith.divf %269, %270 : vector<2x32xf32>
    %272 = vector.extract_strided_slice %265 {offsets = [0, 32], sizes = [2, 32], strides = [1, 1]} : vector<2x128xf32> to vector<2x32xf32>
    %273 = arith.negf %272 : vector<2x32xf32>
    %274 = math.exp %273 : vector<2x32xf32>
    %cst_74 = arith.constant 1.000000e+00 : f32
    %275 = vector.broadcast %cst_74 : f32 to vector<2x32xf32>
    %276 = arith.addf %275, %274 : vector<2x32xf32>
    %277 = arith.divf %275, %276 : vector<2x32xf32>
    %278 = vector.extract_strided_slice %265 {offsets = [0, 64], sizes = [2, 32], strides = [1, 1]} : vector<2x128xf32> to vector<2x32xf32>
    %279 = math.tanh %278 : vector<2x32xf32>
    %280 = vector.extract_strided_slice %265 {offsets = [0, 96], sizes = [2, 32], strides = [1, 1]} : vector<2x128xf32> to vector<2x32xf32>
    %281 = arith.negf %280 : vector<2x32xf32>
    %282 = math.exp %281 : vector<2x32xf32>
    %cst_75 = arith.constant 1.000000e+00 : f32
    %283 = vector.broadcast %cst_75 : f32 to vector<2x32xf32>
    %284 = arith.addf %283, %282 : vector<2x32xf32>
    %285 = arith.divf %283, %284 : vector<2x32xf32>
    %286 = arith.mulf %277, %219 : vector<2x32xf32>
    %287 = arith.mulf %271, %279 : vector<2x32xf32>
    %288 = arith.addf %286, %287 : vector<2x32xf32>
    %289 = math.tanh %288 : vector<2x32xf32>
    %290 = arith.mulf %285, %289 : vector<2x32xf32>
    %291 = arith.index_cast %260 : i32 to index
    %c32_76 = arith.constant 32 : index
    %292 = vector.load %arg8[%291, %c32_76] : memref<16x64xf32, #tpu.memory_space<vmem>>, vector<2x32xf32>
    tpu.vector_store %arg8[%291, %c32_76], %290 {strides = array<i32>} : memref<16x64xf32, #tpu.memory_space<vmem>>, vector<2x32xf32>,
    %c4_i32 = arith.constant 4 : i32
    %c2_i32_77 = arith.constant 2 : i32
    %293 = arith.muli %c4_i32, %c2_i32_77 : i32
    %294 = tpu.assume_multiple %293, 2 : i32
    %295 = arith.index_cast %294 : i32 to index
    %c0_78 = arith.constant 0 : index
    %296 = vector.load %arg9[%295, %c0_78] : memref<16x128xf32, #tpu.memory_space<vmem>>, vector<2x128xf32>
    %297 = arith.truncf %255 : vector<2x32xf32> to vector<2x32xbf16>
    %cst_79 = arith.constant dense<0.000000e+00> : vector<2x128xf32>
    %298 = tpu.matmul %297, %14, %cst_79 {dimension_numbers = #tpu.dot_dimension_numbers<[1], [0], [0], [1], [0, 0, 1, 1], [], []>} : vector<2x32xbf16>, vector<32x128xbf16>, vector<2x128xf32> -> vector<2x128xf32>
    %299 = arith.addf %296, %298 : vector<2x128xf32>
    %300 = vector.extract_strided_slice %299 {offsets = [0, 0], sizes = [2, 32], strides = [1, 1]} : vector<2x128xf32> to vector<2x32xf32>
    %301 = arith.negf %300 : vector<2x32xf32>
    %302 = math.exp %301 : vector<2x32xf32>
    %cst_80 = arith.constant 1.000000e+00 : f32
    %303 = vector.broadcast %cst_80 : f32 to vector<2x32xf32>
    %304 = arith.addf %303, %302 : vector<2x32xf32>
    %305 = arith.divf %303, %304 : vector<2x32xf32>
    %306 = vector.extract_strided_slice %299 {offsets = [0, 32], sizes = [2, 32], strides = [1, 1]} : vector<2x128xf32> to vector<2x32xf32>
    %307 = arith.negf %306 : vector<2x32xf32>
    %308 = math.exp %307 : vector<2x32xf32>
    %cst_81 = arith.constant 1.000000e+00 : f32
    %309 = vector.broadcast %cst_81 : f32 to vector<2x32xf32>
    %310 = arith.addf %309, %308 : vector<2x32xf32>
    %311 = arith.divf %309, %310 : vector<2x32xf32>
    %312 = vector.extract_strided_slice %299 {offsets = [0, 64], sizes = [2, 32], strides = [1, 1]} : vector<2x128xf32> to vector<2x32xf32>
    %313 = math.tanh %312 : vector<2x32xf32>
    %314 = vector.extract_strided_slice %299 {offsets = [0, 96], sizes = [2, 32], strides = [1, 1]} : vector<2x128xf32> to vector<2x32xf32>
    %315 = arith.negf %314 : vector<2x32xf32>
    %316 = math.exp %315 : vector<2x32xf32>
    %cst_82 = arith.constant 1.000000e+00 : f32
    %317 = vector.broadcast %cst_82 : f32 to vector<2x32xf32>
    %318 = arith.addf %317, %316 : vector<2x32xf32>
    %319 = arith.divf %317, %318 : vector<2x32xf32>
    %320 = arith.mulf %311, %253 : vector<2x32xf32>
    %321 = arith.mulf %305, %313 : vector<2x32xf32>
    %322 = arith.addf %320, %321 : vector<2x32xf32>
    %323 = math.tanh %322 : vector<2x32xf32>
    %324 = arith.mulf %319, %323 : vector<2x32xf32>
    %325 = arith.index_cast %294 : i32 to index
    %c0_83 = arith.constant 0 : index
    %326 = vector.load %arg8[%325, %c0_83] : memref<16x64xf32, #tpu.memory_space<vmem>>, vector<2x32xf32>
    tpu.vector_store %arg8[%325, %c0_83], %324 {strides = array<i32>} : memref<16x64xf32, #tpu.memory_space<vmem>>, vector<2x32xf32>,
    %c7_i32_84 = arith.constant 7 : i32
    %327 = arith.subi %c7_i32_84, %c4_i32 : i32
    %c2_i32_85 = arith.constant 2 : i32
    %328 = arith.muli %327, %c2_i32_85 : i32
    %329 = tpu.assume_multiple %328, 2 : i32
    %330 = arith.index_cast %329 : i32 to index
    %c0_86 = arith.constant 0 : index
    %331 = vector.load %arg10[%330, %c0_86] : memref<16x128xf32, #tpu.memory_space<vmem>>, vector<2x128xf32>
    %332 = arith.truncf %290 : vector<2x32xf32> to vector<2x32xbf16>
    %cst_87 = arith.constant dense<0.000000e+00> : vector<2x128xf32>
    %333 = tpu.matmul %332, %15, %cst_87 {dimension_numbers = #tpu.dot_dimension_numbers<[1], [0], [0], [1], [0, 0, 1, 1], [], []>} : vector<2x32xbf16>, vector<32x128xbf16>, vector<2x128xf32> -> vector<2x128xf32>
    %334 = arith.addf %331, %333 : vector<2x128xf32>
    %335 = vector.extract_strided_slice %334 {offsets = [0, 0], sizes = [2, 32], strides = [1, 1]} : vector<2x128xf32> to vector<2x32xf32>
    %336 = arith.negf %335 : vector<2x32xf32>
    %337 = math.exp %336 : vector<2x32xf32>
    %cst_88 = arith.constant 1.000000e+00 : f32
    %338 = vector.broadcast %cst_88 : f32 to vector<2x32xf32>
    %339 = arith.addf %338, %337 : vector<2x32xf32>
    %340 = arith.divf %338, %339 : vector<2x32xf32>
    %341 = vector.extract_strided_slice %334 {offsets = [0, 32], sizes = [2, 32], strides = [1, 1]} : vector<2x128xf32> to vector<2x32xf32>
    %342 = arith.negf %341 : vector<2x32xf32>
    %343 = math.exp %342 : vector<2x32xf32>
    %cst_89 = arith.constant 1.000000e+00 : f32
    %344 = vector.broadcast %cst_89 : f32 to vector<2x32xf32>
    %345 = arith.addf %344, %343 : vector<2x32xf32>
    %346 = arith.divf %344, %345 : vector<2x32xf32>
    %347 = vector.extract_strided_slice %334 {offsets = [0, 64], sizes = [2, 32], strides = [1, 1]} : vector<2x128xf32> to vector<2x32xf32>
    %348 = math.tanh %347 : vector<2x32xf32>
    %349 = vector.extract_strided_slice %334 {offsets = [0, 96], sizes = [2, 32], strides = [1, 1]} : vector<2x128xf32> to vector<2x32xf32>
    %350 = arith.negf %349 : vector<2x32xf32>
    %351 = math.exp %350 : vector<2x32xf32>
    %cst_90 = arith.constant 1.000000e+00 : f32
    %352 = vector.broadcast %cst_90 : f32 to vector<2x32xf32>
    %353 = arith.addf %352, %351 : vector<2x32xf32>
    %354 = arith.divf %352, %353 : vector<2x32xf32>
    %355 = arith.mulf %346, %288 : vector<2x32xf32>
    %356 = arith.mulf %340, %348 : vector<2x32xf32>
    %357 = arith.addf %355, %356 : vector<2x32xf32>
    %358 = math.tanh %357 : vector<2x32xf32>
    %359 = arith.mulf %354, %358 : vector<2x32xf32>
    %360 = arith.index_cast %329 : i32 to index
    %c32_91 = arith.constant 32 : index
    %361 = vector.load %arg8[%360, %c32_91] : memref<16x64xf32, #tpu.memory_space<vmem>>, vector<2x32xf32>
    tpu.vector_store %arg8[%360, %c32_91], %359 {strides = array<i32>} : memref<16x64xf32, #tpu.memory_space<vmem>>, vector<2x32xf32>,
    %c5_i32 = arith.constant 5 : i32
    %c2_i32_92 = arith.constant 2 : i32
    %362 = arith.muli %c5_i32, %c2_i32_92 : i32
    %363 = tpu.assume_multiple %362, 2 : i32
    %364 = arith.index_cast %363 : i32 to index
    %c0_93 = arith.constant 0 : index
    %365 = vector.load %arg9[%364, %c0_93] : memref<16x128xf32, #tpu.memory_space<vmem>>, vector<2x128xf32>
    %366 = arith.truncf %324 : vector<2x32xf32> to vector<2x32xbf16>
    %cst_94 = arith.constant dense<0.000000e+00> : vector<2x128xf32>
    %367 = tpu.matmul %366, %14, %cst_94 {dimension_numbers = #tpu.dot_dimension_numbers<[1], [0], [0], [1], [0, 0, 1, 1], [], []>} : vector<2x32xbf16>, vector<32x128xbf16>, vector<2x128xf32> -> vector<2x128xf32>
    %368 = arith.addf %365, %367 : vector<2x128xf32>
    %369 = vector.extract_strided_slice %368 {offsets = [0, 0], sizes = [2, 32], strides = [1, 1]} : vector<2x128xf32> to vector<2x32xf32>
    %370 = arith.negf %369 : vector<2x32xf32>
    %371 = math.exp %370 : vector<2x32xf32>
    %cst_95 = arith.constant 1.000000e+00 : f32
    %372 = vector.broadcast %cst_95 : f32 to vector<2x32xf32>
    %373 = arith.addf %372, %371 : vector<2x32xf32>
    %374 = arith.divf %372, %373 : vector<2x32xf32>
    %375 = vector.extract_strided_slice %368 {offsets = [0, 32], sizes = [2, 32], strides = [1, 1]} : vector<2x128xf32> to vector<2x32xf32>
    %376 = arith.negf %375 : vector<2x32xf32>
    %377 = math.exp %376 : vector<2x32xf32>
    %cst_96 = arith.constant 1.000000e+00 : f32
    %378 = vector.broadcast %cst_96 : f32 to vector<2x32xf32>
    %379 = arith.addf %378, %377 : vector<2x32xf32>
    %380 = arith.divf %378, %379 : vector<2x32xf32>
    %381 = vector.extract_strided_slice %368 {offsets = [0, 64], sizes = [2, 32], strides = [1, 1]} : vector<2x128xf32> to vector<2x32xf32>
    %382 = math.tanh %381 : vector<2x32xf32>
    %383 = vector.extract_strided_slice %368 {offsets = [0, 96], sizes = [2, 32], strides = [1, 1]} : vector<2x128xf32> to vector<2x32xf32>
    %384 = arith.negf %383 : vector<2x32xf32>
    %385 = math.exp %384 : vector<2x32xf32>
    %cst_97 = arith.constant 1.000000e+00 : f32
    %386 = vector.broadcast %cst_97 : f32 to vector<2x32xf32>
    %387 = arith.addf %386, %385 : vector<2x32xf32>
    %388 = arith.divf %386, %387 : vector<2x32xf32>
    %389 = arith.mulf %380, %322 : vector<2x32xf32>
    %390 = arith.mulf %374, %382 : vector<2x32xf32>
    %391 = arith.addf %389, %390 : vector<2x32xf32>
    %392 = math.tanh %391 : vector<2x32xf32>
    %393 = arith.mulf %388, %392 : vector<2x32xf32>
    %394 = arith.index_cast %363 : i32 to index
    %c0_98 = arith.constant 0 : index
    %395 = vector.load %arg8[%394, %c0_98] : memref<16x64xf32, #tpu.memory_space<vmem>>, vector<2x32xf32>
    tpu.vector_store %arg8[%394, %c0_98], %393 {strides = array<i32>} : memref<16x64xf32, #tpu.memory_space<vmem>>, vector<2x32xf32>,
    %c7_i32_99 = arith.constant 7 : i32
    %396 = arith.subi %c7_i32_99, %c5_i32 : i32
    %c2_i32_100 = arith.constant 2 : i32
    %397 = arith.muli %396, %c2_i32_100 : i32
    %398 = tpu.assume_multiple %397, 2 : i32
    %399 = arith.index_cast %398 : i32 to index
    %c0_101 = arith.constant 0 : index
    %400 = vector.load %arg10[%399, %c0_101] : memref<16x128xf32, #tpu.memory_space<vmem>>, vector<2x128xf32>
    %401 = arith.truncf %359 : vector<2x32xf32> to vector<2x32xbf16>
    %cst_102 = arith.constant dense<0.000000e+00> : vector<2x128xf32>
    %402 = tpu.matmul %401, %15, %cst_102 {dimension_numbers = #tpu.dot_dimension_numbers<[1], [0], [0], [1], [0, 0, 1, 1], [], []>} : vector<2x32xbf16>, vector<32x128xbf16>, vector<2x128xf32> -> vector<2x128xf32>
    %403 = arith.addf %400, %402 : vector<2x128xf32>
    %404 = vector.extract_strided_slice %403 {offsets = [0, 0], sizes = [2, 32], strides = [1, 1]} : vector<2x128xf32> to vector<2x32xf32>
    %405 = arith.negf %404 : vector<2x32xf32>
    %406 = math.exp %405 : vector<2x32xf32>
    %cst_103 = arith.constant 1.000000e+00 : f32
    %407 = vector.broadcast %cst_103 : f32 to vector<2x32xf32>
    %408 = arith.addf %407, %406 : vector<2x32xf32>
    %409 = arith.divf %407, %408 : vector<2x32xf32>
    %410 = vector.extract_strided_slice %403 {offsets = [0, 32], sizes = [2, 32], strides = [1, 1]} : vector<2x128xf32> to vector<2x32xf32>
    %411 = arith.negf %410 : vector<2x32xf32>
    %412 = math.exp %411 : vector<2x32xf32>
    %cst_104 = arith.constant 1.000000e+00 : f32
    %413 = vector.broadcast %cst_104 : f32 to vector<2x32xf32>
    %414 = arith.addf %413, %412 : vector<2x32xf32>
    %415 = arith.divf %413, %414 : vector<2x32xf32>
    %416 = vector.extract_strided_slice %403 {offsets = [0, 64], sizes = [2, 32], strides = [1, 1]} : vector<2x128xf32> to vector<2x32xf32>
    %417 = math.tanh %416 : vector<2x32xf32>
    %418 = vector.extract_strided_slice %403 {offsets = [0, 96], sizes = [2, 32], strides = [1, 1]} : vector<2x128xf32> to vector<2x32xf32>
    %419 = arith.negf %418 : vector<2x32xf32>
    %420 = math.exp %419 : vector<2x32xf32>
    %cst_105 = arith.constant 1.000000e+00 : f32
    %421 = vector.broadcast %cst_105 : f32 to vector<2x32xf32>
    %422 = arith.addf %421, %420 : vector<2x32xf32>
    %423 = arith.divf %421, %422 : vector<2x32xf32>
    %424 = arith.mulf %415, %357 : vector<2x32xf32>
    %425 = arith.mulf %409, %417 : vector<2x32xf32>
    %426 = arith.addf %424, %425 : vector<2x32xf32>
    %427 = math.tanh %426 : vector<2x32xf32>
    %428 = arith.mulf %423, %427 : vector<2x32xf32>
    %429 = arith.index_cast %398 : i32 to index
    %c32_106 = arith.constant 32 : index
    %430 = vector.load %arg8[%429, %c32_106] : memref<16x64xf32, #tpu.memory_space<vmem>>, vector<2x32xf32>
    tpu.vector_store %arg8[%429, %c32_106], %428 {strides = array<i32>} : memref<16x64xf32, #tpu.memory_space<vmem>>, vector<2x32xf32>,
    %c6_i32 = arith.constant 6 : i32
    %c2_i32_107 = arith.constant 2 : i32
    %431 = arith.muli %c6_i32, %c2_i32_107 : i32
    %432 = tpu.assume_multiple %431, 2 : i32
    %433 = arith.index_cast %432 : i32 to index
    %c0_108 = arith.constant 0 : index
    %434 = vector.load %arg9[%433, %c0_108] : memref<16x128xf32, #tpu.memory_space<vmem>>, vector<2x128xf32>
    %435 = arith.truncf %393 : vector<2x32xf32> to vector<2x32xbf16>
    %cst_109 = arith.constant dense<0.000000e+00> : vector<2x128xf32>
    %436 = tpu.matmul %435, %14, %cst_109 {dimension_numbers = #tpu.dot_dimension_numbers<[1], [0], [0], [1], [0, 0, 1, 1], [], []>} : vector<2x32xbf16>, vector<32x128xbf16>, vector<2x128xf32> -> vector<2x128xf32>
    %437 = arith.addf %434, %436 : vector<2x128xf32>
    %438 = vector.extract_strided_slice %437 {offsets = [0, 0], sizes = [2, 32], strides = [1, 1]} : vector<2x128xf32> to vector<2x32xf32>
    %439 = arith.negf %438 : vector<2x32xf32>
    %440 = math.exp %439 : vector<2x32xf32>
    %cst_110 = arith.constant 1.000000e+00 : f32
    %441 = vector.broadcast %cst_110 : f32 to vector<2x32xf32>
    %442 = arith.addf %441, %440 : vector<2x32xf32>
    %443 = arith.divf %441, %442 : vector<2x32xf32>
    %444 = vector.extract_strided_slice %437 {offsets = [0, 32], sizes = [2, 32], strides = [1, 1]} : vector<2x128xf32> to vector<2x32xf32>
    %445 = arith.negf %444 : vector<2x32xf32>
    %446 = math.exp %445 : vector<2x32xf32>
    %cst_111 = arith.constant 1.000000e+00 : f32
    %447 = vector.broadcast %cst_111 : f32 to vector<2x32xf32>
    %448 = arith.addf %447, %446 : vector<2x32xf32>
    %449 = arith.divf %447, %448 : vector<2x32xf32>
    %450 = vector.extract_strided_slice %437 {offsets = [0, 64], sizes = [2, 32], strides = [1, 1]} : vector<2x128xf32> to vector<2x32xf32>
    %451 = math.tanh %450 : vector<2x32xf32>
    %452 = vector.extract_strided_slice %437 {offsets = [0, 96], sizes = [2, 32], strides = [1, 1]} : vector<2x128xf32> to vector<2x32xf32>
    %453 = arith.negf %452 : vector<2x32xf32>
    %454 = math.exp %453 : vector<2x32xf32>
    %cst_112 = arith.constant 1.000000e+00 : f32
    %455 = vector.broadcast %cst_112 : f32 to vector<2x32xf32>
    %456 = arith.addf %455, %454 : vector<2x32xf32>
    %457 = arith.divf %455, %456 : vector<2x32xf32>
    %458 = arith.mulf %449, %391 : vector<2x32xf32>
    %459 = arith.mulf %443, %451 : vector<2x32xf32>
    %460 = arith.addf %458, %459 : vector<2x32xf32>
    %461 = math.tanh %460 : vector<2x32xf32>
    %462 = arith.mulf %457, %461 : vector<2x32xf32>
    %463 = arith.index_cast %432 : i32 to index
    %c0_113 = arith.constant 0 : index
    %464 = vector.load %arg8[%463, %c0_113] : memref<16x64xf32, #tpu.memory_space<vmem>>, vector<2x32xf32>
    tpu.vector_store %arg8[%463, %c0_113], %462 {strides = array<i32>} : memref<16x64xf32, #tpu.memory_space<vmem>>, vector<2x32xf32>,
    %c7_i32_114 = arith.constant 7 : i32
    %465 = arith.subi %c7_i32_114, %c6_i32 : i32
    %c2_i32_115 = arith.constant 2 : i32
    %466 = arith.muli %465, %c2_i32_115 : i32
    %467 = tpu.assume_multiple %466, 2 : i32
    %468 = arith.index_cast %467 : i32 to index
    %c0_116 = arith.constant 0 : index
    %469 = vector.load %arg10[%468, %c0_116] : memref<16x128xf32, #tpu.memory_space<vmem>>, vector<2x128xf32>
    %470 = arith.truncf %428 : vector<2x32xf32> to vector<2x32xbf16>
    %cst_117 = arith.constant dense<0.000000e+00> : vector<2x128xf32>
    %471 = tpu.matmul %470, %15, %cst_117 {dimension_numbers = #tpu.dot_dimension_numbers<[1], [0], [0], [1], [0, 0, 1, 1], [], []>} : vector<2x32xbf16>, vector<32x128xbf16>, vector<2x128xf32> -> vector<2x128xf32>
    %472 = arith.addf %469, %471 : vector<2x128xf32>
    %473 = vector.extract_strided_slice %472 {offsets = [0, 0], sizes = [2, 32], strides = [1, 1]} : vector<2x128xf32> to vector<2x32xf32>
    %474 = arith.negf %473 : vector<2x32xf32>
    %475 = math.exp %474 : vector<2x32xf32>
    %cst_118 = arith.constant 1.000000e+00 : f32
    %476 = vector.broadcast %cst_118 : f32 to vector<2x32xf32>
    %477 = arith.addf %476, %475 : vector<2x32xf32>
    %478 = arith.divf %476, %477 : vector<2x32xf32>
    %479 = vector.extract_strided_slice %472 {offsets = [0, 32], sizes = [2, 32], strides = [1, 1]} : vector<2x128xf32> to vector<2x32xf32>
    %480 = arith.negf %479 : vector<2x32xf32>
    %481 = math.exp %480 : vector<2x32xf32>
    %cst_119 = arith.constant 1.000000e+00 : f32
    %482 = vector.broadcast %cst_119 : f32 to vector<2x32xf32>
    %483 = arith.addf %482, %481 : vector<2x32xf32>
    %484 = arith.divf %482, %483 : vector<2x32xf32>
    %485 = vector.extract_strided_slice %472 {offsets = [0, 64], sizes = [2, 32], strides = [1, 1]} : vector<2x128xf32> to vector<2x32xf32>
    %486 = math.tanh %485 : vector<2x32xf32>
    %487 = vector.extract_strided_slice %472 {offsets = [0, 96], sizes = [2, 32], strides = [1, 1]} : vector<2x128xf32> to vector<2x32xf32>
    %488 = arith.negf %487 : vector<2x32xf32>
    %489 = math.exp %488 : vector<2x32xf32>
    %cst_120 = arith.constant 1.000000e+00 : f32
    %490 = vector.broadcast %cst_120 : f32 to vector<2x32xf32>
    %491 = arith.addf %490, %489 : vector<2x32xf32>
    %492 = arith.divf %490, %491 : vector<2x32xf32>
    %493 = arith.mulf %484, %426 : vector<2x32xf32>
    %494 = arith.mulf %478, %486 : vector<2x32xf32>
    %495 = arith.addf %493, %494 : vector<2x32xf32>
    %496 = math.tanh %495 : vector<2x32xf32>
    %497 = arith.mulf %492, %496 : vector<2x32xf32>
    %498 = arith.index_cast %467 : i32 to index
    %c32_121 = arith.constant 32 : index
    %499 = vector.load %arg8[%498, %c32_121] : memref<16x64xf32, #tpu.memory_space<vmem>>, vector<2x32xf32>
    tpu.vector_store %arg8[%498, %c32_121], %497 {strides = array<i32>} : memref<16x64xf32, #tpu.memory_space<vmem>>, vector<2x32xf32>,
    %c7_i32_122 = arith.constant 7 : i32
    %c2_i32_123 = arith.constant 2 : i32
    %500 = arith.muli %c7_i32_122, %c2_i32_123 : i32
    %501 = tpu.assume_multiple %500, 2 : i32
    %502 = arith.index_cast %501 : i32 to index
    %c0_124 = arith.constant 0 : index
    %503 = vector.load %arg9[%502, %c0_124] : memref<16x128xf32, #tpu.memory_space<vmem>>, vector<2x128xf32>
    %504 = arith.truncf %462 : vector<2x32xf32> to vector<2x32xbf16>
    %cst_125 = arith.constant dense<0.000000e+00> : vector<2x128xf32>
    %505 = tpu.matmul %504, %14, %cst_125 {dimension_numbers = #tpu.dot_dimension_numbers<[1], [0], [0], [1], [0, 0, 1, 1], [], []>} : vector<2x32xbf16>, vector<32x128xbf16>, vector<2x128xf32> -> vector<2x128xf32>
    %506 = arith.addf %503, %505 : vector<2x128xf32>
    %507 = vector.extract_strided_slice %506 {offsets = [0, 0], sizes = [2, 32], strides = [1, 1]} : vector<2x128xf32> to vector<2x32xf32>
    %508 = arith.negf %507 : vector<2x32xf32>
    %509 = math.exp %508 : vector<2x32xf32>
    %cst_126 = arith.constant 1.000000e+00 : f32
    %510 = vector.broadcast %cst_126 : f32 to vector<2x32xf32>
    %511 = arith.addf %510, %509 : vector<2x32xf32>
    %512 = arith.divf %510, %511 : vector<2x32xf32>
    %513 = vector.extract_strided_slice %506 {offsets = [0, 32], sizes = [2, 32], strides = [1, 1]} : vector<2x128xf32> to vector<2x32xf32>
    %514 = arith.negf %513 : vector<2x32xf32>
    %515 = math.exp %514 : vector<2x32xf32>
    %cst_127 = arith.constant 1.000000e+00 : f32
    %516 = vector.broadcast %cst_127 : f32 to vector<2x32xf32>
    %517 = arith.addf %516, %515 : vector<2x32xf32>
    %518 = arith.divf %516, %517 : vector<2x32xf32>
    %519 = vector.extract_strided_slice %506 {offsets = [0, 64], sizes = [2, 32], strides = [1, 1]} : vector<2x128xf32> to vector<2x32xf32>
    %520 = math.tanh %519 : vector<2x32xf32>
    %521 = vector.extract_strided_slice %506 {offsets = [0, 96], sizes = [2, 32], strides = [1, 1]} : vector<2x128xf32> to vector<2x32xf32>
    %522 = arith.negf %521 : vector<2x32xf32>
    %523 = math.exp %522 : vector<2x32xf32>
    %cst_128 = arith.constant 1.000000e+00 : f32
    %524 = vector.broadcast %cst_128 : f32 to vector<2x32xf32>
    %525 = arith.addf %524, %523 : vector<2x32xf32>
    %526 = arith.divf %524, %525 : vector<2x32xf32>
    %527 = arith.mulf %518, %460 : vector<2x32xf32>
    %528 = arith.mulf %512, %520 : vector<2x32xf32>
    %529 = arith.addf %527, %528 : vector<2x32xf32>
    %530 = math.tanh %529 : vector<2x32xf32>
    %531 = arith.mulf %526, %530 : vector<2x32xf32>
    %532 = arith.index_cast %501 : i32 to index
    %c0_129 = arith.constant 0 : index
    %533 = vector.load %arg8[%532, %c0_129] : memref<16x64xf32, #tpu.memory_space<vmem>>, vector<2x32xf32>
    tpu.vector_store %arg8[%532, %c0_129], %531 {strides = array<i32>} : memref<16x64xf32, #tpu.memory_space<vmem>>, vector<2x32xf32>,
    %c7_i32_130 = arith.constant 7 : i32
    %534 = arith.subi %c7_i32_130, %c7_i32_122 : i32
    %c2_i32_131 = arith.constant 2 : i32
    %535 = arith.muli %534, %c2_i32_131 : i32
    %536 = tpu.assume_multiple %535, 2 : i32
    %537 = arith.index_cast %536 : i32 to index
    %c0_132 = arith.constant 0 : index
    %538 = vector.load %arg10[%537, %c0_132] : memref<16x128xf32, #tpu.memory_space<vmem>>, vector<2x128xf32>
    %539 = arith.truncf %497 : vector<2x32xf32> to vector<2x32xbf16>
    %cst_133 = arith.constant dense<0.000000e+00> : vector<2x128xf32>
    %540 = tpu.matmul %539, %15, %cst_133 {dimension_numbers = #tpu.dot_dimension_numbers<[1], [0], [0], [1], [0, 0, 1, 1], [], []>} : vector<2x32xbf16>, vector<32x128xbf16>, vector<2x128xf32> -> vector<2x128xf32>
    %541 = arith.addf %538, %540 : vector<2x128xf32>
    %542 = vector.extract_strided_slice %541 {offsets = [0, 0], sizes = [2, 32], strides = [1, 1]} : vector<2x128xf32> to vector<2x32xf32>
    %543 = arith.negf %542 : vector<2x32xf32>
    %544 = math.exp %543 : vector<2x32xf32>
    %cst_134 = arith.constant 1.000000e+00 : f32
    %545 = vector.broadcast %cst_134 : f32 to vector<2x32xf32>
    %546 = arith.addf %545, %544 : vector<2x32xf32>
    %547 = arith.divf %545, %546 : vector<2x32xf32>
    %548 = vector.extract_strided_slice %541 {offsets = [0, 32], sizes = [2, 32], strides = [1, 1]} : vector<2x128xf32> to vector<2x32xf32>
    %549 = arith.negf %548 : vector<2x32xf32>
    %550 = math.exp %549 : vector<2x32xf32>
    %cst_135 = arith.constant 1.000000e+00 : f32
    %551 = vector.broadcast %cst_135 : f32 to vector<2x32xf32>
    %552 = arith.addf %551, %550 : vector<2x32xf32>
    %553 = arith.divf %551, %552 : vector<2x32xf32>
    %554 = vector.extract_strided_slice %541 {offsets = [0, 64], sizes = [2, 32], strides = [1, 1]} : vector<2x128xf32> to vector<2x32xf32>
    %555 = math.tanh %554 : vector<2x32xf32>
    %556 = vector.extract_strided_slice %541 {offsets = [0, 96], sizes = [2, 32], strides = [1, 1]} : vector<2x128xf32> to vector<2x32xf32>
    %557 = arith.negf %556 : vector<2x32xf32>
    %558 = math.exp %557 : vector<2x32xf32>
    %cst_136 = arith.constant 1.000000e+00 : f32
    %559 = vector.broadcast %cst_136 : f32 to vector<2x32xf32>
    %560 = arith.addf %559, %558 : vector<2x32xf32>
    %561 = arith.divf %559, %560 : vector<2x32xf32>
    %562 = arith.mulf %553, %495 : vector<2x32xf32>
    %563 = arith.mulf %547, %555 : vector<2x32xf32>
    %564 = arith.addf %562, %563 : vector<2x32xf32>
    %565 = math.tanh %564 : vector<2x32xf32>
    %566 = arith.mulf %561, %565 : vector<2x32xf32>
    %567 = arith.index_cast %536 : i32 to index
    %c32_137 = arith.constant 32 : index
    %568 = vector.load %arg8[%567, %c32_137] : memref<16x64xf32, #tpu.memory_space<vmem>>, vector<2x32xf32>
    tpu.vector_store %arg8[%567, %c32_137], %566 {strides = array<i32>} : memref<16x64xf32, #tpu.memory_space<vmem>>, vector<2x32xf32>,
    %c8_i32 = arith.constant 8 : i32
    return
  }
  func.func @transform_0(%arg0: i32) -> (i32, i32) {
    %c0_i32 = arith.constant 0 : i32
    %c0_i32_0 = arith.constant 0 : i32
    %c0_i32_1 = arith.constant 0 : i32
    return %c0_i32, %c0_i32_0 : i32, i32
  }
  func.func @transform_1(%arg0: i32) -> (i32, i32) {
    %c0_i32 = arith.constant 0 : i32
    %c0_i32_0 = arith.constant 0 : i32
    %c0_i32_1 = arith.constant 0 : i32
    return %c0_i32, %c0_i32_0 : i32, i32
  }
  func.func @transform_2(%arg0: i32) -> (i32, i32) {
    %c0_i32 = arith.constant 0 : i32
    %c0_i32_0 = arith.constant 0 : i32
    %c0_i32_1 = arith.constant 0 : i32
    return %c0_i32, %c0_i32_0 : i32, i32
  }
  func.func @transform_3(%arg0: i32) -> (i32, i32) {
    %c0_i32 = arith.constant 0 : i32
    %c0_i32_0 = arith.constant 0 : i32
    %c0_i32_1 = arith.constant 0 : i32
    return %c0_i32, %c0_i32_0 : i32, i32
  }
  func.func @transform_4(%arg0: i32) -> (i32, i32) {
    %c0_i32 = arith.constant 0 : i32
    %c0_i32_0 = arith.constant 0 : i32
    %c0_i32_1 = arith.constant 0 : i32
    return %c0_i32, %c0_i32_0 : i32, i32
  }
  func.func @transform_5(%arg0: i32) -> (i32, i32) {
    %c0_i32 = arith.constant 0 : i32
    %c0_i32_0 = arith.constant 0 : i32
    %c0_i32_1 = arith.constant 0 : i32
    return %c0_i32, %c0_i32_0 : i32, i32
  }
  func.func @transform_6(%arg0: i32) -> (i32, i32) {
    %c0_i32 = arith.constant 0 : i32
    %c0_i32_0 = arith.constant 0 : i32
    %c0_i32_1 = arith.constant 0 : i32
    return %c0_i32, %c0_i32_0 : i32, i32
  }
  func.func @transform_7(%arg0: i32) -> (i32, i32) {
    %c0_i32 = arith.constant 0 : i32
    %c0_i32_0 = arith.constant 0 : i32
    %c0_i32_1 = arith.constant 0 : i32
    return %c0_i32, %c0_i32_0 : i32, i32
  }
}

</mosaic_0001>

<llo_original>
// kernel: lstm_sentence_encoding.2
$region0: #{lstm_sentence_encoding.2}
  #allocation0 [shape = 'u32[]', space=smem, size = 0x4, offset = 0x4, fixed_abs, tag = 'smem constant byte address 0x4 - core index']
  #allocation1 [shape = 'u32[144,128]{1,0:T(1,128)}', space=vmem, size = 0x12000, scoped, tag = 'internal scratch']
  #allocation2 [shape = 'f32[16,128]{1,0:T(8,128)}', space=vmem, size = 0x2000, scoped, tag = 'scratch operand']
  #allocation3 [shape = 'f32[16,128]{1,0:T(8,128)}', space=vmem, size = 0x2000, scoped, tag = 'scratch operand']
  %s0 = inlined_call_operand.vmem [shape: f32[16,32], index: 0, kind: input, shape index: {}]
  %s1 = inlined_call_operand.vmem [shape: bf16[32,128], index: 1, kind: input, shape index: {}]
  %s2 = inlined_call_operand.vmem [shape: bf16[32,128], index: 2, kind: input, shape index: {}]
  %s3 = inlined_call_operand.vmem [shape: f32[1,128], index: 3, kind: input, shape index: {}]
  %s4 = inlined_call_operand.vmem [shape: bf16[32,128], index: 4, kind: input, shape index: {}]
  %s5 = inlined_call_operand.vmem [shape: bf16[32,128], index: 5, kind: input, shape index: {}]
  %s6 = inlined_call_operand.vmem [shape: f32[1,128], index: 6, kind: input, shape index: {}]
  %s7 = inlined_call_operand.vmem [shape: f32[16,64], index: 7, kind: output, shape index: {}]
  %s8 = sld [smem:[#allocation0]]
  $region38: #{lstm_sentence_encoding.2} parent=0
    _
  %s10 = ssub.s32 1, %s8
  %s11 = scalar_select 0, %s10, %s8
  // Predicated region
  $region2: #{lstm_sentence_encoding.2} parent=0 // pred_check
    _
  $region3: #{lstm_sentence_encoding.2} parent=0 // pred_check_branch
    %13 = sbr.rel (0) target = $region5
  $region4: #{lstm_sentence_encoding.2} parent=0 // pred_region
    _
  $region5: #{lstm_sentence_encoding.2} parent=0 // pred_fallthru
    _
  // Predicated region
  $region6: #{lstm_sentence_encoding.2} parent=0 // pred_check
    _
  $region7: #{lstm_sentence_encoding.2} parent=0 // pred_check_branch
    %15 = sbr.rel (0) target = $region9
  $region8: #{lstm_sentence_encoding.2} parent=0 // pred_region
    _
  $region9: #{lstm_sentence_encoding.2} parent=0 // pred_fallthru
    _
  // Predicated region
  $region10: #{lstm_sentence_encoding.2} parent=0 // pred_check
    _
  $region11: #{lstm_sentence_encoding.2} parent=0 // pred_check_branch
    %17 = sbr.rel (0) target = $region13
  $region12: #{lstm_sentence_encoding.2} parent=0 // pred_region
    _
  $region13: #{lstm_sentence_encoding.2} parent=0 // pred_fallthru
    _
  // Predicated region
  $region14: #{lstm_sentence_encoding.2} parent=0 // pred_check
    _
  $region15: #{lstm_sentence_encoding.2} parent=0 // pred_check_branch
    %19 = sbr.rel (0) target = $region17
  $region16: #{lstm_sentence_encoding.2} parent=0 // pred_region
    _
  $region17: #{lstm_sentence_encoding.2} parent=0 // pred_fallthru
    _
  // Predicated region
  $region18: #{lstm_sentence_encoding.2} parent=0 // pred_check
    _
  $region19: #{lstm_sentence_encoding.2} parent=0 // pred_check_branch
    %21 = sbr.rel (0) target = $region21
  $region20: #{lstm_sentence_encoding.2} parent=0 // pred_region
    _
  $region21: #{lstm_sentence_encoding.2} parent=0 // pred_fallthru
    _
  // Predicated region
  $region22: #{lstm_sentence_encoding.2} parent=0 // pred_check
    _
  $region23: #{lstm_sentence_encoding.2} parent=0 // pred_check_branch
    %23 = sbr.rel (0) target = $region25
  $region24: #{lstm_sentence_encoding.2} parent=0 // pred_region
    _
  $region25: #{lstm_sentence_encoding.2} parent=0 // pred_fallthru
    _
  // Predicated region
  $region26: #{lstm_sentence_encoding.2} parent=0 // pred_check
    _
  $region27: #{lstm_sentence_encoding.2} parent=0 // pred_check_branch
    %25 = sbr.rel (0) target = $region29
  $region28: #{lstm_sentence_encoding.2} parent=0 // pred_region
    _
  $region29: #{lstm_sentence_encoding.2} parent=0 // pred_fallthru
    _
  %v27 = vld [vmem:[%s0] sm:$0xff]
  %v28 = vld [vmem:[%s0 + $0x8] sm:$0xff]
  %v29 = vpack.c.bf16 %v28, %v27
  %v30 = vld [vmem:[%s1] sm:$0xf]
  %v31 = vld [vmem:[%s1 + $0x4] sm:$0xf]
  %v32 = vld [vmem:[%s1 + $0x8] sm:$0xf]
  %v33 = vld [vmem:[%s1 + $0xc] sm:$0xf]
  %v34 = vld [vmem:[%s3] sm:$0x1]
  %v36 = vlaneseq
  %v37 = vshrl.u32 %v36, 7
  %v38 = vsub.s32 0, %v37
  %v39 = vrot.slane %v34, %v38
  %v45 = vunpack.c.l.b16 %v30
  %v46 = vunpack.c.l.b16 %v31
  %v47 = vunpack.c.l.b16 %v32
  %v48 = vunpack.c.l.b16 %v33
  %v49 = vpack.c.b16 %v46, %v45
  %v50 = vpack.c.b16 %v48, %v47
  %vm53 = vcmask 261120
  %v55 = vsel %vm53, %v29, 0
  %57 = vmatprep.subr.bf16.mxu0 0
  %58 = vmatpush1.bf16.msra.mxu0 %v49
  %59 = vmatprep.subr.bf16.mxu0 0
  %60 = vmatpush1.bf16.msra.mxu0 %v50
  %61 = vmatprep.subr.bf16.mxu0 0
  %62 = vmatpush1.bf16.msra.mxu0 0
  %63 = vmatprep.subr.bf16.mxu0 0
  %64 = vmatpush1.bf16.msra.mxu0 0
  %65 = vmatprep.subr.bf16.mxu0 0
  %66 = vmatpush1.bf16.msra.mxu0 0
  %67 = vmatprep.subr.bf16.mxu0 0
  %68 = vmatpush1.bf16.msra.mxu0 0
  %69 = vmatprep.subr.bf16.mxu0 0
  %70 = vmatpush1.bf16.msra.mxu0 0
  %71 = vmatprep.subr.bf16.mxu0 0
  %72 = vmatpush1.bf16.msra.mxu0 0
  %73 = vmatprep.subr.bf16.mxu0 0
  %74 = vmatpush1.bf16.msra.mxu0 0
  %75 = vmatprep.subr.bf16.mxu0 0
  %76 = vmatpush1.bf16.msra.mxu0 0
  %77 = vmatprep.subr.bf16.mxu0 0
  %78 = vmatpush1.bf16.msra.mxu0 0
  %79 = vmatprep.subr.bf16.mxu0 0
  %80 = vmatpush1.bf16.msra.mxu0 0
  %81 = vmatprep.subr.bf16.mxu0 0
  %82 = vmatpush1.bf16.msra.mxu0 0
  %83 = vmatprep.subr.bf16.mxu0 0
  %84 = vmatpush1.bf16.msra.mxu0 0
  %85 = vmatprep.subr.bf16.mxu0 0
  %86 = vmatpush1.bf16.msra.mxu0 0
  %87 = vmatprep.subr.bf16.mxu0 0
  %88 = vmatpush1.bf16.msra.mxu0 0
  %89 = vmatprep.mubr.bf16.mxu0 0
  %90 = vmatmul.mubr.bf16.gmra.mrb[0].mxu0 %v55
  %v91 = vpop.f32.mrb[0].mxu0
  %v92 = vadd.f32 %v39, %v91
  %v93 = vpop.f32.mrb[0].mxu0
  %v94 = vpop.f32.mrb[0].mxu0
  %v95 = vadd.f32 %v39, %v94
  %v96 = vpop.f32.mrb[0].mxu0
  %97 = vdwg.mxu0
  %98 = vst [vmem:[#allocation2] sm:$0xff] %v92
  %99 = vst [vmem:[#allocation2 + $0x8] sm:$0xff] %v95
  %v100 = vld [vmem:[%s4] sm:$0xf]
  %v101 = vld [vmem:[%s4 + $0x4] sm:$0xf]
  %v102 = vld [vmem:[%s4 + $0x8] sm:$0xf]
  %v103 = vld [vmem:[%s4 + $0xc] sm:$0xf]
  %v104 = vld [vmem:[%s6] sm:$0x1]
  %v106 = vlaneseq
  %v107 = vshrl.u32 %v106, 7
  %v108 = vsub.s32 0, %v107
  %v109 = vrot.slane %v104, %v108
  %v115 = vunpack.c.l.b16 %v100
  %v116 = vunpack.c.l.b16 %v101
  %v117 = vunpack.c.l.b16 %v102
  %v118 = vunpack.c.l.b16 %v103
  %v119 = vpack.c.b16 %v116, %v115
  %v120 = vpack.c.b16 %v118, %v117
  %123 = vmatprep.subr.bf16.mxu0 0
  %124 = vmatpush1.bf16.msra.mxu0 %v119
  %125 = vmatprep.subr.bf16.mxu0 0
  %126 = vmatpush1.bf16.msra.mxu0 %v120
  %127 = vmatprep.subr.bf16.mxu0 0
  %128 = vmatpush1.bf16.msra.mxu0 0
  %129 = vmatprep.subr.bf16.mxu0 0
  %130 = vmatpush1.bf16.msra.mxu0 0
  %131 = vmatprep.subr.bf16.mxu0 0
  %132 = vmatpush1.bf16.msra.mxu0 0
  %133 = vmatprep.subr.bf16.mxu0 0
  %134 = vmatpush1.bf16.msra.mxu0 0
  %135 = vmatprep.subr.bf16.mxu0 0
  %136 = vmatpush1.bf16.msra.mxu0 0
  %137 = vmatprep.subr.bf16.mxu0 0
  %138 = vmatpush1.bf16.msra.mxu0 0
  %139 = vmatprep.subr.bf16.mxu0 0
  %140 = vmatpush1.bf16.msra.mxu0 0
  %141 = vmatprep.subr.bf16.mxu0 0
  %142 = vmatpush1.bf16.msra.mxu0 0
  %143 = vmatprep.subr.bf16.mxu0 0
  %144 = vmatpush1.bf16.msra.mxu0 0
  %145 = vmatprep.subr.bf16.mxu0 0
  %146 = vmatpush1.bf16.msra.mxu0 0
  %147 = vmatprep.subr.bf16.mxu0 0
  %148 = vmatpush1.bf16.msra.mxu0 0
  %149 = vmatprep.subr.bf16.mxu0 0
  %150 = vmatpush1.bf16.msra.mxu0 0
  %151 = vmatprep.subr.bf16.mxu0 0
  %152 = vmatpush1.bf16.msra.mxu0 0
  %153 = vmatprep.subr.bf16.mxu0 0
  %154 = vmatpush1.bf16.msra.mxu0 0
  %155 = vmatprep.mubr.bf16.mxu0 0
  %156 = vmatmul.mubr.bf16.gmra.mrb[0].mxu0 %v55
  %v157 = vpop.f32.mrb[0].mxu0
  %v158 = vadd.f32 %v109, %v157
  %v159 = vpop.f32.mrb[0].mxu0
  %v160 = vpop.f32.mrb[0].mxu0
  %v161 = vadd.f32 %v109, %v160
  %v162 = vpop.f32.mrb[0].mxu0
  %163 = vdwg.mxu0
  %164 = vst [vmem:[#allocation3] sm:$0xff] %v158
  %165 = vst [vmem:[#allocation3 + $0x8] sm:$0xff] %v161
  %v166 = vld [vmem:[%s2] sm:$0xf]
  %v167 = vld [vmem:[%s2 + $0x4] sm:$0xf]
  %v168 = vld [vmem:[%s2 + $0x8] sm:$0xf]
  %v169 = vld [vmem:[%s2 + $0xc] sm:$0xf]
  %v170 = vld [vmem:[%s5] sm:$0xf]
  %v171 = vld [vmem:[%s5 + $0x4] sm:$0xf]
  %v172 = vld [vmem:[%s5 + $0x8] sm:$0xf]
  %v173 = vld [vmem:[%s5 + $0xc] sm:$0xf]
  %v174 = vld [vmem:[#allocation2] sm:$0x3]
  %v179 = vunpack.c.l.b16 %v166
  %v180 = vunpack.c.l.b16 %v167
  %v181 = vunpack.c.l.b16 %v168
  %v182 = vunpack.c.l.b16 %v169
  %v183 = vpack.c.b16 %v180, %v179
  %v184 = vpack.c.b16 %v182, %v181
  %v188 = vsel %vm53, 0, 0
  %190 = vmatprep.subr.bf16.mxu0 0
  %191 = vmatpush1.bf16.msra.mxu0 %v183
  %192 = vmatprep.subr.bf16.mxu0 0
  %193 = vmatpush1.bf16.msra.mxu0 %v184
  %194 = vmatprep.subr.bf16.mxu0 0
  %195 = vmatpush1.bf16.msra.mxu0 0
  %196 = vmatprep.subr.bf16.mxu0 0
  %197 = vmatpush1.bf16.msra.mxu0 0
  %198 = vmatprep.subr.bf16.mxu0 0
  %199 = vmatpush1.bf16.msra.mxu0 0
  %200 = vmatprep.subr.bf16.mxu0 0
  %201 = vmatpush1.bf16.msra.mxu0 0
  %202 = vmatprep.subr.bf16.mxu0 0
  %203 = vmatpush1.bf16.msra.mxu0 0
  %204 = vmatprep.subr.bf16.mxu0 0
  %205 = vmatpush1.bf16.msra.mxu0 0
  %206 = vmatprep.subr.bf16.mxu0 0
  %207 = vmatpush1.bf16.msra.mxu0 0
  %208 = vmatprep.subr.bf16.mxu0 0
  %209 = vmatpush1.bf16.msra.mxu0 0
  %210 = vmatprep.subr.bf16.mxu0 0
  %211 = vmatpush1.bf16.msra.mxu0 0
  %212 = vmatprep.subr.bf16.mxu0 0
  %213 = vmatpush1.bf16.msra.mxu0 0
  %214 = vmatprep.subr.bf16.mxu0 0
  %215 = vmatpush1.bf16.msra.mxu0 0
  %216 = vmatprep.subr.bf16.mxu0 0
  %217 = vmatpush1.bf16.msra.mxu0 0
  %218 = vmatprep.subr.bf16.mxu0 0
  %219 = vmatpush1.bf16.msra.mxu0 0
  %220 = vmatprep.subr.bf16.mxu0 0
  %221 = vmatpush1.bf16.msra.mxu0 0
  %222 = vmatprep.mubr.bf16.mxu0 0
  %223 = vmatmul.mubr.bf16.gmra.mrb[0].mxu0 %v188
  %v224 = vpop.f32.mrb[0].mxu0
  %v225 = vadd.f32 0.0, %v224
  %v226 = vpop.f32.mrb[0].mxu0
  %v227 = vpop.f32.mrb[0].mxu0
  %v228 = vpop.f32.mrb[0].mxu0
  %229 = vdwg.mxu0
  %v230 = vadd.f32 %v174, %v225
  %v231 = vxor.u32 %v230, 2147483648
  %v232 = vmul.f32 %v231, 1.442695
  %v233 = vpow.pop %v232
  %v234 = vadd.f32 %v233, 1.0
  %v235 = vrcp.pop %v234
  %v236 = vmul.f32 1.0, %v235
  %v237 = vtanh.pop %v230
  %v238 = vmul.f32 %v236, 0.0
  %240 = vrot.lane.b32.xlu0 %v237, 64
  %v241 = vpop.permute.xlu0 %240
  %v243 = vmul.f32 %v236, %v241
  %245 = vrot.lane.b32.xlu0 %v243, 32
  %v246 = vpop.permute.xlu0 %245
  %v248 = vadd.f32 %v238, %v246
  %v249 = vtanh.pop %v248
  %251 = vrot.lane.b32.xlu0 %v249, 64
  %v252 = vpop.permute.xlu0 %251
  %v254 = vmul.f32 %v236, %v252
  %256 = vrot.lane.b32.xlu0 %v254, 32
  %v257 = vpop.permute.xlu0 %256
  %vm259 = vcmask 254976
  %260 = vst.msk [vmem:[%s7] sm:$0x3] %vm259, %v257
  %s261 = scalar_lea.vmem [#allocation3], 14
  %v262 = vld [vmem:[%s261] sm:$0x3]
  %v267 = vunpack.c.l.b16 %v170
  %v268 = vunpack.c.l.b16 %v171
  %v269 = vunpack.c.l.b16 %v172
  %v270 = vunpack.c.l.b16 %v173
  %v271 = vpack.c.b16 %v268, %v267
  %v272 = vpack.c.b16 %v270, %v269
  %275 = vmatprep.subr.bf16.mxu0 0
  %276 = vmatpush1.bf16.msra.mxu0 %v271
  %277 = vmatprep.subr.bf16.mxu0 0
  %278 = vmatpush1.bf16.msra.mxu0 %v272
  %279 = vmatprep.subr.bf16.mxu0 0
  %280 = vmatpush1.bf16.msra.mxu0 0
  %281 = vmatprep.subr.bf16.mxu0 0
  %282 = vmatpush1.bf16.msra.mxu0 0
  %283 = vmatprep.subr.bf16.mxu0 0
  %284 = vmatpush1.bf16.msra.mxu0 0
  %285 = vmatprep.subr.bf16.mxu0 0
  %286 = vmatpush1.bf16.msra.mxu0 0
  %287 = vmatprep.subr.bf16.mxu0 0
  %288 = vmatpush1.bf16.msra.mxu0 0
  %289 = vmatprep.subr.bf16.mxu0 0
  %290 = vmatpush1.bf16.msra.mxu0 0
  %291 = vmatprep.subr.bf16.mxu0 0
  %292 = vmatpush1.bf16.msra.mxu0 0
  %293 = vmatprep.subr.bf16.mxu0 0
  %294 = vmatpush1.bf16.msra.mxu0 0
  %295 = vmatprep.subr.bf16.mxu0 0
  %296 = vmatpush1.bf16.msra.mxu0 0
  %297 = vmatprep.subr.bf16.mxu0 0
  %298 = vmatpush1.bf16.msra.mxu0 0
  %299 = vmatprep.subr.bf16.mxu0 0
  %300 = vmatpush1.bf16.msra.mxu0 0
  %301 = vmatprep.subr.bf16.mxu0 0
  %302 = vmatpush1.bf16.msra.mxu0 0
  %303 = vmatprep.subr.bf16.mxu0 0
  %304 = vmatpush1.bf16.msra.mxu0 0
  %305 = vmatprep.subr.bf16.mxu0 0
  %306 = vmatpush1.bf16.msra.mxu0 0
  %307 = vmatprep.mubr.bf16.mxu0 0
  %308 = vmatmul.mubr.bf16.gmra.mrb[0].mxu0 %v188
  %v309 = vpop.f32.mrb[0].mxu0
  %v310 = vadd.f32 0.0, %v309
  %v311 = vpop.f32.mrb[0].mxu0
  %v312 = vpop.f32.mrb[0].mxu0
  %v313 = vpop.f32.mrb[0].mxu0
  %314 = vdwg.mxu0
  %v315 = vadd.f32 %v262, %v310
  %v316 = vxor.u32 %v315, 2147483648
  %v317 = vmul.f32 %v316, 1.442695
  %v318 = vpow.pop %v317
  %v319 = vadd.f32 %v318, 1.0
  %v320 = vrcp.pop %v319
  %v321 = vmul.f32 1.0, %v320
  %v322 = vtanh.pop %v315
  %v323 = vmul.f32 %v321, 0.0
  %325 = vrot.lane.b32.xlu0 %v322, 64
  %v326 = vpop.permute.xlu0 %325
  %v328 = vmul.f32 %v321, %v326
  %330 = vrot.lane.b32.xlu0 %v328, 32
  %v331 = vpop.permute.xlu0 %330
  %v333 = vadd.f32 %v323, %v331
  %v334 = vtanh.pop %v333
  %336 = vrot.lane.b32.xlu0 %v334, 64
  %v337 = vpop.permute.xlu0 %336
  %v339 = vmul.f32 %v321, %v337
  %341 = vrot.lane.b32.xlu0 %v339, 64
  %v342 = vpop.permute.xlu0 %341
  %s344 = scalar_lea.vmem %s7, 14
  %vm345 = vcmask 517376
  %346 = vst.msk [vmem:[%s344] sm:$0x3] %vm345, %v342
  %s347 = scalar_lea.vmem [#allocation2], 2
  %v348 = vld [vmem:[%s347] sm:$0x3]
  %v349 = vpack.c.bf16 %v254, %v254
  %351 = vrot.lane.b32.xlu0 %v349, 32
  %v352 = vpop.permute.xlu0 %351
  %v354 = vsel %vm53, %v352, 0
  %356 = vmatprep.subr.bf16.mxu0 0
  %357 = vmatpush1.bf16.msra.mxu0 %v183
  %358 = vmatprep.subr.bf16.mxu0 0
  %359 = vmatpush1.bf16.msra.mxu0 %v184
  %360 = vmatprep.subr.bf16.mxu0 0
  %361 = vmatpush1.bf16.msra.mxu0 0
  %362 = vmatprep.subr.bf16.mxu0 0
  %363 = vmatpush1.bf16.msra.mxu0 0
  %364 = vmatprep.subr.bf16.mxu0 0
  %365 = vmatpush1.bf16.msra.mxu0 0
  %366 = vmatprep.subr.bf16.mxu0 0
  %367 = vmatpush1.bf16.msra.mxu0 0
  %368 = vmatprep.subr.bf16.mxu0 0
  %369 = vmatpush1.bf16.msra.mxu0 0
  %370 = vmatprep.subr.bf16.mxu0 0
  %371 = vmatpush1.bf16.msra.mxu0 0
  %372 = vmatprep.subr.bf16.mxu0 0
  %373 = vmatpush1.bf16.msra.mxu0 0
  %374 = vmatprep.subr.bf16.mxu0 0
  %375 = vmatpush1.bf16.msra.mxu0 0
  %376 = vmatprep.subr.bf16.mxu0 0
  %377 = vmatpush1.bf16.msra.mxu0 0
  %378 = vmatprep.subr.bf16.mxu0 0
  %379 = vmatpush1.bf16.msra.mxu0 0
  %380 = vmatprep.subr.bf16.mxu0 0
  %381 = vmatpush1.bf16.msra.mxu0 0
  %382 = vmatprep.subr.bf16.mxu0 0
  %383 = vmatpush1.bf16.msra.mxu0 0
  %384 = vmatprep.subr.bf16.mxu0 0
  %385 = vmatpush1.bf16.msra.mxu0 0
  %386 = vmatprep.subr.bf16.mxu0 0
  %387 = vmatpush1.bf16.msra.mxu0 0
  %388 = vmatprep.mubr.bf16.mxu0 0
  %389 = vmatmul.mubr.bf16.gmra.mrb[0].mxu0 %v354
  %v390 = vpop.f32.mrb[0].mxu0
  %v391 = vadd.f32 0.0, %v390
  %v392 = vpop.f32.mrb[0].mxu0
  %v393 = vpop.f32.mrb[0].mxu0
  %v394 = vpop.f32.mrb[0].mxu0
  %395 = vdwg.mxu0
  %v396 = vadd.f32 %v348, %v391
  %v397 = vxor.u32 %v396, 2147483648
  %v398 = vmul.f32 %v397, 1.442695
  %v399 = vpow.pop %v398
  %v400 = vadd.f32 %v399, 1.0
  %v401 = vrcp.pop %v400
  %v402 = vmul.f32 1.0, %v401
  %v403 = vtanh.pop %v396
  %v404 = vmul.f32 %v402, %v248
  %406 = vrot.lane.b32.xlu0 %v403, 64
  %v407 = vpop.permute.xlu0 %406
  %v409 = vmul.f32 %v402, %v407
  %411 = vrot.lane.b32.xlu0 %v409, 32
  %v412 = vpop.permute.xlu0 %411
  %v414 = vadd.f32 %v404, %v412
  %v415 = vtanh.pop %v414
  %417 = vrot.lane.b32.xlu0 %v415, 64
  %v418 = vpop.permute.xlu0 %417
  %v420 = vmul.f32 %v402, %v418
  %422 = vrot.lane.b32.xlu0 %v420, 32
  %v423 = vpop.permute.xlu0 %422
  %s425 = scalar_lea.vmem %s7, 2
  %426 = vst.msk [vmem:[%s425] sm:$0x3] %vm259, %v423
  %s427 = scalar_lea.vmem [#allocation3], 12
  %v428 = vld [vmem:[%s427] sm:$0x3]
  %v429 = vpack.c.bf16 %v339, %v339
  %431 = vrot.lane.b32.xlu0 %v429, 32
  %v432 = vpop.permute.xlu0 %431
  %v434 = vsel %vm53, %v432, 0
  %436 = vmatprep.subr.bf16.mxu0 0
  %437 = vmatpush1.bf16.msra.mxu0 %v271
  %438 = vmatprep.subr.bf16.mxu0 0
  %439 = vmatpush1.bf16.msra.mxu0 %v272
  %440 = vmatprep.subr.bf16.mxu0 0
  %441 = vmatpush1.bf16.msra.mxu0 0
  %442 = vmatprep.subr.bf16.mxu0 0
  %443 = vmatpush1.bf16.msra.mxu0 0
  %444 = vmatprep.subr.bf16.mxu0 0
  %445 = vmatpush1.bf16.msra.mxu0 0
  %446 = vmatprep.subr.bf16.mxu0 0
  %447 = vmatpush1.bf16.msra.mxu0 0
  %448 = vmatprep.subr.bf16.mxu0 0
  %449 = vmatpush1.bf16.msra.mxu0 0
  %450 = vmatprep.subr.bf16.mxu0 0
  %451 = vmatpush1.bf16.msra.mxu0 0
  %452 = vmatprep.subr.bf16.mxu0 0
  %453 = vmatpush1.bf16.msra.mxu0 0
  %454 = vmatprep.subr.bf16.mxu0 0
  %455 = vmatpush1.bf16.msra.mxu0 0
  %456 = vmatprep.subr.bf16.mxu0 0
  %457 = vmatpush1.bf16.msra.mxu0 0
  %458 = vmatprep.subr.bf16.mxu0 0
  %459 = vmatpush1.bf16.msra.mxu0 0
  %460 = vmatprep.subr.bf16.mxu0 0
  %461 = vmatpush1.bf16.msra.mxu0 0
  %462 = vmatprep.subr.bf16.mxu0 0
  %463 = vmatpush1.bf16.msra.mxu0 0
  %464 = vmatprep.subr.bf16.mxu0 0
  %465 = vmatpush1.bf16.msra.mxu0 0
  %466 = vmatprep.subr.bf16.mxu0 0
  %467 = vmatpush1.bf16.msra.mxu0 0
  %468 = vmatprep.mubr.bf16.mxu0 0
  %469 = vmatmul.mubr.bf16.gmra.mrb[0].mxu0 %v434
  %v470 = vpop.f32.mrb[0].mxu0
  %v471 = vadd.f32 0.0, %v470
  %v472 = vpop.f32.mrb[0].mxu0
  %v473 = vpop.f32.mrb[0].mxu0
  %v474 = vpop.f32.mrb[0].mxu0
  %475 = vdwg.mxu0
  %v476 = vadd.f32 %v428, %v471
  %v477 = vxor.u32 %v476, 2147483648
  %v478 = vmul.f32 %v477, 1.442695
  %v479 = vpow.pop %v478
  %v480 = vadd.f32 %v479, 1.0
  %v481 = vrcp.pop %v480
  %v482 = vmul.f32 1.0, %v481
  %v483 = vtanh.pop %v476
  %v484 = vmul.f32 %v482, %v333
  %486 = vrot.lane.b32.xlu0 %v483, 64
  %v487 = vpop.permute.xlu0 %486
  %v489 = vmul.f32 %v482, %v487
  %491 = vrot.lane.b32.xlu0 %v489, 32
  %v492 = vpop.permute.xlu0 %491
  %v494 = vadd.f32 %v484, %v492
  %v495 = vtanh.pop %v494
  %497 = vrot.lane.b32.xlu0 %v495, 64
  %v498 = vpop.permute.xlu0 %497
  %v500 = vmul.f32 %v482, %v498
  %502 = vrot.lane.b32.xlu0 %v500, 64
  %v503 = vpop.permute.xlu0 %502
  %s505 = scalar_lea.vmem %s7, 12
  %506 = vst.msk [vmem:[%s505] sm:$0x3] %vm345, %v503
  %s507 = scalar_lea.vmem [#allocation2], 4
  %v508 = vld [vmem:[%s507] sm:$0x3]
  %v509 = vpack.c.bf16 %v420, %v420
  %511 = vrot.lane.b32.xlu0 %v509, 32
  %v512 = vpop.permute.xlu0 %511
  %v514 = vsel %vm53, %v512, 0
  %516 = vmatprep.subr.bf16.mxu0 0
  %517 = vmatpush1.bf16.msra.mxu0 %v183
  %518 = vmatprep.subr.bf16.mxu0 0
  %519 = vmatpush1.bf16.msra.mxu0 %v184
  %520 = vmatprep.subr.bf16.mxu0 0
  %521 = vmatpush1.bf16.msra.mxu0 0
  %522 = vmatprep.subr.bf16.mxu0 0
  %523 = vmatpush1.bf16.msra.mxu0 0
  %524 = vmatprep.subr.bf16.mxu0 0
  %525 = vmatpush1.bf16.msra.mxu0 0
  %526 = vmatprep.subr.bf16.mxu0 0
  %527 = vmatpush1.bf16.msra.mxu0 0
  %528 = vmatprep.subr.bf16.mxu0 0
  %529 = vmatpush1.bf16.msra.mxu0 0
  %530 = vmatprep.subr.bf16.mxu0 0
  %531 = vmatpush1.bf16.msra.mxu0 0
  %532 = vmatprep.subr.bf16.mxu0 0
  %533 = vmatpush1.bf16.msra.mxu0 0
  %534 = vmatprep.subr.bf16.mxu0 0
  %535 = vmatpush1.bf16.msra.mxu0 0
  %536 = vmatprep.subr.bf16.mxu0 0
  %537 = vmatpush1.bf16.msra.mxu0 0
  %538 = vmatprep.subr.bf16.mxu0 0
  %539 = vmatpush1.bf16.msra.mxu0 0
  %540 = vmatprep.subr.bf16.mxu0 0
  %541 = vmatpush1.bf16.msra.mxu0 0
  %542 = vmatprep.subr.bf16.mxu0 0
  %543 = vmatpush1.bf16.msra.mxu0 0
  %544 = vmatprep.subr.bf16.mxu0 0
  %545 = vmatpush1.bf16.msra.mxu0 0
  %546 = vmatprep.subr.bf16.mxu0 0
  %547 = vmatpush1.bf16.msra.mxu0 0
  %548 = vmatprep.mubr.bf16.mxu0 0
  %549 = vmatmul.mubr.bf16.gmra.mrb[0].mxu0 %v514
  %v550 = vpop.f32.mrb[0].mxu0
  %v551 = vadd.f32 0.0, %v550
  %v552 = vpop.f32.mrb[0].mxu0
  %v553 = vpop.f32.mrb[0].mxu0
  %v554 = vpop.f32.mrb[0].mxu0
  %555 = vdwg.mxu0
  %v556 = vadd.f32 %v508, %v551
  %v557 = vxor.u32 %v556, 2147483648
  %v558 = vmul.f32 %v557, 1.442695
  %v559 = vpow.pop %v558
  %v560 = vadd.f32 %v559, 1.0
  %v561 = vrcp.pop %v560
  %v562 = vmul.f32 1.0, %v561
  %v563 = vtanh.pop %v556
  %v564 = vmul.f32 %v562, %v414
  %566 = vrot.lane.b32.xlu0 %v563, 64
  %v567 = vpop.permute.xlu0 %566
  %v569 = vmul.f32 %v562, %v567
  %571 = vrot.lane.b32.xlu0 %v569, 32
  %v572 = vpop.permute.xlu0 %571
  %v574 = vadd.f32 %v564, %v572
  %v575 = vtanh.pop %v574
  %577 = vrot.lane.b32.xlu0 %v575, 64
  %v578 = vpop.permute.xlu0 %577
  %v580 = vmul.f32 %v562, %v578
  %582 = vrot.lane.b32.xlu0 %v580, 32
  %v583 = vpop.permute.xlu0 %582
  %s585 = scalar_lea.vmem %s7, 4
  %586 = vst.msk [vmem:[%s585] sm:$0x3] %vm259, %v583
  %s587 = scalar_lea.vmem [#allocation3], 10
  %v588 = vld [vmem:[%s587] sm:$0x3]
  %v589 = vpack.c.bf16 %v500, %v500
  %591 = vrot.lane.b32.xlu0 %v589, 32
  %v592 = vpop.permute.xlu0 %591
  %v594 = vsel %vm53, %v592, 0
  %596 = vmatprep.subr.bf16.mxu0 0
  %597 = vmatpush1.bf16.msra.mxu0 %v271
  %598 = vmatprep.subr.bf16.mxu0 0
  %599 = vmatpush1.bf16.msra.mxu0 %v272
  %600 = vmatprep.subr.bf16.mxu0 0
  %601 = vmatpush1.bf16.msra.mxu0 0
  %602 = vmatprep.subr.bf16.mxu0 0
  %603 = vmatpush1.bf16.msra.mxu0 0
  %604 = vmatprep.subr.bf16.mxu0 0
  %605 = vmatpush1.bf16.msra.mxu0 0
  %606 = vmatprep.subr.bf16.mxu0 0
  %607 = vmatpush1.bf16.msra.mxu0 0
  %608 = vmatprep.subr.bf16.mxu0 0
  %609 = vmatpush1.bf16.msra.mxu0 0
  %610 = vmatprep.subr.bf16.mxu0 0
  %611 = vmatpush1.bf16.msra.mxu0 0
  %612 = vmatprep.subr.bf16.mxu0 0
  %613 = vmatpush1.bf16.msra.mxu0 0
  %614 = vmatprep.subr.bf16.mxu0 0
  %615 = vmatpush1.bf16.msra.mxu0 0
  %616 = vmatprep.subr.bf16.mxu0 0
  %617 = vmatpush1.bf16.msra.mxu0 0
  %618 = vmatprep.subr.bf16.mxu0 0
  %619 = vmatpush1.bf16.msra.mxu0 0
  %620 = vmatprep.subr.bf16.mxu0 0
  %621 = vmatpush1.bf16.msra.mxu0 0
  %622 = vmatprep.subr.bf16.mxu0 0
  %623 = vmatpush1.bf16.msra.mxu0 0
  %624 = vmatprep.subr.bf16.mxu0 0
  %625 = vmatpush1.bf16.msra.mxu0 0
  %626 = vmatprep.subr.bf16.mxu0 0
  %627 = vmatpush1.bf16.msra.mxu0 0
  %628 = vmatprep.mubr.bf16.mxu0 0
  %629 = vmatmul.mubr.bf16.gmra.mrb[0].mxu0 %v594
  %v630 = vpop.f32.mrb[0].mxu0
  %v631 = vadd.f32 0.0, %v630
  %v632 = vpop.f32.mrb[0].mxu0
  %v633 = vpop.f32.mrb[0].mxu0
  %v634 = vpop.f32.mrb[0].mxu0
  %635 = vdwg.mxu0
  %v636 = vadd.f32 %v588, %v631
  %v637 = vxor.u32 %v636, 2147483648
  %v638 = vmul.f32 %v637, 1.442695
  %v639 = vpow.pop %v638
  %v640 = vadd.f32 %v639, 1.0
  %v641 = vrcp.pop %v640
  %v642 = vmul.f32 1.0, %v641
  %v643 = vtanh.pop %v636
  %v644 = vmul.f32 %v642, %v494
  %646 = vrot.lane.b32.xlu0 %v643, 64
  %v647 = vpop.permute.xlu0 %646
  %v649 = vmul.f32 %v642, %v647
  %651 = vrot.lane.b32.xlu0 %v649, 32
  %v652 = vpop.permute.xlu0 %651
  %v654 = vadd.f32 %v644, %v652
  %v655 = vtanh.pop %v654
  %657 = vrot.lane.b32.xlu0 %v655, 64
  %v658 = vpop.permute.xlu0 %657
  %v660 = vmul.f32 %v642, %v658
  %662 = vrot.lane.b32.xlu0 %v660, 64
  %v663 = vpop.permute.xlu0 %662
  %s665 = scalar_lea.vmem %s7, 10
  %666 = vst.msk [vmem:[%s665] sm:$0x3] %vm345, %v663
  %s667 = scalar_lea.vmem [#allocation2], 6
  %v668 = vld [vmem:[%s667] sm:$0x3]
  %v669 = vpack.c.bf16 %v580, %v580
  %671 = vrot.lane.b32.xlu0 %v669, 32
  %v672 = vpop.permute.xlu0 %671
  %v674 = vsel %vm53, %v672, 0
  %676 = vmatprep.subr.bf16.mxu0 0
  %677 = vmatpush1.bf16.msra.mxu0 %v183
  %678 = vmatprep.subr.bf16.mxu0 0
  %679 = vmatpush1.bf16.msra.mxu0 %v184
  %680 = vmatprep.subr.bf16.mxu0 0
  %681 = vmatpush1.bf16.msra.mxu0 0
  %682 = vmatprep.subr.bf16.mxu0 0
  %683 = vmatpush1.bf16.msra.mxu0 0
  %684 = vmatprep.subr.bf16.mxu0 0
  %685 = vmatpush1.bf16.msra.mxu0 0
  %686 = vmatprep.subr.bf16.mxu0 0
  %687 = vmatpush1.bf16.msra.mxu0 0
  %688 = vmatprep.subr.bf16.mxu0 0
  %689 = vmatpush1.bf16.msra.mxu0 0
  %690 = vmatprep.subr.bf16.mxu0 0
  %691 = vmatpush1.bf16.msra.mxu0 0
  %692 = vmatprep.subr.bf16.mxu0 0
  %693 = vmatpush1.bf16.msra.mxu0 0
  %694 = vmatprep.subr.bf16.mxu0 0
  %695 = vmatpush1.bf16.msra.mxu0 0
  %696 = vmatprep.subr.bf16.mxu0 0
  %697 = vmatpush1.bf16.msra.mxu0 0
  %698 = vmatprep.subr.bf16.mxu0 0
  %699 = vmatpush1.bf16.msra.mxu0 0
  %700 = vmatprep.subr.bf16.mxu0 0
  %701 = vmatpush1.bf16.msra.mxu0 0
  %702 = vmatprep.subr.bf16.mxu0 0
  %703 = vmatpush1.bf16.msra.mxu0 0
  %704 = vmatprep.subr.bf16.mxu0 0
  %705 = vmatpush1.bf16.msra.mxu0 0
  %706 = vmatprep.subr.bf16.mxu0 0
  %707 = vmatpush1.bf16.msra.mxu0 0
  %708 = vmatprep.mubr.bf16.mxu0 0
  %709 = vmatmul.mubr.bf16.gmra.mrb[0].mxu0 %v674
  %v710 = vpop.f32.mrb[0].mxu0
  %v711 = vadd.f32 0.0, %v710
  %v712 = vpop.f32.mrb[0].mxu0
  %v713 = vpop.f32.mrb[0].mxu0
  %v714 = vpop.f32.mrb[0].mxu0
  %715 = vdwg.mxu0
  %v716 = vadd.f32 %v668, %v711
  %v717 = vxor.u32 %v716, 2147483648
  %v718 = vmul.f32 %v717, 1.442695
  %v719 = vpow.pop %v718
  %v720 = vadd.f32 %v719, 1.0
  %v721 = vrcp.pop %v720
  %v722 = vmul.f32 1.0, %v721
  %v723 = vtanh.pop %v716
  %v724 = vmul.f32 %v722, %v574
  %726 = vrot.lane.b32.xlu0 %v723, 64
  %v727 = vpop.permute.xlu0 %726
  %v729 = vmul.f32 %v722, %v727
  %731 = vrot.lane.b32.xlu0 %v729, 32
  %v732 = vpop.permute.xlu0 %731
  %v734 = vadd.f32 %v724, %v732
  %v735 = vtanh.pop %v734
  %737 = vrot.lane.b32.xlu0 %v735, 64
  %v738 = vpop.permute.xlu0 %737
  %v740 = vmul.f32 %v722, %v738
  %742 = vrot.lane.b32.xlu0 %v740, 32
  %v743 = vpop.permute.xlu0 %742
  %s745 = scalar_lea.vmem %s7, 6
  %746 = vst.msk [vmem:[%s745] sm:$0x3] %vm259, %v743
  %s747 = scalar_lea.vmem [#allocation3], 8
  %v748 = vld [vmem:[%s747] sm:$0x3]
  %v749 = vpack.c.bf16 %v660, %v660
  %751 = vrot.lane.b32.xlu0 %v749, 32
  %v752 = vpop.permute.xlu0 %751
  %v754 = vsel %vm53, %v752, 0
  %756 = vmatprep.subr.bf16.mxu0 0
  %757 = vmatpush1.bf16.msra.mxu0 %v271
  %758 = vmatprep.subr.bf16.mxu0 0
  %759 = vmatpush1.bf16.msra.mxu0 %v272
  %760 = vmatprep.subr.bf16.mxu0 0
  %761 = vmatpush1.bf16.msra.mxu0 0
  %762 = vmatprep.subr.bf16.mxu0 0
  %763 = vmatpush1.bf16.msra.mxu0 0
  %764 = vmatprep.subr.bf16.mxu0 0
  %765 = vmatpush1.bf16.msra.mxu0 0
  %766 = vmatprep.subr.bf16.mxu0 0
  %767 = vmatpush1.bf16.msra.mxu0 0
  %768 = vmatprep.subr.bf16.mxu0 0
  %769 = vmatpush1.bf16.msra.mxu0 0
  %770 = vmatprep.subr.bf16.mxu0 0
  %771 = vmatpush1.bf16.msra.mxu0 0
  %772 = vmatprep.subr.bf16.mxu0 0
  %773 = vmatpush1.bf16.msra.mxu0 0
  %774 = vmatprep.subr.bf16.mxu0 0
  %775 = vmatpush1.bf16.msra.mxu0 0
  %776 = vmatprep.subr.bf16.mxu0 0
  %777 = vmatpush1.bf16.msra.mxu0 0
  %778 = vmatprep.subr.bf16.mxu0 0
  %779 = vmatpush1.bf16.msra.mxu0 0
  %780 = vmatprep.subr.bf16.mxu0 0
  %781 = vmatpush1.bf16.msra.mxu0 0
  %782 = vmatprep.subr.bf16.mxu0 0
  %783 = vmatpush1.bf16.msra.mxu0 0
  %784 = vmatprep.subr.bf16.mxu0 0
  %785 = vmatpush1.bf16.msra.mxu0 0
  %786 = vmatprep.subr.bf16.mxu0 0
  %787 = vmatpush1.bf16.msra.mxu0 0
  %788 = vmatprep.mubr.bf16.mxu0 0
  %789 = vmatmul.mubr.bf16.gmra.mrb[0].mxu0 %v754
  %v790 = vpop.f32.mrb[0].mxu0
  %v791 = vadd.f32 0.0, %v790
  %v792 = vpop.f32.mrb[0].mxu0
  %v793 = vpop.f32.mrb[0].mxu0
  %v794 = vpop.f32.mrb[0].mxu0
  %795 = vdwg.mxu0
  %v796 = vadd.f32 %v748, %v791
  %v797 = vxor.u32 %v796, 2147483648
  %v798 = vmul.f32 %v797, 1.442695
  %v799 = vpow.pop %v798
  %v800 = vadd.f32 %v799, 1.0
  %v801 = vrcp.pop %v800
  %v802 = vmul.f32 1.0, %v801
  %v803 = vtanh.pop %v796
  %v804 = vmul.f32 %v802, %v654
  %806 = vrot.lane.b32.xlu0 %v803, 64
  %v807 = vpop.permute.xlu0 %806
  %v809 = vmul.f32 %v802, %v807
  %811 = vrot.lane.b32.xlu0 %v809, 32
  %v812 = vpop.permute.xlu0 %811
  %v814 = vadd.f32 %v804, %v812
  %v815 = vtanh.pop %v814
  %817 = vrot.lane.b32.xlu0 %v815, 64
  %v818 = vpop.permute.xlu0 %817
  %v820 = vmul.f32 %v802, %v818
  %822 = vrot.lane.b32.xlu0 %v820, 64
  %v823 = vpop.permute.xlu0 %822
  %s825 = scalar_lea.vmem %s7, 8
  %826 = vst.msk [vmem:[%s825] sm:$0x3] %vm345, %v823
  %s827 = scalar_lea.vmem [#allocation2], 8
  %v828 = vld [vmem:[%s827] sm:$0x3]
  %v829 = vpack.c.bf16 %v740, %v740
  %831 = vrot.lane.b32.xlu0 %v829, 32
  %v832 = vpop.permute.xlu0 %831
  %v834 = vsel %vm53, %v832, 0
  %836 = vmatprep.subr.bf16.mxu0 0
  %837 = vmatpush1.bf16.msra.mxu0 %v183
  %838 = vmatprep.subr.bf16.mxu0 0
  %839 = vmatpush1.bf16.msra.mxu0 %v184
  %840 = vmatprep.subr.bf16.mxu0 0
  %841 = vmatpush1.bf16.msra.mxu0 0
  %842 = vmatprep.subr.bf16.mxu0 0
  %843 = vmatpush1.bf16.msra.mxu0 0
  %844 = vmatprep.subr.bf16.mxu0 0
  %845 = vmatpush1.bf16.msra.mxu0 0
  %846 = vmatprep.subr.bf16.mxu0 0
  %847 = vmatpush1.bf16.msra.mxu0 0
  %848 = vmatprep.subr.bf16.mxu0 0
  %849 = vmatpush1.bf16.msra.mxu0 0
  %850 = vmatprep.subr.bf16.mxu0 0
  %851 = vmatpush1.bf16.msra.mxu0 0
  %852 = vmatprep.subr.bf16.mxu0 0
  %853 = vmatpush1.bf16.msra.mxu0 0
  %854 = vmatprep.subr.bf16.mxu0 0
  %855 = vmatpush1.bf16.msra.mxu0 0
  %856 = vmatprep.subr.bf16.mxu0 0
  %857 = vmatpush1.bf16.msra.mxu0 0
  %858 = vmatprep.subr.bf16.mxu0 0
  %859 = vmatpush1.bf16.msra.mxu0 0
  %860 = vmatprep.subr.bf16.mxu0 0
  %861 = vmatpush1.bf16.msra.mxu0 0
  %862 = vmatprep.subr.bf16.mxu0 0
  %863 = vmatpush1.bf16.msra.mxu0 0
  %864 = vmatprep.subr.bf16.mxu0 0
  %865 = vmatpush1.bf16.msra.mxu0 0
  %866 = vmatprep.subr.bf16.mxu0 0
  %867 = vmatpush1.bf16.msra.mxu0 0
  %868 = vmatprep.mubr.bf16.mxu0 0
  %869 = vmatmul.mubr.bf16.gmra.mrb[0].mxu0 %v834
  %v870 = vpop.f32.mrb[0].mxu0
  %v871 = vadd.f32 0.0, %v870
  %v872 = vpop.f32.mrb[0].mxu0
  %v873 = vpop.f32.mrb[0].mxu0
  %v874 = vpop.f32.mrb[0].mxu0
  %875 = vdwg.mxu0
  %v876 = vadd.f32 %v828, %v871
  %v877 = vxor.u32 %v876, 2147483648
  %v878 = vmul.f32 %v877, 1.442695
  %v879 = vpow.pop %v878
  %v880 = vadd.f32 %v879, 1.0
  %v881 = vrcp.pop %v880
  %v882 = vmul.f32 1.0, %v881
  %v883 = vtanh.pop %v876
  %v884 = vmul.f32 %v882, %v734
  %886 = vrot.lane.b32.xlu0 %v883, 64
  %v887 = vpop.permute.xlu0 %886
  %v889 = vmul.f32 %v882, %v887
  %891 = vrot.lane.b32.xlu0 %v889, 32
  %v892 = vpop.permute.xlu0 %891
  %v894 = vadd.f32 %v884, %v892
  %v895 = vtanh.pop %v894
  %897 = vrot.lane.b32.xlu0 %v895, 64
  %v898 = vpop.permute.xlu0 %897
  %v900 = vmul.f32 %v882, %v898
  %902 = vrot.lane.b32.xlu0 %v900, 32
  %v903 = vpop.permute.xlu0 %902
  %905 = vst.msk [vmem:[%s825] sm:$0x3] %vm259, %v903
  %s906 = scalar_lea.vmem [#allocation3], 6
  %v907 = vld [vmem:[%s906] sm:$0x3]
  %v908 = vpack.c.bf16 %v820, %v820
  %910 = vrot.lane.b32.xlu0 %v908, 32
  %v911 = vpop.permute.xlu0 %910
  %v913 = vsel %vm53, %v911, 0
  %915 = vmatprep.subr.bf16.mxu0 0
  %916 = vmatpush1.bf16.msra.mxu0 %v271
  %917 = vmatprep.subr.bf16.mxu0 0
  %918 = vmatpush1.bf16.msra.mxu0 %v272
  %919 = vmatprep.subr.bf16.mxu0 0
  %920 = vmatpush1.bf16.msra.mxu0 0
  %921 = vmatprep.subr.bf16.mxu0 0
  %922 = vmatpush1.bf16.msra.mxu0 0
  %923 = vmatprep.subr.bf16.mxu0 0
  %924 = vmatpush1.bf16.msra.mxu0 0
  %925 = vmatprep.subr.bf16.mxu0 0
  %926 = vmatpush1.bf16.msra.mxu0 0
  %927 = vmatprep.subr.bf16.mxu0 0
  %928 = vmatpush1.bf16.msra.mxu0 0
  %929 = vmatprep.subr.bf16.mxu0 0
  %930 = vmatpush1.bf16.msra.mxu0 0
  %931 = vmatprep.subr.bf16.mxu0 0
  %932 = vmatpush1.bf16.msra.mxu0 0
  %933 = vmatprep.subr.bf16.mxu0 0
  %934 = vmatpush1.bf16.msra.mxu0 0
  %935 = vmatprep.subr.bf16.mxu0 0
  %936 = vmatpush1.bf16.msra.mxu0 0
  %937 = vmatprep.subr.bf16.mxu0 0
  %938 = vmatpush1.bf16.msra.mxu0 0
  %939 = vmatprep.subr.bf16.mxu0 0
  %940 = vmatpush1.bf16.msra.mxu0 0
  %941 = vmatprep.subr.bf16.mxu0 0
  %942 = vmatpush1.bf16.msra.mxu0 0
  %943 = vmatprep.subr.bf16.mxu0 0
  %944 = vmatpush1.bf16.msra.mxu0 0
  %945 = vmatprep.subr.bf16.mxu0 0
  %946 = vmatpush1.bf16.msra.mxu0 0
  %947 = vmatprep.mubr.bf16.mxu0 0
  %948 = vmatmul.mubr.bf16.gmra.mrb[0].mxu0 %v913
  %v949 = vpop.f32.mrb[0].mxu0
  %v950 = vadd.f32 0.0, %v949
  %v951 = vpop.f32.mrb[0].mxu0
  %v952 = vpop.f32.mrb[0].mxu0
  %v953 = vpop.f32.mrb[0].mxu0
  %954 = vdwg.mxu0
  %v955 = vadd.f32 %v907, %v950
  %v956 = vxor.u32 %v955, 2147483648
  %v957 = vmul.f32 %v956, 1.442695
  %v958 = vpow.pop %v957
  %v959 = vadd.f32 %v958, 1.0
  %v960 = vrcp.pop %v959
  %v961 = vmul.f32 1.0, %v960
  %v962 = vtanh.pop %v955
  %v963 = vmul.f32 %v961, %v814
  %965 = vrot.lane.b32.xlu0 %v962, 64
  %v966 = vpop.permute.xlu0 %965
  %v968 = vmul.f32 %v961, %v966
  %970 = vrot.lane.b32.xlu0 %v968, 32
  %v971 = vpop.permute.xlu0 %970
  %v973 = vadd.f32 %v963, %v971
  %v974 = vtanh.pop %v973
  %976 = vrot.lane.b32.xlu0 %v974, 64
  %v977 = vpop.permute.xlu0 %976
  %v979 = vmul.f32 %v961, %v977
  %981 = vrot.lane.b32.xlu0 %v979, 64
  %v982 = vpop.permute.xlu0 %981
  %984 = vst.msk [vmem:[%s745] sm:$0x3] %vm345, %v982
  %s985 = scalar_lea.vmem [#allocation2], 10
  %v986 = vld [vmem:[%s985] sm:$0x3]
  %v987 = vpack.c.bf16 %v900, %v900
  %989 = vrot.lane.b32.xlu0 %v987, 32
  %v990 = vpop.permute.xlu0 %989
  %v992 = vsel %vm53, %v990, 0
  %994 = vmatprep.subr.bf16.mxu0 0
  %995 = vmatpush1.bf16.msra.mxu0 %v183
  %996 = vmatprep.subr.bf16.mxu0 0
  %997 = vmatpush1.bf16.msra.mxu0 %v184
  %998 = vmatprep.subr.bf16.mxu0 0
  %999 = vmatpush1.bf16.msra.mxu0 0
  %1000 = vmatprep.subr.bf16.mxu0 0
  %1001 = vmatpush1.bf16.msra.mxu0 0
  %1002 = vmatprep.subr.bf16.mxu0 0
  %1003 = vmatpush1.bf16.msra.mxu0 0
  %1004 = vmatprep.subr.bf16.mxu0 0
  %1005 = vmatpush1.bf16.msra.mxu0 0
  %1006 = vmatprep.subr.bf16.mxu0 0
  %1007 = vmatpush1.bf16.msra.mxu0 0
  %1008 = vmatprep.subr.bf16.mxu0 0
  %1009 = vmatpush1.bf16.msra.mxu0 0
  %1010 = vmatprep.subr.bf16.mxu0 0
  %1011 = vmatpush1.bf16.msra.mxu0 0
  %1012 = vmatprep.subr.bf16.mxu0 0
  %1013 = vmatpush1.bf16.msra.mxu0 0
  %1014 = vmatprep.subr.bf16.mxu0 0
  %1015 = vmatpush1.bf16.msra.mxu0 0
  %1016 = vmatprep.subr.bf16.mxu0 0
  %1017 = vmatpush1.bf16.msra.mxu0 0
  %1018 = vmatprep.subr.bf16.mxu0 0
  %1019 = vmatpush1.bf16.msra.mxu0 0
  %1020 = vmatprep.subr.bf16.mxu0 0
  %1021 = vmatpush1.bf16.msra.mxu0 0
  %1022 = vmatprep.subr.bf16.mxu0 0
  %1023 = vmatpush1.bf16.msra.mxu0 0
  %1024 = vmatprep.subr.bf16.mxu0 0
  %1025 = vmatpush1.bf16.msra.mxu0 0
  %1026 = vmatprep.mubr.bf16.mxu0 0
  %1027 = vmatmul.mubr.bf16.gmra.mrb[0].mxu0 %v992
  %v1028 = vpop.f32.mrb[0].mxu0
  %v1029 = vadd.f32 0.0, %v1028
  %v1030 = vpop.f32.mrb[0].mxu0
  %v1031 = vpop.f32.mrb[0].mxu0
  %v1032 = vpop.f32.mrb[0].mxu0
  %1033 = vdwg.mxu0
  %v1034 = vadd.f32 %v986, %v1029
  %v1035 = vxor.u32 %v1034, 2147483648
  %v1036 = vmul.f32 %v1035, 1.442695
  %v1037 = vpow.pop %v1036
  %v1038 = vadd.f32 %v1037, 1.0
  %v1039 = vrcp.pop %v1038
  %v1040 = vmul.f32 1.0, %v1039
  %v1041 = vtanh.pop %v1034
  %v1042 = vmul.f32 %v1040, %v894
  %1044 = vrot.lane.b32.xlu0 %v1041, 64
  %v1045 = vpop.permute.xlu0 %1044
  %v1047 = vmul.f32 %v1040, %v1045
  %1049 = vrot.lane.b32.xlu0 %v1047, 32
  %v1050 = vpop.permute.xlu0 %1049
  %v1052 = vadd.f32 %v1042, %v1050
  %v1053 = vtanh.pop %v1052
  %1055 = vrot.lane.b32.xlu0 %v1053, 64
  %v1056 = vpop.permute.xlu0 %1055
  %v1058 = vmul.f32 %v1040, %v1056
  %1060 = vrot.lane.b32.xlu0 %v1058, 32
  %v1061 = vpop.permute.xlu0 %1060
  %1063 = vst.msk [vmem:[%s665] sm:$0x3] %vm259, %v1061
  %s1064 = scalar_lea.vmem [#allocation3], 4
  %v1065 = vld [vmem:[%s1064] sm:$0x3]
  %v1066 = vpack.c.bf16 %v979, %v979
  %1068 = vrot.lane.b32.xlu0 %v1066, 32
  %v1069 = vpop.permute.xlu0 %1068
  %v1071 = vsel %vm53, %v1069, 0
  %1073 = vmatprep.subr.bf16.mxu0 0
  %1074 = vmatpush1.bf16.msra.mxu0 %v271
  %1075 = vmatprep.subr.bf16.mxu0 0
  %1076 = vmatpush1.bf16.msra.mxu0 %v272
  %1077 = vmatprep.subr.bf16.mxu0 0
  %1078 = vmatpush1.bf16.msra.mxu0 0
  %1079 = vmatprep.subr.bf16.mxu0 0
  %1080 = vmatpush1.bf16.msra.mxu0 0
  %1081 = vmatprep.subr.bf16.mxu0 0
  %1082 = vmatpush1.bf16.msra.mxu0 0
  %1083 = vmatprep.subr.bf16.mxu0 0
  %1084 = vmatpush1.bf16.msra.mxu0 0
  %1085 = vmatprep.subr.bf16.mxu0 0
  %1086 = vmatpush1.bf16.msra.mxu0 0
  %1087 = vmatprep.subr.bf16.mxu0 0
  %1088 = vmatpush1.bf16.msra.mxu0 0
  %1089 = vmatprep.subr.bf16.mxu0 0
  %1090 = vmatpush1.bf16.msra.mxu0 0
  %1091 = vmatprep.subr.bf16.mxu0 0
  %1092 = vmatpush1.bf16.msra.mxu0 0
  %1093 = vmatprep.subr.bf16.mxu0 0
  %1094 = vmatpush1.bf16.msra.mxu0 0
  %1095 = vmatprep.subr.bf16.mxu0 0
  %1096 = vmatpush1.bf16.msra.mxu0 0
  %1097 = vmatprep.subr.bf16.mxu0 0
  %1098 = vmatpush1.bf16.msra.mxu0 0
  %1099 = vmatprep.subr.bf16.mxu0 0
  %1100 = vmatpush1.bf16.msra.mxu0 0
  %1101 = vmatprep.subr.bf16.mxu0 0
  %1102 = vmatpush1.bf16.msra.mxu0 0
  %1103 = vmatprep.subr.bf16.mxu0 0
  %1104 = vmatpush1.bf16.msra.mxu0 0
  %1105 = vmatprep.mubr.bf16.mxu0 0
  %1106 = vmatmul.mubr.bf16.gmra.mrb[0].mxu0 %v1071
  %v1107 = vpop.f32.mrb[0].mxu0
  %v1108 = vadd.f32 0.0, %v1107
  %v1109 = vpop.f32.mrb[0].mxu0
  %v1110 = vpop.f32.mrb[0].mxu0
  %v1111 = vpop.f32.mrb[0].mxu0
  %1112 = vdwg.mxu0
  %v1113 = vadd.f32 %v1065, %v1108
  %v1114 = vxor.u32 %v1113, 2147483648
  %v1115 = vmul.f32 %v1114, 1.442695
  %v1116 = vpow.pop %v1115
  %v1117 = vadd.f32 %v1116, 1.0
  %v1118 = vrcp.pop %v1117
  %v1119 = vmul.f32 1.0, %v1118
  %v1120 = vtanh.pop %v1113
  %v1121 = vmul.f32 %v1119, %v973
  %1123 = vrot.lane.b32.xlu0 %v1120, 64
  %v1124 = vpop.permute.xlu0 %1123
  %v1126 = vmul.f32 %v1119, %v1124
  %1128 = vrot.lane.b32.xlu0 %v1126, 32
  %v1129 = vpop.permute.xlu0 %1128
  %v1131 = vadd.f32 %v1121, %v1129
  %v1132 = vtanh.pop %v1131
  %1134 = vrot.lane.b32.xlu0 %v1132, 64
  %v1135 = vpop.permute.xlu0 %1134
  %v1137 = vmul.f32 %v1119, %v1135
  %1139 = vrot.lane.b32.xlu0 %v1137, 64
  %v1140 = vpop.permute.xlu0 %1139
  %1142 = vst.msk [vmem:[%s585] sm:$0x3] %vm345, %v1140
  %s1143 = scalar_lea.vmem [#allocation2], 12
  %v1144 = vld [vmem:[%s1143] sm:$0x3]
  %v1145 = vpack.c.bf16 %v1058, %v1058
  %1147 = vrot.lane.b32.xlu0 %v1145, 32
  %v1148 = vpop.permute.xlu0 %1147
  %v1150 = vsel %vm53, %v1148, 0
  %1152 = vmatprep.subr.bf16.mxu0 0
  %1153 = vmatpush1.bf16.msra.mxu0 %v183
  %1154 = vmatprep.subr.bf16.mxu0 0
  %1155 = vmatpush1.bf16.msra.mxu0 %v184
  %1156 = vmatprep.subr.bf16.mxu0 0
  %1157 = vmatpush1.bf16.msra.mxu0 0
  %1158 = vmatprep.subr.bf16.mxu0 0
  %1159 = vmatpush1.bf16.msra.mxu0 0
  %1160 = vmatprep.subr.bf16.mxu0 0
  %1161 = vmatpush1.bf16.msra.mxu0 0
  %1162 = vmatprep.subr.bf16.mxu0 0
  %1163 = vmatpush1.bf16.msra.mxu0 0
  %1164 = vmatprep.subr.bf16.mxu0 0
  %1165 = vmatpush1.bf16.msra.mxu0 0
  %1166 = vmatprep.subr.bf16.mxu0 0
  %1167 = vmatpush1.bf16.msra.mxu0 0
  %1168 = vmatprep.subr.bf16.mxu0 0
  %1169 = vmatpush1.bf16.msra.mxu0 0
  %1170 = vmatprep.subr.bf16.mxu0 0
  %1171 = vmatpush1.bf16.msra.mxu0 0
  %1172 = vmatprep.subr.bf16.mxu0 0
  %1173 = vmatpush1.bf16.msra.mxu0 0
  %1174 = vmatprep.subr.bf16.mxu0 0
  %1175 = vmatpush1.bf16.msra.mxu0 0
  %1176 = vmatprep.subr.bf16.mxu0 0
  %1177 = vmatpush1.bf16.msra.mxu0 0
  %1178 = vmatprep.subr.bf16.mxu0 0
  %1179 = vmatpush1.bf16.msra.mxu0 0
  %1180 = vmatprep.subr.bf16.mxu0 0
  %1181 = vmatpush1.bf16.msra.mxu0 0
  %1182 = vmatprep.subr.bf16.mxu0 0
  %1183 = vmatpush1.bf16.msra.mxu0 0
  %1184 = vmatprep.mubr.bf16.mxu0 0
  %1185 = vmatmul.mubr.bf16.gmra.mrb[0].mxu0 %v1150
  %v1186 = vpop.f32.mrb[0].mxu0
  %v1187 = vadd.f32 0.0, %v1186
  %v1188 = vpop.f32.mrb[0].mxu0
  %v1189 = vpop.f32.mrb[0].mxu0
  %v1190 = vpop.f32.mrb[0].mxu0
  %1191 = vdwg.mxu0
  %v1192 = vadd.f32 %v1144, %v1187
  %v1193 = vxor.u32 %v1192, 2147483648
  %v1194 = vmul.f32 %v1193, 1.442695
  %v1195 = vpow.pop %v1194
  %v1196 = vadd.f32 %v1195, 1.0
  %v1197 = vrcp.pop %v1196
  %v1198 = vmul.f32 1.0, %v1197
  %v1199 = vtanh.pop %v1192
  %v1200 = vmul.f32 %v1198, %v1052
  %1202 = vrot.lane.b32.xlu0 %v1199, 64
  %v1203 = vpop.permute.xlu0 %1202
  %v1205 = vmul.f32 %v1198, %v1203
  %1207 = vrot.lane.b32.xlu0 %v1205, 32
  %v1208 = vpop.permute.xlu0 %1207
  %v1210 = vadd.f32 %v1200, %v1208
  %v1211 = vtanh.pop %v1210
  %1213 = vrot.lane.b32.xlu0 %v1211, 64
  %v1214 = vpop.permute.xlu0 %1213
  %v1216 = vmul.f32 %v1198, %v1214
  %1218 = vrot.lane.b32.xlu0 %v1216, 32
  %v1219 = vpop.permute.xlu0 %1218
  %1221 = vst.msk [vmem:[%s505] sm:$0x3] %vm259, %v1219
  %s1222 = scalar_lea.vmem [#allocation3], 2
  %v1223 = vld [vmem:[%s1222] sm:$0x3]
  %v1224 = vpack.c.bf16 %v1137, %v1137
  %1226 = vrot.lane.b32.xlu0 %v1224, 32
  %v1227 = vpop.permute.xlu0 %1226
  %v1229 = vsel %vm53, %v1227, 0
  %1231 = vmatprep.subr.bf16.mxu0 0
  %1232 = vmatpush1.bf16.msra.mxu0 %v271
  %1233 = vmatprep.subr.bf16.mxu0 0
  %1234 = vmatpush1.bf16.msra.mxu0 %v272
  %1235 = vmatprep.subr.bf16.mxu0 0
  %1236 = vmatpush1.bf16.msra.mxu0 0
  %1237 = vmatprep.subr.bf16.mxu0 0
  %1238 = vmatpush1.bf16.msra.mxu0 0
  %1239 = vmatprep.subr.bf16.mxu0 0
  %1240 = vmatpush1.bf16.msra.mxu0 0
  %1241 = vmatprep.subr.bf16.mxu0 0
  %1242 = vmatpush1.bf16.msra.mxu0 0
  %1243 = vmatprep.subr.bf16.mxu0 0
  %1244 = vmatpush1.bf16.msra.mxu0 0
  %1245 = vmatprep.subr.bf16.mxu0 0
  %1246 = vmatpush1.bf16.msra.mxu0 0
  %1247 = vmatprep.subr.bf16.mxu0 0
  %1248 = vmatpush1.bf16.msra.mxu0 0
  %1249 = vmatprep.subr.bf16.mxu0 0
  %1250 = vmatpush1.bf16.msra.mxu0 0
  %1251 = vmatprep.subr.bf16.mxu0 0
  %1252 = vmatpush1.bf16.msra.mxu0 0
  %1253 = vmatprep.subr.bf16.mxu0 0
  %1254 = vmatpush1.bf16.msra.mxu0 0
  %1255 = vmatprep.subr.bf16.mxu0 0
  %1256 = vmatpush1.bf16.msra.mxu0 0
  %1257 = vmatprep.subr.bf16.mxu0 0
  %1258 = vmatpush1.bf16.msra.mxu0 0
  %1259 = vmatprep.subr.bf16.mxu0 0
  %1260 = vmatpush1.bf16.msra.mxu0 0
  %1261 = vmatprep.subr.bf16.mxu0 0
  %1262 = vmatpush1.bf16.msra.mxu0 0
  %1263 = vmatprep.mubr.bf16.mxu0 0
  %1264 = vmatmul.mubr.bf16.gmra.mrb[0].mxu0 %v1229
  %v1265 = vpop.f32.mrb[0].mxu0
  %v1266 = vadd.f32 0.0, %v1265
  %v1267 = vpop.f32.mrb[0].mxu0
  %v1268 = vpop.f32.mrb[0].mxu0
  %v1269 = vpop.f32.mrb[0].mxu0
  %1270 = vdwg.mxu0
  %v1271 = vadd.f32 %v1223, %v1266
  %v1272 = vxor.u32 %v1271, 2147483648
  %v1273 = vmul.f32 %v1272, 1.442695
  %v1274 = vpow.pop %v1273
  %v1275 = vadd.f32 %v1274, 1.0
  %v1276 = vrcp.pop %v1275
  %v1277 = vmul.f32 1.0, %v1276
  %v1278 = vtanh.pop %v1271
  %v1279 = vmul.f32 %v1277, %v1131
  %1281 = vrot.lane.b32.xlu0 %v1278, 64
  %v1282 = vpop.permute.xlu0 %1281
  %v1284 = vmul.f32 %v1277, %v1282
  %1286 = vrot.lane.b32.xlu0 %v1284, 32
  %v1287 = vpop.permute.xlu0 %1286
  %v1289 = vadd.f32 %v1279, %v1287
  %v1290 = vtanh.pop %v1289
  %1292 = vrot.lane.b32.xlu0 %v1290, 64
  %v1293 = vpop.permute.xlu0 %1292
  %v1295 = vmul.f32 %v1277, %v1293
  %1297 = vrot.lane.b32.xlu0 %v1295, 64
  %v1298 = vpop.permute.xlu0 %1297
  %1300 = vst.msk [vmem:[%s425] sm:$0x3] %vm345, %v1298
  %s1301 = scalar_lea.vmem [#allocation2], 14
  %v1302 = vld [vmem:[%s1301] sm:$0x3]
  %v1303 = vpack.c.bf16 %v1216, %v1216
  %1305 = vrot.lane.b32.xlu0 %v1303, 32
  %v1306 = vpop.permute.xlu0 %1305
  %v1308 = vsel %vm53, %v1306, 0
  %1310 = vmatprep.subr.bf16.mxu0 0
  %1311 = vmatpush1.bf16.msra.mxu0 %v183
  %1312 = vmatprep.subr.bf16.mxu0 0
  %1313 = vmatpush1.bf16.msra.mxu0 %v184
  %1314 = vmatprep.subr.bf16.mxu0 0
  %1315 = vmatpush1.bf16.msra.mxu0 0
  %1316 = vmatprep.subr.bf16.mxu0 0
  %1317 = vmatpush1.bf16.msra.mxu0 0
  %1318 = vmatprep.subr.bf16.mxu0 0
  %1319 = vmatpush1.bf16.msra.mxu0 0
  %1320 = vmatprep.subr.bf16.mxu0 0
  %1321 = vmatpush1.bf16.msra.mxu0 0
  %1322 = vmatprep.subr.bf16.mxu0 0
  %1323 = vmatpush1.bf16.msra.mxu0 0
  %1324 = vmatprep.subr.bf16.mxu0 0
  %1325 = vmatpush1.bf16.msra.mxu0 0
  %1326 = vmatprep.subr.bf16.mxu0 0
  %1327 = vmatpush1.bf16.msra.mxu0 0
  %1328 = vmatprep.subr.bf16.mxu0 0
  %1329 = vmatpush1.bf16.msra.mxu0 0
  %1330 = vmatprep.subr.bf16.mxu0 0
  %1331 = vmatpush1.bf16.msra.mxu0 0
  %1332 = vmatprep.subr.bf16.mxu0 0
  %1333 = vmatpush1.bf16.msra.mxu0 0
  %1334 = vmatprep.subr.bf16.mxu0 0
  %1335 = vmatpush1.bf16.msra.mxu0 0
  %1336 = vmatprep.subr.bf16.mxu0 0
  %1337 = vmatpush1.bf16.msra.mxu0 0
  %1338 = vmatprep.subr.bf16.mxu0 0
  %1339 = vmatpush1.bf16.msra.mxu0 0
  %1340 = vmatprep.subr.bf16.mxu0 0
  %1341 = vmatpush1.bf16.msra.mxu0 0
  %1342 = vmatprep.mubr.bf16.mxu0 0
  %1343 = vmatmul.mubr.bf16.gmra.mrb[0].mxu0 %v1308
  %v1344 = vpop.f32.mrb[0].mxu0
  %v1345 = vadd.f32 0.0, %v1344
  %v1346 = vpop.f32.mrb[0].mxu0
  %v1347 = vpop.f32.mrb[0].mxu0
  %v1348 = vpop.f32.mrb[0].mxu0
  %1349 = vdwg.mxu0
  %v1350 = vadd.f32 %v1302, %v1345
  %v1351 = vxor.u32 %v1350, 2147483648
  %v1352 = vmul.f32 %v1351, 1.442695
  %v1353 = vpow.pop %v1352
  %v1354 = vadd.f32 %v1353, 1.0
  %v1355 = vrcp.pop %v1354
  %v1356 = vmul.f32 1.0, %v1355
  %v1357 = vtanh.pop %v1350
  %v1358 = vmul.f32 %v1356, %v1210
  %1360 = vrot.lane.b32.xlu0 %v1357, 64
  %v1361 = vpop.permute.xlu0 %1360
  %v1363 = vmul.f32 %v1356, %v1361
  %1365 = vrot.lane.b32.xlu0 %v1363, 32
  %v1366 = vpop.permute.xlu0 %1365
  %v1368 = vadd.f32 %v1358, %v1366
  %v1369 = vtanh.pop %v1368
  %1371 = vrot.lane.b32.xlu0 %v1369, 64
  %v1372 = vpop.permute.xlu0 %1371
  %v1374 = vmul.f32 %v1356, %v1372
  %1376 = vrot.lane.b32.xlu0 %v1374, 32
  %v1377 = vpop.permute.xlu0 %1376
  %1379 = vst.msk [vmem:[%s344] sm:$0x3] %vm259, %v1377
  %v1380 = vld [vmem:[#allocation3] sm:$0x3]
  %v1381 = vpack.c.bf16 %v1295, %v1295
  %1383 = vrot.lane.b32.xlu0 %v1381, 32
  %v1384 = vpop.permute.xlu0 %1383
  %v1386 = vsel %vm53, %v1384, 0
  %1388 = vmatprep.subr.bf16.mxu0 0
  %1389 = vmatpush1.bf16.msra.mxu0 %v271
  %1390 = vmatprep.subr.bf16.mxu0 0
  %1391 = vmatpush1.bf16.msra.mxu0 %v272
  %1392 = vmatprep.subr.bf16.mxu0 0
  %1393 = vmatpush1.bf16.msra.mxu0 0
  %1394 = vmatprep.subr.bf16.mxu0 0
  %1395 = vmatpush1.bf16.msra.mxu0 0
  %1396 = vmatprep.subr.bf16.mxu0 0
  %1397 = vmatpush1.bf16.msra.mxu0 0
  %1398 = vmatprep.subr.bf16.mxu0 0
  %1399 = vmatpush1.bf16.msra.mxu0 0
  %1400 = vmatprep.subr.bf16.mxu0 0
  %1401 = vmatpush1.bf16.msra.mxu0 0
  %1402 = vmatprep.subr.bf16.mxu0 0
  %1403 = vmatpush1.bf16.msra.mxu0 0
  %1404 = vmatprep.subr.bf16.mxu0 0
  %1405 = vmatpush1.bf16.msra.mxu0 0
  %1406 = vmatprep.subr.bf16.mxu0 0
  %1407 = vmatpush1.bf16.msra.mxu0 0
  %1408 = vmatprep.subr.bf16.mxu0 0
  %1409 = vmatpush1.bf16.msra.mxu0 0
  %1410 = vmatprep.subr.bf16.mxu0 0
  %1411 = vmatpush1.bf16.msra.mxu0 0
  %1412 = vmatprep.subr.bf16.mxu0 0
  %1413 = vmatpush1.bf16.msra.mxu0 0
  %1414 = vmatprep.subr.bf16.mxu0 0
  %1415 = vmatpush1.bf16.msra.mxu0 0
  %1416 = vmatprep.subr.bf16.mxu0 0
  %1417 = vmatpush1.bf16.msra.mxu0 0
  %1418 = vmatprep.subr.bf16.mxu0 0
  %1419 = vmatpush1.bf16.msra.mxu0 0
  %1420 = vmatprep.mubr.bf16.mxu0 0
  %1421 = vmatmul.mubr.bf16.gmra.mrb[0].mxu0 %v1386
  %v1422 = vpop.f32.mrb[0].mxu0
  %v1423 = vadd.f32 0.0, %v1422
  %v1424 = vpop.f32.mrb[0].mxu0
  %v1425 = vpop.f32.mrb[0].mxu0
  %v1426 = vpop.f32.mrb[0].mxu0
  %1427 = vdwg.mxu0
  %v1428 = vadd.f32 %v1380, %v1423
  %v1429 = vxor.u32 %v1428, 2147483648
  %v1430 = vmul.f32 %v1429, 1.442695
  %v1431 = vpow.pop %v1430
  %v1432 = vadd.f32 %v1431, 1.0
  %v1433 = vrcp.pop %v1432
  %v1434 = vmul.f32 1.0, %v1433
  %v1435 = vtanh.pop %v1428
  %v1436 = vmul.f32 %v1434, %v1289
  %1438 = vrot.lane.b32.xlu0 %v1435, 64
  %v1439 = vpop.permute.xlu0 %1438
  %v1441 = vmul.f32 %v1434, %v1439
  %1443 = vrot.lane.b32.xlu0 %v1441, 32
  %v1444 = vpop.permute.xlu0 %1443
  %v1446 = vadd.f32 %v1436, %v1444
  %v1447 = vtanh.pop %v1446
  %1449 = vrot.lane.b32.xlu0 %v1447, 64
  %v1450 = vpop.permute.xlu0 %1449
  %v1452 = vmul.f32 %v1434, %v1450
  %1454 = vrot.lane.b32.xlu0 %v1452, 64
  %v1455 = vpop.permute.xlu0 %1454
  %1457 = vst.msk [vmem:[%s7] sm:$0x3] %vm345, %v1455
  // Predicated region
  $region30: #{lstm_sentence_encoding.2} parent=0 // pred_check
    _
  $region31: #{lstm_sentence_encoding.2} parent=0 // pred_check_branch
    %1459 = sbr.rel (0) target = $region33
  $region32: #{lstm_sentence_encoding.2} parent=0 // pred_region
    _
  $region33: #{lstm_sentence_encoding.2} parent=0 // pred_fallthru
    _
  // Predicated region
  $region34: #{lstm_sentence_encoding.2} parent=0 // pred_check
    _
  $region35: #{lstm_sentence_encoding.2} parent=0 // pred_check_branch
    %1461 = sbr.rel (0) target = $region37
  $region36: #{lstm_sentence_encoding.2} parent=0 // pred_region
    _
  $region37: #{lstm_sentence_encoding.2} parent=0 // pred_fallthru
    _

// kernel: lstm_sentence_encoding.3
$region0: #{lstm_sentence_encoding.3}
  #allocation0 [shape = 'u32[]', space=smem, size = 0x4, offset = 0x4, fixed_abs, tag = 'smem constant byte address 0x4 - core index']
  #allocation1 [shape = 'u32[144,128]{1,0:T(1,128)}', space=vmem, size = 0x12000, scoped, tag = 'internal scratch']
  #allocation2 [shape = 'f32[16,128]{1,0:T(8,128)}', space=vmem, size = 0x2000, scoped, tag = 'scratch operand']
  #allocation3 [shape = 'f32[16,128]{1,0:T(8,128)}', space=vmem, size = 0x2000, scoped, tag = 'scratch operand']
  %s0 = inlined_call_operand.vmem [shape: f32[16,64], index: 0, kind: input, shape index: {}]
  %s1 = inlined_call_operand.vmem [shape: bf16[64,128], index: 1, kind: input, shape index: {}]
  %s2 = inlined_call_operand.vmem [shape: bf16[32,128], index: 2, kind: input, shape index: {}]
  %s3 = inlined_call_operand.vmem [shape: f32[1,128], index: 3, kind: input, shape index: {}]
  %s4 = inlined_call_operand.vmem [shape: bf16[64,128], index: 4, kind: input, shape index: {}]
  %s5 = inlined_call_operand.vmem [shape: bf16[32,128], index: 5, kind: input, shape index: {}]
  %s6 = inlined_call_operand.vmem [shape: f32[1,128], index: 6, kind: input, shape index: {}]
  %s7 = inlined_call_operand.vmem [shape: f32[16,64], index: 7, kind: output, shape index: {}]
  %s8 = sld [smem:[#allocation0]]
  $region38: #{lstm_sentence_encoding.3} parent=0
    _
  %s10 = ssub.s32 1, %s8
  %s11 = scalar_select 0, %s10, %s8
  // Predicated region
  $region2: #{lstm_sentence_encoding.3} parent=0 // pred_check
    _
  $region3: #{lstm_sentence_encoding.3} parent=0 // pred_check_branch
    %13 = sbr.rel (0) target = $region5
  $region4: #{lstm_sentence_encoding.3} parent=0 // pred_region
    _
  $region5: #{lstm_sentence_encoding.3} parent=0 // pred_fallthru
    _
  // Predicated region
  $region6: #{lstm_sentence_encoding.3} parent=0 // pred_check
    _
  $region7: #{lstm_sentence_encoding.3} parent=0 // pred_check_branch
    %15 = sbr.rel (0) target = $region9
  $region8: #{lstm_sentence_encoding.3} parent=0 // pred_region
    _
  $region9: #{lstm_sentence_encoding.3} parent=0 // pred_fallthru
    _
  // Predicated region
  $region10: #{lstm_sentence_encoding.3} parent=0 // pred_check
    _
  $region11: #{lstm_sentence_encoding.3} parent=0 // pred_check_branch
    %17 = sbr.rel (0) target = $region13
  $region12: #{lstm_sentence_encoding.3} parent=0 // pred_region
    _
  $region13: #{lstm_sentence_encoding.3} parent=0 // pred_fallthru
    _
  // Predicated region
  $region14: #{lstm_sentence_encoding.3} parent=0 // pred_check
    _
  $region15: #{lstm_sentence_encoding.3} parent=0 // pred_check_branch
    %19 = sbr.rel (0) target = $region17
  $region16: #{lstm_sentence_encoding.3} parent=0 // pred_region
    _
  $region17: #{lstm_sentence_encoding.3} parent=0 // pred_fallthru
    _
  // Predicated region
  $region18: #{lstm_sentence_encoding.3} parent=0 // pred_check
    _
  $region19: #{lstm_sentence_encoding.3} parent=0 // pred_check_branch
    %21 = sbr.rel (0) target = $region21
  $region20: #{lstm_sentence_encoding.3} parent=0 // pred_region
    _
  $region21: #{lstm_sentence_encoding.3} parent=0 // pred_fallthru
    _
  // Predicated region
  $region22: #{lstm_sentence_encoding.3} parent=0 // pred_check
    _
  $region23: #{lstm_sentence_encoding.3} parent=0 // pred_check_branch
    %23 = sbr.rel (0) target = $region25
  $region24: #{lstm_sentence_encoding.3} parent=0 // pred_region
    _
  $region25: #{lstm_sentence_encoding.3} parent=0 // pred_fallthru
    _
  // Predicated region
  $region26: #{lstm_sentence_encoding.3} parent=0 // pred_check
    _
  $region27: #{lstm_sentence_encoding.3} parent=0 // pred_check_branch
    %25 = sbr.rel (0) target = $region29
  $region28: #{lstm_sentence_encoding.3} parent=0 // pred_region
    _
  $region29: #{lstm_sentence_encoding.3} parent=0 // pred_fallthru
    _
  %v27 = vld [vmem:[%s0] sm:$0xff]
  %v28 = vld [vmem:[%s0 + $0x8] sm:$0xff]
  %v29 = vpack.c.bf16 %v28, %v27
  %v30 = vld [vmem:[%s1] sm:$0xf]
  %v31 = vld [vmem:[%s1 + $0x4] sm:$0xf]
  %v32 = vld [vmem:[%s1 + $0x8] sm:$0xf]
  %v33 = vld [vmem:[%s1 + $0xc] sm:$0xf]
  %v34 = vld [vmem:[%s1 + $0x10] sm:$0xf]
  %v35 = vld [vmem:[%s1 + $0x14] sm:$0xf]
  %v36 = vld [vmem:[%s1 + $0x18] sm:$0xf]
  %v37 = vld [vmem:[%s1 + $0x1c] sm:$0xf]
  %v38 = vld [vmem:[%s3] sm:$0x1]
  %v40 = vlaneseq
  %v41 = vshrl.u32 %v40, 7
  %v42 = vsub.s32 0, %v41
  %v43 = vrot.slane %v38, %v42
  %v53 = vunpack.c.l.b16 %v30
  %v54 = vunpack.c.l.b16 %v31
  %v55 = vunpack.c.l.b16 %v32
  %v56 = vunpack.c.l.b16 %v33
  %v57 = vunpack.c.l.b16 %v34
  %v58 = vunpack.c.l.b16 %v35
  %v59 = vunpack.c.l.b16 %v36
  %v60 = vunpack.c.l.b16 %v37
  %v61 = vpack.c.b16 %v54, %v53
  %v62 = vpack.c.b16 %v56, %v55
  %v63 = vpack.c.b16 %v58, %v57
  %v64 = vpack.c.b16 %v60, %v59
  %vm69 = vcmask 523264
  %v71 = vsel %vm69, %v29, 0
  %73 = vmatprep.subr.bf16.mxu0 0
  %74 = vmatpush1.bf16.msra.mxu0 %v61
  %75 = vmatprep.subr.bf16.mxu0 0
  %76 = vmatpush1.bf16.msra.mxu0 %v62
  %77 = vmatprep.subr.bf16.mxu0 0
  %78 = vmatpush1.bf16.msra.mxu0 %v63
  %79 = vmatprep.subr.bf16.mxu0 0
  %80 = vmatpush1.bf16.msra.mxu0 %v64
  %81 = vmatprep.subr.bf16.mxu0 0
  %82 = vmatpush1.bf16.msra.mxu0 0
  %83 = vmatprep.subr.bf16.mxu0 0
  %84 = vmatpush1.bf16.msra.mxu0 0
  %85 = vmatprep.subr.bf16.mxu0 0
  %86 = vmatpush1.bf16.msra.mxu0 0
  %87 = vmatprep.subr.bf16.mxu0 0
  %88 = vmatpush1.bf16.msra.mxu0 0
  %89 = vmatprep.subr.bf16.mxu0 0
  %90 = vmatpush1.bf16.msra.mxu0 0
  %91 = vmatprep.subr.bf16.mxu0 0
  %92 = vmatpush1.bf16.msra.mxu0 0
  %93 = vmatprep.subr.bf16.mxu0 0
  %94 = vmatpush1.bf16.msra.mxu0 0
  %95 = vmatprep.subr.bf16.mxu0 0
  %96 = vmatpush1.bf16.msra.mxu0 0
  %97 = vmatprep.subr.bf16.mxu0 0
  %98 = vmatpush1.bf16.msra.mxu0 0
  %99 = vmatprep.subr.bf16.mxu0 0
  %100 = vmatpush1.bf16.msra.mxu0 0
  %101 = vmatprep.subr.bf16.mxu0 0
  %102 = vmatpush1.bf16.msra.mxu0 0
  %103 = vmatprep.subr.bf16.mxu0 0
  %104 = vmatpush1.bf16.msra.mxu0 0
  %105 = vmatprep.mubr.bf16.mxu0 0
  %106 = vmatmul.mubr.bf16.gmra.mrb[0].mxu0 %v71
  %v107 = vpop.f32.mrb[0].mxu0
  %v108 = vadd.f32 %v43, %v107
  %v109 = vpop.f32.mrb[0].mxu0
  %v110 = vpop.f32.mrb[0].mxu0
  %v111 = vadd.f32 %v43, %v110
  %v112 = vpop.f32.mrb[0].mxu0
  %113 = vdwg.mxu0
  %114 = vst [vmem:[#allocation2] sm:$0xff] %v108
  %115 = vst [vmem:[#allocation2 + $0x8] sm:$0xff] %v111
  %v116 = vld [vmem:[%s4] sm:$0xf]
  %v117 = vld [vmem:[%s4 + $0x4] sm:$0xf]
  %v118 = vld [vmem:[%s4 + $0x8] sm:$0xf]
  %v119 = vld [vmem:[%s4 + $0xc] sm:$0xf]
  %v120 = vld [vmem:[%s4 + $0x10] sm:$0xf]
  %v121 = vld [vmem:[%s4 + $0x14] sm:$0xf]
  %v122 = vld [vmem:[%s4 + $0x18] sm:$0xf]
  %v123 = vld [vmem:[%s4 + $0x1c] sm:$0xf]
  %v124 = vld [vmem:[%s6] sm:$0x1]
  %v126 = vlaneseq
  %v127 = vshrl.u32 %v126, 7
  %v128 = vsub.s32 0, %v127
  %v129 = vrot.slane %v124, %v128
  %v139 = vunpack.c.l.b16 %v116
  %v140 = vunpack.c.l.b16 %v117
  %v141 = vunpack.c.l.b16 %v118
  %v142 = vunpack.c.l.b16 %v119
  %v143 = vunpack.c.l.b16 %v120
  %v144 = vunpack.c.l.b16 %v121
  %v145 = vunpack.c.l.b16 %v122
  %v146 = vunpack.c.l.b16 %v123
  %v147 = vpack.c.b16 %v140, %v139
  %v148 = vpack.c.b16 %v142, %v141
  %v149 = vpack.c.b16 %v144, %v143
  %v150 = vpack.c.b16 %v146, %v145
  %155 = vmatprep.subr.bf16.mxu0 0
  %156 = vmatpush1.bf16.msra.mxu0 %v147
  %157 = vmatprep.subr.bf16.mxu0 0
  %158 = vmatpush1.bf16.msra.mxu0 %v148
  %159 = vmatprep.subr.bf16.mxu0 0
  %160 = vmatpush1.bf16.msra.mxu0 %v149
  %161 = vmatprep.subr.bf16.mxu0 0
  %162 = vmatpush1.bf16.msra.mxu0 %v150
  %163 = vmatprep.subr.bf16.mxu0 0
  %164 = vmatpush1.bf16.msra.mxu0 0
  %165 = vmatprep.subr.bf16.mxu0 0
  %166 = vmatpush1.bf16.msra.mxu0 0
  %167 = vmatprep.subr.bf16.mxu0 0
  %168 = vmatpush1.bf16.msra.mxu0 0
  %169 = vmatprep.subr.bf16.mxu0 0
  %170 = vmatpush1.bf16.msra.mxu0 0
  %171 = vmatprep.subr.bf16.mxu0 0
  %172 = vmatpush1.bf16.msra.mxu0 0
  %173 = vmatprep.subr.bf16.mxu0 0
  %174 = vmatpush1.bf16.msra.mxu0 0
  %175 = vmatprep.subr.bf16.mxu0 0
  %176 = vmatpush1.bf16.msra.mxu0 0
  %177 = vmatprep.subr.bf16.mxu0 0
  %178 = vmatpush1.bf16.msra.mxu0 0
  %179 = vmatprep.subr.bf16.mxu0 0
  %180 = vmatpush1.bf16.msra.mxu0 0
  %181 = vmatprep.subr.bf16.mxu0 0
  %182 = vmatpush1.bf16.msra.mxu0 0
  %183 = vmatprep.subr.bf16.mxu0 0
  %184 = vmatpush1.bf16.msra.mxu0 0
  %185 = vmatprep.subr.bf16.mxu0 0
  %186 = vmatpush1.bf16.msra.mxu0 0
  %187 = vmatprep.mubr.bf16.mxu0 0
  %188 = vmatmul.mubr.bf16.gmra.mrb[0].mxu0 %v71
  %v189 = vpop.f32.mrb[0].mxu0
  %v190 = vadd.f32 %v129, %v189
  %v191 = vpop.f32.mrb[0].mxu0
  %v192 = vpop.f32.mrb[0].mxu0
  %v193 = vadd.f32 %v129, %v192
  %v194 = vpop.f32.mrb[0].mxu0
  %195 = vdwg.mxu0
  %196 = vst [vmem:[#allocation3] sm:$0xff] %v190
  %197 = vst [vmem:[#allocation3 + $0x8] sm:$0xff] %v193
  %v198 = vld [vmem:[%s2] sm:$0xf]
  %v199 = vld [vmem:[%s2 + $0x4] sm:$0xf]
  %v200 = vld [vmem:[%s2 + $0x8] sm:$0xf]
  %v201 = vld [vmem:[%s2 + $0xc] sm:$0xf]
  %v202 = vld [vmem:[%s5] sm:$0xf]
  %v203 = vld [vmem:[%s5 + $0x4] sm:$0xf]
  %v204 = vld [vmem:[%s5 + $0x8] sm:$0xf]
  %v205 = vld [vmem:[%s5 + $0xc] sm:$0xf]
  %v206 = vld [vmem:[#allocation2] sm:$0x3]
  %v211 = vunpack.c.l.b16 %v198
  %v212 = vunpack.c.l.b16 %v199
  %v213 = vunpack.c.l.b16 %v200
  %v214 = vunpack.c.l.b16 %v201
  %v215 = vpack.c.b16 %v212, %v211
  %v216 = vpack.c.b16 %v214, %v213
  %vm219 = vcmask 261120
  %v221 = vsel %vm219, 0, 0
  %223 = vmatprep.subr.bf16.mxu0 0
  %224 = vmatpush1.bf16.msra.mxu0 %v215
  %225 = vmatprep.subr.bf16.mxu0 0
  %226 = vmatpush1.bf16.msra.mxu0 %v216
  %227 = vmatprep.subr.bf16.mxu0 0
  %228 = vmatpush1.bf16.msra.mxu0 0
  %229 = vmatprep.subr.bf16.mxu0 0
  %230 = vmatpush1.bf16.msra.mxu0 0
  %231 = vmatprep.subr.bf16.mxu0 0
  %232 = vmatpush1.bf16.msra.mxu0 0
  %233 = vmatprep.subr.bf16.mxu0 0
  %234 = vmatpush1.bf16.msra.mxu0 0
  %235 = vmatprep.subr.bf16.mxu0 0
  %236 = vmatpush1.bf16.msra.mxu0 0
  %237 = vmatprep.subr.bf16.mxu0 0
  %238 = vmatpush1.bf16.msra.mxu0 0
  %239 = vmatprep.subr.bf16.mxu0 0
  %240 = vmatpush1.bf16.msra.mxu0 0
  %241 = vmatprep.subr.bf16.mxu0 0
  %242 = vmatpush1.bf16.msra.mxu0 0
  %243 = vmatprep.subr.bf16.mxu0 0
  %244 = vmatpush1.bf16.msra.mxu0 0
  %245 = vmatprep.subr.bf16.mxu0 0
  %246 = vmatpush1.bf16.msra.mxu0 0
  %247 = vmatprep.subr.bf16.mxu0 0
  %248 = vmatpush1.bf16.msra.mxu0 0
  %249 = vmatprep.subr.bf16.mxu0 0
  %250 = vmatpush1.bf16.msra.mxu0 0
  %251 = vmatprep.subr.bf16.mxu0 0
  %252 = vmatpush1.bf16.msra.mxu0 0
  %253 = vmatprep.subr.bf16.mxu0 0
  %254 = vmatpush1.bf16.msra.mxu0 0
  %255 = vmatprep.mubr.bf16.mxu0 0
  %256 = vmatmul.mubr.bf16.gmra.mrb[0].mxu0 %v221
  %v257 = vpop.f32.mrb[0].mxu0
  %v258 = vadd.f32 0.0, %v257
  %v259 = vpop.f32.mrb[0].mxu0
  %v260 = vpop.f32.mrb[0].mxu0
  %v261 = vpop.f32.mrb[0].mxu0
  %262 = vdwg.mxu0
  %v263 = vadd.f32 %v206, %v258
  %v264 = vxor.u32 %v263, 2147483648
  %v265 = vmul.f32 %v264, 1.442695
  %v266 = vpow.pop %v265
  %v267 = vadd.f32 %v266, 1.0
  %v268 = vrcp.pop %v267
  %v269 = vmul.f32 1.0, %v268
  %v270 = vtanh.pop %v263
  %v271 = vmul.f32 %v269, 0.0
  %273 = vrot.lane.b32.xlu0 %v270, 64
  %v274 = vpop.permute.xlu0 %273
  %v276 = vmul.f32 %v269, %v274
  %278 = vrot.lane.b32.xlu0 %v276, 32
  %v279 = vpop.permute.xlu0 %278
  %v281 = vadd.f32 %v271, %v279
  %v282 = vtanh.pop %v281
  %284 = vrot.lane.b32.xlu0 %v282, 64
  %v285 = vpop.permute.xlu0 %284
  %v287 = vmul.f32 %v269, %v285
  %289 = vrot.lane.b32.xlu0 %v287, 32
  %v290 = vpop.permute.xlu0 %289
  %vm292 = vcmask 254976
  %293 = vst.msk [vmem:[%s7] sm:$0x3] %vm292, %v290
  %s294 = scalar_lea.vmem [#allocation3], 14
  %v295 = vld [vmem:[%s294] sm:$0x3]
  %v300 = vunpack.c.l.b16 %v202
  %v301 = vunpack.c.l.b16 %v203
  %v302 = vunpack.c.l.b16 %v204
  %v303 = vunpack.c.l.b16 %v205
  %v304 = vpack.c.b16 %v301, %v300
  %v305 = vpack.c.b16 %v303, %v302
  %308 = vmatprep.subr.bf16.mxu0 0
  %309 = vmatpush1.bf16.msra.mxu0 %v304
  %310 = vmatprep.subr.bf16.mxu0 0
  %311 = vmatpush1.bf16.msra.mxu0 %v305
  %312 = vmatprep.subr.bf16.mxu0 0
  %313 = vmatpush1.bf16.msra.mxu0 0
  %314 = vmatprep.subr.bf16.mxu0 0
  %315 = vmatpush1.bf16.msra.mxu0 0
  %316 = vmatprep.subr.bf16.mxu0 0
  %317 = vmatpush1.bf16.msra.mxu0 0
  %318 = vmatprep.subr.bf16.mxu0 0
  %319 = vmatpush1.bf16.msra.mxu0 0
  %320 = vmatprep.subr.bf16.mxu0 0
  %321 = vmatpush1.bf16.msra.mxu0 0
  %322 = vmatprep.subr.bf16.mxu0 0
  %323 = vmatpush1.bf16.msra.mxu0 0
  %324 = vmatprep.subr.bf16.mxu0 0
  %325 = vmatpush1.bf16.msra.mxu0 0
  %326 = vmatprep.subr.bf16.mxu0 0
  %327 = vmatpush1.bf16.msra.mxu0 0
  %328 = vmatprep.subr.bf16.mxu0 0
  %329 = vmatpush1.bf16.msra.mxu0 0
  %330 = vmatprep.subr.bf16.mxu0 0
  %331 = vmatpush1.bf16.msra.mxu0 0
  %332 = vmatprep.subr.bf16.mxu0 0
  %333 = vmatpush1.bf16.msra.mxu0 0
  %334 = vmatprep.subr.bf16.mxu0 0
  %335 = vmatpush1.bf16.msra.mxu0 0
  %336 = vmatprep.subr.bf16.mxu0 0
  %337 = vmatpush1.bf16.msra.mxu0 0
  %338 = vmatprep.subr.bf16.mxu0 0
  %339 = vmatpush1.bf16.msra.mxu0 0
  %340 = vmatprep.mubr.bf16.mxu0 0
  %341 = vmatmul.mubr.bf16.gmra.mrb[0].mxu0 %v221
  %v342 = vpop.f32.mrb[0].mxu0
  %v343 = vadd.f32 0.0, %v342
  %v344 = vpop.f32.mrb[0].mxu0
  %v345 = vpop.f32.mrb[0].mxu0
  %v346 = vpop.f32.mrb[0].mxu0
  %347 = vdwg.mxu0
  %v348 = vadd.f32 %v295, %v343
  %v349 = vxor.u32 %v348, 2147483648
  %v350 = vmul.f32 %v349, 1.442695
  %v351 = vpow.pop %v350
  %v352 = vadd.f32 %v351, 1.0
  %v353 = vrcp.pop %v352
  %v354 = vmul.f32 1.0, %v353
  %v355 = vtanh.pop %v348
  %v356 = vmul.f32 %v354, 0.0
  %358 = vrot.lane.b32.xlu0 %v355, 64
  %v359 = vpop.permute.xlu0 %358
  %v361 = vmul.f32 %v354, %v359
  %363 = vrot.lane.b32.xlu0 %v361, 32
  %v364 = vpop.permute.xlu0 %363
  %v366 = vadd.f32 %v356, %v364
  %v367 = vtanh.pop %v366
  %369 = vrot.lane.b32.xlu0 %v367, 64
  %v370 = vpop.permute.xlu0 %369
  %v372 = vmul.f32 %v354, %v370
  %374 = vrot.lane.b32.xlu0 %v372, 64
  %v375 = vpop.permute.xlu0 %374
  %s377 = scalar_lea.vmem %s7, 14
  %vm378 = vcmask 517376
  %379 = vst.msk [vmem:[%s377] sm:$0x3] %vm378, %v375
  %s380 = scalar_lea.vmem [#allocation2], 2
  %v381 = vld [vmem:[%s380] sm:$0x3]
  %v382 = vpack.c.bf16 %v287, %v287
  %384 = vrot.lane.b32.xlu0 %v382, 32
  %v385 = vpop.permute.xlu0 %384
  %v387 = vsel %vm219, %v385, 0
  %389 = vmatprep.subr.bf16.mxu0 0
  %390 = vmatpush1.bf16.msra.mxu0 %v215
  %391 = vmatprep.subr.bf16.mxu0 0
  %392 = vmatpush1.bf16.msra.mxu0 %v216
  %393 = vmatprep.subr.bf16.mxu0 0
  %394 = vmatpush1.bf16.msra.mxu0 0
  %395 = vmatprep.subr.bf16.mxu0 0
  %396 = vmatpush1.bf16.msra.mxu0 0
  %397 = vmatprep.subr.bf16.mxu0 0
  %398 = vmatpush1.bf16.msra.mxu0 0
  %399 = vmatprep.subr.bf16.mxu0 0
  %400 = vmatpush1.bf16.msra.mxu0 0
  %401 = vmatprep.subr.bf16.mxu0 0
  %402 = vmatpush1.bf16.msra.mxu0 0
  %403 = vmatprep.subr.bf16.mxu0 0
  %404 = vmatpush1.bf16.msra.mxu0 0
  %405 = vmatprep.subr.bf16.mxu0 0
  %406 = vmatpush1.bf16.msra.mxu0 0
  %407 = vmatprep.subr.bf16.mxu0 0
  %408 = vmatpush1.bf16.msra.mxu0 0
  %409 = vmatprep.subr.bf16.mxu0 0
  %410 = vmatpush1.bf16.msra.mxu0 0
  %411 = vmatprep.subr.bf16.mxu0 0
  %412 = vmatpush1.bf16.msra.mxu0 0
  %413 = vmatprep.subr.bf16.mxu0 0
  %414 = vmatpush1.bf16.msra.mxu0 0
  %415 = vmatprep.subr.bf16.mxu0 0
  %416 = vmatpush1.bf16.msra.mxu0 0
  %417 = vmatprep.subr.bf16.mxu0 0
  %418 = vmatpush1.bf16.msra.mxu0 0
  %419 = vmatprep.subr.bf16.mxu0 0
  %420 = vmatpush1.bf16.msra.mxu0 0
  %421 = vmatprep.mubr.bf16.mxu0 0
  %422 = vmatmul.mubr.bf16.gmra.mrb[0].mxu0 %v387
  %v423 = vpop.f32.mrb[0].mxu0
  %v424 = vadd.f32 0.0, %v423
  %v425 = vpop.f32.mrb[0].mxu0
  %v426 = vpop.f32.mrb[0].mxu0
  %v427 = vpop.f32.mrb[0].mxu0
  %428 = vdwg.mxu0
  %v429 = vadd.f32 %v381, %v424
  %v430 = vxor.u32 %v429, 2147483648
  %v431 = vmul.f32 %v430, 1.442695
  %v432 = vpow.pop %v431
  %v433 = vadd.f32 %v432, 1.0
  %v434 = vrcp.pop %v433
  %v435 = vmul.f32 1.0, %v434
  %v436 = vtanh.pop %v429
  %v437 = vmul.f32 %v435, %v281
  %439 = vrot.lane.b32.xlu0 %v436, 64
  %v440 = vpop.permute.xlu0 %439
  %v442 = vmul.f32 %v435, %v440
  %444 = vrot.lane.b32.xlu0 %v442, 32
  %v445 = vpop.permute.xlu0 %444
  %v447 = vadd.f32 %v437, %v445
  %v448 = vtanh.pop %v447
  %450 = vrot.lane.b32.xlu0 %v448, 64
  %v451 = vpop.permute.xlu0 %450
  %v453 = vmul.f32 %v435, %v451
  %455 = vrot.lane.b32.xlu0 %v453, 32
  %v456 = vpop.permute.xlu0 %455
  %s458 = scalar_lea.vmem %s7, 2
  %459 = vst.msk [vmem:[%s458] sm:$0x3] %vm292, %v456
  %s460 = scalar_lea.vmem [#allocation3], 12
  %v461 = vld [vmem:[%s460] sm:$0x3]
  %v462 = vpack.c.bf16 %v372, %v372
  %464 = vrot.lane.b32.xlu0 %v462, 32
  %v465 = vpop.permute.xlu0 %464
  %v467 = vsel %vm219, %v465, 0
  %469 = vmatprep.subr.bf16.mxu0 0
  %470 = vmatpush1.bf16.msra.mxu0 %v304
  %471 = vmatprep.subr.bf16.mxu0 0
  %472 = vmatpush1.bf16.msra.mxu0 %v305
  %473 = vmatprep.subr.bf16.mxu0 0
  %474 = vmatpush1.bf16.msra.mxu0 0
  %475 = vmatprep.subr.bf16.mxu0 0
  %476 = vmatpush1.bf16.msra.mxu0 0
  %477 = vmatprep.subr.bf16.mxu0 0
  %478 = vmatpush1.bf16.msra.mxu0 0
  %479 = vmatprep.subr.bf16.mxu0 0
  %480 = vmatpush1.bf16.msra.mxu0 0
  %481 = vmatprep.subr.bf16.mxu0 0
  %482 = vmatpush1.bf16.msra.mxu0 0
  %483 = vmatprep.subr.bf16.mxu0 0
  %484 = vmatpush1.bf16.msra.mxu0 0
  %485 = vmatprep.subr.bf16.mxu0 0
  %486 = vmatpush1.bf16.msra.mxu0 0
  %487 = vmatprep.subr.bf16.mxu0 0
  %488 = vmatpush1.bf16.msra.mxu0 0
  %489 = vmatprep.subr.bf16.mxu0 0
  %490 = vmatpush1.bf16.msra.mxu0 0
  %491 = vmatprep.subr.bf16.mxu0 0
  %492 = vmatpush1.bf16.msra.mxu0 0
  %493 = vmatprep.subr.bf16.mxu0 0
  %494 = vmatpush1.bf16.msra.mxu0 0
  %495 = vmatprep.subr.bf16.mxu0 0
  %496 = vmatpush1.bf16.msra.mxu0 0
  %497 = vmatprep.subr.bf16.mxu0 0
  %498 = vmatpush1.bf16.msra.mxu0 0
  %499 = vmatprep.subr.bf16.mxu0 0
  %500 = vmatpush1.bf16.msra.mxu0 0
  %501 = vmatprep.mubr.bf16.mxu0 0
  %502 = vmatmul.mubr.bf16.gmra.mrb[0].mxu0 %v467
  %v503 = vpop.f32.mrb[0].mxu0
  %v504 = vadd.f32 0.0, %v503
  %v505 = vpop.f32.mrb[0].mxu0
  %v506 = vpop.f32.mrb[0].mxu0
  %v507 = vpop.f32.mrb[0].mxu0
  %508 = vdwg.mxu0
  %v509 = vadd.f32 %v461, %v504
  %v510 = vxor.u32 %v509, 2147483648
  %v511 = vmul.f32 %v510, 1.442695
  %v512 = vpow.pop %v511
  %v513 = vadd.f32 %v512, 1.0
  %v514 = vrcp.pop %v513
  %v515 = vmul.f32 1.0, %v514
  %v516 = vtanh.pop %v509
  %v517 = vmul.f32 %v515, %v366
  %519 = vrot.lane.b32.xlu0 %v516, 64
  %v520 = vpop.permute.xlu0 %519
  %v522 = vmul.f32 %v515, %v520
  %524 = vrot.lane.b32.xlu0 %v522, 32
  %v525 = vpop.permute.xlu0 %524
  %v527 = vadd.f32 %v517, %v525
  %v528 = vtanh.pop %v527
  %530 = vrot.lane.b32.xlu0 %v528, 64
  %v531 = vpop.permute.xlu0 %530
  %v533 = vmul.f32 %v515, %v531
  %535 = vrot.lane.b32.xlu0 %v533, 64
  %v536 = vpop.permute.xlu0 %535
  %s538 = scalar_lea.vmem %s7, 12
  %539 = vst.msk [vmem:[%s538] sm:$0x3] %vm378, %v536
  %s540 = scalar_lea.vmem [#allocation2], 4
  %v541 = vld [vmem:[%s540] sm:$0x3]
  %v542 = vpack.c.bf16 %v453, %v453
  %544 = vrot.lane.b32.xlu0 %v542, 32
  %v545 = vpop.permute.xlu0 %544
  %v547 = vsel %vm219, %v545, 0
  %549 = vmatprep.subr.bf16.mxu0 0
  %550 = vmatpush1.bf16.msra.mxu0 %v215
  %551 = vmatprep.subr.bf16.mxu0 0
  %552 = vmatpush1.bf16.msra.mxu0 %v216
  %553 = vmatprep.subr.bf16.mxu0 0
  %554 = vmatpush1.bf16.msra.mxu0 0
  %555 = vmatprep.subr.bf16.mxu0 0
  %556 = vmatpush1.bf16.msra.mxu0 0
  %557 = vmatprep.subr.bf16.mxu0 0
  %558 = vmatpush1.bf16.msra.mxu0 0
  %559 = vmatprep.subr.bf16.mxu0 0
  %560 = vmatpush1.bf16.msra.mxu0 0
  %561 = vmatprep.subr.bf16.mxu0 0
  %562 = vmatpush1.bf16.msra.mxu0 0
  %563 = vmatprep.subr.bf16.mxu0 0
  %564 = vmatpush1.bf16.msra.mxu0 0
  %565 = vmatprep.subr.bf16.mxu0 0
  %566 = vmatpush1.bf16.msra.mxu0 0
  %567 = vmatprep.subr.bf16.mxu0 0
  %568 = vmatpush1.bf16.msra.mxu0 0
  %569 = vmatprep.subr.bf16.mxu0 0
  %570 = vmatpush1.bf16.msra.mxu0 0
  %571 = vmatprep.subr.bf16.mxu0 0
  %572 = vmatpush1.bf16.msra.mxu0 0
  %573 = vmatprep.subr.bf16.mxu0 0
  %574 = vmatpush1.bf16.msra.mxu0 0
  %575 = vmatprep.subr.bf16.mxu0 0
  %576 = vmatpush1.bf16.msra.mxu0 0
  %577 = vmatprep.subr.bf16.mxu0 0
  %578 = vmatpush1.bf16.msra.mxu0 0
  %579 = vmatprep.subr.bf16.mxu0 0
  %580 = vmatpush1.bf16.msra.mxu0 0
  %581 = vmatprep.mubr.bf16.mxu0 0
  %582 = vmatmul.mubr.bf16.gmra.mrb[0].mxu0 %v547
  %v583 = vpop.f32.mrb[0].mxu0
  %v584 = vadd.f32 0.0, %v583
  %v585 = vpop.f32.mrb[0].mxu0
  %v586 = vpop.f32.mrb[0].mxu0
  %v587 = vpop.f32.mrb[0].mxu0
  %588 = vdwg.mxu0
  %v589 = vadd.f32 %v541, %v584
  %v590 = vxor.u32 %v589, 2147483648
  %v591 = vmul.f32 %v590, 1.442695
  %v592 = vpow.pop %v591
  %v593 = vadd.f32 %v592, 1.0
  %v594 = vrcp.pop %v593
  %v595 = vmul.f32 1.0, %v594
  %v596 = vtanh.pop %v589
  %v597 = vmul.f32 %v595, %v447
  %599 = vrot.lane.b32.xlu0 %v596, 64
  %v600 = vpop.permute.xlu0 %599
  %v602 = vmul.f32 %v595, %v600
  %604 = vrot.lane.b32.xlu0 %v602, 32
  %v605 = vpop.permute.xlu0 %604
  %v607 = vadd.f32 %v597, %v605
  %v608 = vtanh.pop %v607
  %610 = vrot.lane.b32.xlu0 %v608, 64
  %v611 = vpop.permute.xlu0 %610
  %v613 = vmul.f32 %v595, %v611
  %615 = vrot.lane.b32.xlu0 %v613, 32
  %v616 = vpop.permute.xlu0 %615
  %s618 = scalar_lea.vmem %s7, 4
  %619 = vst.msk [vmem:[%s618] sm:$0x3] %vm292, %v616
  %s620 = scalar_lea.vmem [#allocation3], 10
  %v621 = vld [vmem:[%s620] sm:$0x3]
  %v622 = vpack.c.bf16 %v533, %v533
  %624 = vrot.lane.b32.xlu0 %v622, 32
  %v625 = vpop.permute.xlu0 %624
  %v627 = vsel %vm219, %v625, 0
  %629 = vmatprep.subr.bf16.mxu0 0
  %630 = vmatpush1.bf16.msra.mxu0 %v304
  %631 = vmatprep.subr.bf16.mxu0 0
  %632 = vmatpush1.bf16.msra.mxu0 %v305
  %633 = vmatprep.subr.bf16.mxu0 0
  %634 = vmatpush1.bf16.msra.mxu0 0
  %635 = vmatprep.subr.bf16.mxu0 0
  %636 = vmatpush1.bf16.msra.mxu0 0
  %637 = vmatprep.subr.bf16.mxu0 0
  %638 = vmatpush1.bf16.msra.mxu0 0
  %639 = vmatprep.subr.bf16.mxu0 0
  %640 = vmatpush1.bf16.msra.mxu0 0
  %641 = vmatprep.subr.bf16.mxu0 0
  %642 = vmatpush1.bf16.msra.mxu0 0
  %643 = vmatprep.subr.bf16.mxu0 0
  %644 = vmatpush1.bf16.msra.mxu0 0
  %645 = vmatprep.subr.bf16.mxu0 0
  %646 = vmatpush1.bf16.msra.mxu0 0
  %647 = vmatprep.subr.bf16.mxu0 0
  %648 = vmatpush1.bf16.msra.mxu0 0
  %649 = vmatprep.subr.bf16.mxu0 0
  %650 = vmatpush1.bf16.msra.mxu0 0
  %651 = vmatprep.subr.bf16.mxu0 0
  %652 = vmatpush1.bf16.msra.mxu0 0
  %653 = vmatprep.subr.bf16.mxu0 0
  %654 = vmatpush1.bf16.msra.mxu0 0
  %655 = vmatprep.subr.bf16.mxu0 0
  %656 = vmatpush1.bf16.msra.mxu0 0
  %657 = vmatprep.subr.bf16.mxu0 0
  %658 = vmatpush1.bf16.msra.mxu0 0
  %659 = vmatprep.subr.bf16.mxu0 0
  %660 = vmatpush1.bf16.msra.mxu0 0
  %661 = vmatprep.mubr.bf16.mxu0 0
  %662 = vmatmul.mubr.bf16.gmra.mrb[0].mxu0 %v627
  %v663 = vpop.f32.mrb[0].mxu0
  %v664 = vadd.f32 0.0, %v663
  %v665 = vpop.f32.mrb[0].mxu0
  %v666 = vpop.f32.mrb[0].mxu0
  %v667 = vpop.f32.mrb[0].mxu0
  %668 = vdwg.mxu0
  %v669 = vadd.f32 %v621, %v664
  %v670 = vxor.u32 %v669, 2147483648
  %v671 = vmul.f32 %v670, 1.442695
  %v672 = vpow.pop %v671
  %v673 = vadd.f32 %v672, 1.0
  %v674 = vrcp.pop %v673
  %v675 = vmul.f32 1.0, %v674
  %v676 = vtanh.pop %v669
  %v677 = vmul.f32 %v675, %v527
  %679 = vrot.lane.b32.xlu0 %v676, 64
  %v680 = vpop.permute.xlu0 %679
  %v682 = vmul.f32 %v675, %v680
  %684 = vrot.lane.b32.xlu0 %v682, 32
  %v685 = vpop.permute.xlu0 %684
  %v687 = vadd.f32 %v677, %v685
  %v688 = vtanh.pop %v687
  %690 = vrot.lane.b32.xlu0 %v688, 64
  %v691 = vpop.permute.xlu0 %690
  %v693 = vmul.f32 %v675, %v691
  %695 = vrot.lane.b32.xlu0 %v693, 64
  %v696 = vpop.permute.xlu0 %695
  %s698 = scalar_lea.vmem %s7, 10
  %699 = vst.msk [vmem:[%s698] sm:$0x3] %vm378, %v696
  %s700 = scalar_lea.vmem [#allocation2], 6
  %v701 = vld [vmem:[%s700] sm:$0x3]
  %v702 = vpack.c.bf16 %v613, %v613
  %704 = vrot.lane.b32.xlu0 %v702, 32
  %v705 = vpop.permute.xlu0 %704
  %v707 = vsel %vm219, %v705, 0
  %709 = vmatprep.subr.bf16.mxu0 0
  %710 = vmatpush1.bf16.msra.mxu0 %v215
  %711 = vmatprep.subr.bf16.mxu0 0
  %712 = vmatpush1.bf16.msra.mxu0 %v216
  %713 = vmatprep.subr.bf16.mxu0 0
  %714 = vmatpush1.bf16.msra.mxu0 0
  %715 = vmatprep.subr.bf16.mxu0 0
  %716 = vmatpush1.bf16.msra.mxu0 0
  %717 = vmatprep.subr.bf16.mxu0 0
  %718 = vmatpush1.bf16.msra.mxu0 0
  %719 = vmatprep.subr.bf16.mxu0 0
  %720 = vmatpush1.bf16.msra.mxu0 0
  %721 = vmatprep.subr.bf16.mxu0 0
  %722 = vmatpush1.bf16.msra.mxu0 0
  %723 = vmatprep.subr.bf16.mxu0 0
  %724 = vmatpush1.bf16.msra.mxu0 0
  %725 = vmatprep.subr.bf16.mxu0 0
  %726 = vmatpush1.bf16.msra.mxu0 0
  %727 = vmatprep.subr.bf16.mxu0 0
  %728 = vmatpush1.bf16.msra.mxu0 0
  %729 = vmatprep.subr.bf16.mxu0 0
  %730 = vmatpush1.bf16.msra.mxu0 0
  %731 = vmatprep.subr.bf16.mxu0 0
  %732 = vmatpush1.bf16.msra.mxu0 0
  %733 = vmatprep.subr.bf16.mxu0 0
  %734 = vmatpush1.bf16.msra.mxu0 0
  %735 = vmatprep.subr.bf16.mxu0 0
  %736 = vmatpush1.bf16.msra.mxu0 0
  %737 = vmatprep.subr.bf16.mxu0 0
  %738 = vmatpush1.bf16.msra.mxu0 0
  %739 = vmatprep.subr.bf16.mxu0 0
  %740 = vmatpush1.bf16.msra.mxu0 0
  %741 = vmatprep.mubr.bf16.mxu0 0
  %742 = vmatmul.mubr.bf16.gmra.mrb[0].mxu0 %v707
  %v743 = vpop.f32.mrb[0].mxu0
  %v744 = vadd.f32 0.0, %v743
  %v745 = vpop.f32.mrb[0].mxu0
  %v746 = vpop.f32.mrb[0].mxu0
  %v747 = vpop.f32.mrb[0].mxu0
  %748 = vdwg.mxu0
  %v749 = vadd.f32 %v701, %v744
  %v750 = vxor.u32 %v749, 2147483648
  %v751 = vmul.f32 %v750, 1.442695
  %v752 = vpow.pop %v751
  %v753 = vadd.f32 %v752, 1.0
  %v754 = vrcp.pop %v753
  %v755 = vmul.f32 1.0, %v754
  %v756 = vtanh.pop %v749
  %v757 = vmul.f32 %v755, %v607
  %759 = vrot.lane.b32.xlu0 %v756, 64
  %v760 = vpop.permute.xlu0 %759
  %v762 = vmul.f32 %v755, %v760
  %764 = vrot.lane.b32.xlu0 %v762, 32
  %v765 = vpop.permute.xlu0 %764
  %v767 = vadd.f32 %v757, %v765
  %v768 = vtanh.pop %v767
  %770 = vrot.lane.b32.xlu0 %v768, 64
  %v771 = vpop.permute.xlu0 %770
  %v773 = vmul.f32 %v755, %v771
  %775 = vrot.lane.b32.xlu0 %v773, 32
  %v776 = vpop.permute.xlu0 %775
  %s778 = scalar_lea.vmem %s7, 6
  %779 = vst.msk [vmem:[%s778] sm:$0x3] %vm292, %v776
  %s780 = scalar_lea.vmem [#allocation3], 8
  %v781 = vld [vmem:[%s780] sm:$0x3]
  %v782 = vpack.c.bf16 %v693, %v693
  %784 = vrot.lane.b32.xlu0 %v782, 32
  %v785 = vpop.permute.xlu0 %784
  %v787 = vsel %vm219, %v785, 0
  %789 = vmatprep.subr.bf16.mxu0 0
  %790 = vmatpush1.bf16.msra.mxu0 %v304
  %791 = vmatprep.subr.bf16.mxu0 0
  %792 = vmatpush1.bf16.msra.mxu0 %v305
  %793 = vmatprep.subr.bf16.mxu0 0
  %794 = vmatpush1.bf16.msra.mxu0 0
  %795 = vmatprep.subr.bf16.mxu0 0
  %796 = vmatpush1.bf16.msra.mxu0 0
  %797 = vmatprep.subr.bf16.mxu0 0
  %798 = vmatpush1.bf16.msra.mxu0 0
  %799 = vmatprep.subr.bf16.mxu0 0
  %800 = vmatpush1.bf16.msra.mxu0 0
  %801 = vmatprep.subr.bf16.mxu0 0
  %802 = vmatpush1.bf16.msra.mxu0 0
  %803 = vmatprep.subr.bf16.mxu0 0
  %804 = vmatpush1.bf16.msra.mxu0 0
  %805 = vmatprep.subr.bf16.mxu0 0
  %806 = vmatpush1.bf16.msra.mxu0 0
  %807 = vmatprep.subr.bf16.mxu0 0
  %808 = vmatpush1.bf16.msra.mxu0 0
  %809 = vmatprep.subr.bf16.mxu0 0
  %810 = vmatpush1.bf16.msra.mxu0 0
  %811 = vmatprep.subr.bf16.mxu0 0
  %812 = vmatpush1.bf16.msra.mxu0 0
  %813 = vmatprep.subr.bf16.mxu0 0
  %814 = vmatpush1.bf16.msra.mxu0 0
  %815 = vmatprep.subr.bf16.mxu0 0
  %816 = vmatpush1.bf16.msra.mxu0 0
  %817 = vmatprep.subr.bf16.mxu0 0
  %818 = vmatpush1.bf16.msra.mxu0 0
  %819 = vmatprep.subr.bf16.mxu0 0
  %820 = vmatpush1.bf16.msra.mxu0 0
  %821 = vmatprep.mubr.bf16.mxu0 0
  %822 = vmatmul.mubr.bf16.gmra.mrb[0].mxu0 %v787
  %v823 = vpop.f32.mrb[0].mxu0
  %v824 = vadd.f32 0.0, %v823
  %v825 = vpop.f32.mrb[0].mxu0
  %v826 = vpop.f32.mrb[0].mxu0
  %v827 = vpop.f32.mrb[0].mxu0
  %828 = vdwg.mxu0
  %v829 = vadd.f32 %v781, %v824
  %v830 = vxor.u32 %v829, 2147483648
  %v831 = vmul.f32 %v830, 1.442695
  %v832 = vpow.pop %v831
  %v833 = vadd.f32 %v832, 1.0
  %v834 = vrcp.pop %v833
  %v835 = vmul.f32 1.0, %v834
  %v836 = vtanh.pop %v829
  %v837 = vmul.f32 %v835, %v687
  %839 = vrot.lane.b32.xlu0 %v836, 64
  %v840 = vpop.permute.xlu0 %839
  %v842 = vmul.f32 %v835, %v840
  %844 = vrot.lane.b32.xlu0 %v842, 32
  %v845 = vpop.permute.xlu0 %844
  %v847 = vadd.f32 %v837, %v845
  %v848 = vtanh.pop %v847
  %850 = vrot.lane.b32.xlu0 %v848, 64
  %v851 = vpop.permute.xlu0 %850
  %v853 = vmul.f32 %v835, %v851
  %855 = vrot.lane.b32.xlu0 %v853, 64
  %v856 = vpop.permute.xlu0 %855
  %s858 = scalar_lea.vmem %s7, 8
  %859 = vst.msk [vmem:[%s858] sm:$0x3] %vm378, %v856
  %s860 = scalar_lea.vmem [#allocation2], 8
  %v861 = vld [vmem:[%s860] sm:$0x3]
  %v862 = vpack.c.bf16 %v773, %v773
  %864 = vrot.lane.b32.xlu0 %v862, 32
  %v865 = vpop.permute.xlu0 %864
  %v867 = vsel %vm219, %v865, 0
  %869 = vmatprep.subr.bf16.mxu0 0
  %870 = vmatpush1.bf16.msra.mxu0 %v215
  %871 = vmatprep.subr.bf16.mxu0 0
  %872 = vmatpush1.bf16.msra.mxu0 %v216
  %873 = vmatprep.subr.bf16.mxu0 0
  %874 = vmatpush1.bf16.msra.mxu0 0
  %875 = vmatprep.subr.bf16.mxu0 0
  %876 = vmatpush1.bf16.msra.mxu0 0
  %877 = vmatprep.subr.bf16.mxu0 0
  %878 = vmatpush1.bf16.msra.mxu0 0
  %879 = vmatprep.subr.bf16.mxu0 0
  %880 = vmatpush1.bf16.msra.mxu0 0
  %881 = vmatprep.subr.bf16.mxu0 0
  %882 = vmatpush1.bf16.msra.mxu0 0
  %883 = vmatprep.subr.bf16.mxu0 0
  %884 = vmatpush1.bf16.msra.mxu0 0
  %885 = vmatprep.subr.bf16.mxu0 0
  %886 = vmatpush1.bf16.msra.mxu0 0
  %887 = vmatprep.subr.bf16.mxu0 0
  %888 = vmatpush1.bf16.msra.mxu0 0
  %889 = vmatprep.subr.bf16.mxu0 0
  %890 = vmatpush1.bf16.msra.mxu0 0
  %891 = vmatprep.subr.bf16.mxu0 0
  %892 = vmatpush1.bf16.msra.mxu0 0
  %893 = vmatprep.subr.bf16.mxu0 0
  %894 = vmatpush1.bf16.msra.mxu0 0
  %895 = vmatprep.subr.bf16.mxu0 0
  %896 = vmatpush1.bf16.msra.mxu0 0
  %897 = vmatprep.subr.bf16.mxu0 0
  %898 = vmatpush1.bf16.msra.mxu0 0
  %899 = vmatprep.subr.bf16.mxu0 0
  %900 = vmatpush1.bf16.msra.mxu0 0
  %901 = vmatprep.mubr.bf16.mxu0 0
  %902 = vmatmul.mubr.bf16.gmra.mrb[0].mxu0 %v867
  %v903 = vpop.f32.mrb[0].mxu0
  %v904 = vadd.f32 0.0, %v903
  %v905 = vpop.f32.mrb[0].mxu0
  %v906 = vpop.f32.mrb[0].mxu0
  %v907 = vpop.f32.mrb[0].mxu0
  %908 = vdwg.mxu0
  %v909 = vadd.f32 %v861, %v904
  %v910 = vxor.u32 %v909, 2147483648
  %v911 = vmul.f32 %v910, 1.442695
  %v912 = vpow.pop %v911
  %v913 = vadd.f32 %v912, 1.0
  %v914 = vrcp.pop %v913
  %v915 = vmul.f32 1.0, %v914
  %v916 = vtanh.pop %v909
  %v917 = vmul.f32 %v915, %v767
  %919 = vrot.lane.b32.xlu0 %v916, 64
  %v920 = vpop.permute.xlu0 %919
  %v922 = vmul.f32 %v915, %v920
  %924 = vrot.lane.b32.xlu0 %v922, 32
  %v925 = vpop.permute.xlu0 %924
  %v927 = vadd.f32 %v917, %v925
  %v928 = vtanh.pop %v927
  %930 = vrot.lane.b32.xlu0 %v928, 64
  %v931 = vpop.permute.xlu0 %930
  %v933 = vmul.f32 %v915, %v931
  %935 = vrot.lane.b32.xlu0 %v933, 32
  %v936 = vpop.permute.xlu0 %935
  %938 = vst.msk [vmem:[%s858] sm:$0x3] %vm292, %v936
  %s939 = scalar_lea.vmem [#allocation3], 6
  %v940 = vld [vmem:[%s939] sm:$0x3]
  %v941 = vpack.c.bf16 %v853, %v853
  %943 = vrot.lane.b32.xlu0 %v941, 32
  %v944 = vpop.permute.xlu0 %943
  %v946 = vsel %vm219, %v944, 0
  %948 = vmatprep.subr.bf16.mxu0 0
  %949 = vmatpush1.bf16.msra.mxu0 %v304
  %950 = vmatprep.subr.bf16.mxu0 0
  %951 = vmatpush1.bf16.msra.mxu0 %v305
  %952 = vmatprep.subr.bf16.mxu0 0
  %953 = vmatpush1.bf16.msra.mxu0 0
  %954 = vmatprep.subr.bf16.mxu0 0
  %955 = vmatpush1.bf16.msra.mxu0 0
  %956 = vmatprep.subr.bf16.mxu0 0
  %957 = vmatpush1.bf16.msra.mxu0 0
  %958 = vmatprep.subr.bf16.mxu0 0
  %959 = vmatpush1.bf16.msra.mxu0 0
  %960 = vmatprep.subr.bf16.mxu0 0
  %961 = vmatpush1.bf16.msra.mxu0 0
  %962 = vmatprep.subr.bf16.mxu0 0
  %963 = vmatpush1.bf16.msra.mxu0 0
  %964 = vmatprep.subr.bf16.mxu0 0
  %965 = vmatpush1.bf16.msra.mxu0 0
  %966 = vmatprep.subr.bf16.mxu0 0
  %967 = vmatpush1.bf16.msra.mxu0 0
  %968 = vmatprep.subr.bf16.mxu0 0
  %969 = vmatpush1.bf16.msra.mxu0 0
  %970 = vmatprep.subr.bf16.mxu0 0
  %971 = vmatpush1.bf16.msra.mxu0 0
  %972 = vmatprep.subr.bf16.mxu0 0
  %973 = vmatpush1.bf16.msra.mxu0 0
  %974 = vmatprep.subr.bf16.mxu0 0
  %975 = vmatpush1.bf16.msra.mxu0 0
  %976 = vmatprep.subr.bf16.mxu0 0
  %977 = vmatpush1.bf16.msra.mxu0 0
  %978 = vmatprep.subr.bf16.mxu0 0
  %979 = vmatpush1.bf16.msra.mxu0 0
  %980 = vmatprep.mubr.bf16.mxu0 0
  %981 = vmatmul.mubr.bf16.gmra.mrb[0].mxu0 %v946
  %v982 = vpop.f32.mrb[0].mxu0
  %v983 = vadd.f32 0.0, %v982
  %v984 = vpop.f32.mrb[0].mxu0
  %v985 = vpop.f32.mrb[0].mxu0
  %v986 = vpop.f32.mrb[0].mxu0
  %987 = vdwg.mxu0
  %v988 = vadd.f32 %v940, %v983
  %v989 = vxor.u32 %v988, 2147483648
  %v990 = vmul.f32 %v989, 1.442695
  %v991 = vpow.pop %v990
  %v992 = vadd.f32 %v991, 1.0
  %v993 = vrcp.pop %v992
  %v994 = vmul.f32 1.0, %v993
  %v995 = vtanh.pop %v988
  %v996 = vmul.f32 %v994, %v847
  %998 = vrot.lane.b32.xlu0 %v995, 64
  %v999 = vpop.permute.xlu0 %998
  %v1001 = vmul.f32 %v994, %v999
  %1003 = vrot.lane.b32.xlu0 %v1001, 32
  %v1004 = vpop.permute.xlu0 %1003
  %v1006 = vadd.f32 %v996, %v1004
  %v1007 = vtanh.pop %v1006
  %1009 = vrot.lane.b32.xlu0 %v1007, 64
  %v1010 = vpop.permute.xlu0 %1009
  %v1012 = vmul.f32 %v994, %v1010
  %1014 = vrot.lane.b32.xlu0 %v1012, 64
  %v1015 = vpop.permute.xlu0 %1014
  %1017 = vst.msk [vmem:[%s778] sm:$0x3] %vm378, %v1015
  %s1018 = scalar_lea.vmem [#allocation2], 10
  %v1019 = vld [vmem:[%s1018] sm:$0x3]
  %v1020 = vpack.c.bf16 %v933, %v933
  %1022 = vrot.lane.b32.xlu0 %v1020, 32
  %v1023 = vpop.permute.xlu0 %1022
  %v1025 = vsel %vm219, %v1023, 0
  %1027 = vmatprep.subr.bf16.mxu0 0
  %1028 = vmatpush1.bf16.msra.mxu0 %v215
  %1029 = vmatprep.subr.bf16.mxu0 0
  %1030 = vmatpush1.bf16.msra.mxu0 %v216
  %1031 = vmatprep.subr.bf16.mxu0 0
  %1032 = vmatpush1.bf16.msra.mxu0 0
  %1033 = vmatprep.subr.bf16.mxu0 0
  %1034 = vmatpush1.bf16.msra.mxu0 0
  %1035 = vmatprep.subr.bf16.mxu0 0
  %1036 = vmatpush1.bf16.msra.mxu0 0
  %1037 = vmatprep.subr.bf16.mxu0 0
  %1038 = vmatpush1.bf16.msra.mxu0 0
  %1039 = vmatprep.subr.bf16.mxu0 0
  %1040 = vmatpush1.bf16.msra.mxu0 0
  %1041 = vmatprep.subr.bf16.mxu0 0
  %1042 = vmatpush1.bf16.msra.mxu0 0
  %1043 = vmatprep.subr.bf16.mxu0 0
  %1044 = vmatpush1.bf16.msra.mxu0 0
  %1045 = vmatprep.subr.bf16.mxu0 0
  %1046 = vmatpush1.bf16.msra.mxu0 0
  %1047 = vmatprep.subr.bf16.mxu0 0
  %1048 = vmatpush1.bf16.msra.mxu0 0
  %1049 = vmatprep.subr.bf16.mxu0 0
  %1050 = vmatpush1.bf16.msra.mxu0 0
  %1051 = vmatprep.subr.bf16.mxu0 0
  %1052 = vmatpush1.bf16.msra.mxu0 0
  %1053 = vmatprep.subr.bf16.mxu0 0
  %1054 = vmatpush1.bf16.msra.mxu0 0
  %1055 = vmatprep.subr.bf16.mxu0 0
  %1056 = vmatpush1.bf16.msra.mxu0 0
  %1057 = vmatprep.subr.bf16.mxu0 0
  %1058 = vmatpush1.bf16.msra.mxu0 0
  %1059 = vmatprep.mubr.bf16.mxu0 0
  %1060 = vmatmul.mubr.bf16.gmra.mrb[0].mxu0 %v1025
  %v1061 = vpop.f32.mrb[0].mxu0
  %v1062 = vadd.f32 0.0, %v1061
  %v1063 = vpop.f32.mrb[0].mxu0
  %v1064 = vpop.f32.mrb[0].mxu0
  %v1065 = vpop.f32.mrb[0].mxu0
  %1066 = vdwg.mxu0
  %v1067 = vadd.f32 %v1019, %v1062
  %v1068 = vxor.u32 %v1067, 2147483648
  %v1069 = vmul.f32 %v1068, 1.442695
  %v1070 = vpow.pop %v1069
  %v1071 = vadd.f32 %v1070, 1.0
  %v1072 = vrcp.pop %v1071
  %v1073 = vmul.f32 1.0, %v1072
  %v1074 = vtanh.pop %v1067
  %v1075 = vmul.f32 %v1073, %v927
  %1077 = vrot.lane.b32.xlu0 %v1074, 64
  %v1078 = vpop.permute.xlu0 %1077
  %v1080 = vmul.f32 %v1073, %v1078
  %1082 = vrot.lane.b32.xlu0 %v1080, 32
  %v1083 = vpop.permute.xlu0 %1082
  %v1085 = vadd.f32 %v1075, %v1083
  %v1086 = vtanh.pop %v1085
  %1088 = vrot.lane.b32.xlu0 %v1086, 64
  %v1089 = vpop.permute.xlu0 %1088
  %v1091 = vmul.f32 %v1073, %v1089
  %1093 = vrot.lane.b32.xlu0 %v1091, 32
  %v1094 = vpop.permute.xlu0 %1093
  %1096 = vst.msk [vmem:[%s698] sm:$0x3] %vm292, %v1094
  %s1097 = scalar_lea.vmem [#allocation3], 4
  %v1098 = vld [vmem:[%s1097] sm:$0x3]
  %v1099 = vpack.c.bf16 %v1012, %v1012
  %1101 = vrot.lane.b32.xlu0 %v1099, 32
  %v1102 = vpop.permute.xlu0 %1101
  %v1104 = vsel %vm219, %v1102, 0
  %1106 = vmatprep.subr.bf16.mxu0 0
  %1107 = vmatpush1.bf16.msra.mxu0 %v304
  %1108 = vmatprep.subr.bf16.mxu0 0
  %1109 = vmatpush1.bf16.msra.mxu0 %v305
  %1110 = vmatprep.subr.bf16.mxu0 0
  %1111 = vmatpush1.bf16.msra.mxu0 0
  %1112 = vmatprep.subr.bf16.mxu0 0
  %1113 = vmatpush1.bf16.msra.mxu0 0
  %1114 = vmatprep.subr.bf16.mxu0 0
  %1115 = vmatpush1.bf16.msra.mxu0 0
  %1116 = vmatprep.subr.bf16.mxu0 0
  %1117 = vmatpush1.bf16.msra.mxu0 0
  %1118 = vmatprep.subr.bf16.mxu0 0
  %1119 = vmatpush1.bf16.msra.mxu0 0
  %1120 = vmatprep.subr.bf16.mxu0 0
  %1121 = vmatpush1.bf16.msra.mxu0 0
  %1122 = vmatprep.subr.bf16.mxu0 0
  %1123 = vmatpush1.bf16.msra.mxu0 0
  %1124 = vmatprep.subr.bf16.mxu0 0
  %1125 = vmatpush1.bf16.msra.mxu0 0
  %1126 = vmatprep.subr.bf16.mxu0 0
  %1127 = vmatpush1.bf16.msra.mxu0 0
  %1128 = vmatprep.subr.bf16.mxu0 0
  %1129 = vmatpush1.bf16.msra.mxu0 0
  %1130 = vmatprep.subr.bf16.mxu0 0
  %1131 = vmatpush1.bf16.msra.mxu0 0
  %1132 = vmatprep.subr.bf16.mxu0 0
  %1133 = vmatpush1.bf16.msra.mxu0 0
  %1134 = vmatprep.subr.bf16.mxu0 0
  %1135 = vmatpush1.bf16.msra.mxu0 0
  %1136 = vmatprep.subr.bf16.mxu0 0
  %1137 = vmatpush1.bf16.msra.mxu0 0
  %1138 = vmatprep.mubr.bf16.mxu0 0
  %1139 = vmatmul.mubr.bf16.gmra.mrb[0].mxu0 %v1104
  %v1140 = vpop.f32.mrb[0].mxu0
  %v1141 = vadd.f32 0.0, %v1140
  %v1142 = vpop.f32.mrb[0].mxu0
  %v1143 = vpop.f32.mrb[0].mxu0
  %v1144 = vpop.f32.mrb[0].mxu0
  %1145 = vdwg.mxu0
  %v1146 = vadd.f32 %v1098, %v1141
  %v1147 = vxor.u32 %v1146, 2147483648
  %v1148 = vmul.f32 %v1147, 1.442695
  %v1149 = vpow.pop %v1148
  %v1150 = vadd.f32 %v1149, 1.0
  %v1151 = vrcp.pop %v1150
  %v1152 = vmul.f32 1.0, %v1151
  %v1153 = vtanh.pop %v1146
  %v1154 = vmul.f32 %v1152, %v1006
  %1156 = vrot.lane.b32.xlu0 %v1153, 64
  %v1157 = vpop.permute.xlu0 %1156
  %v1159 = vmul.f32 %v1152, %v1157
  %1161 = vrot.lane.b32.xlu0 %v1159, 32
  %v1162 = vpop.permute.xlu0 %1161
  %v1164 = vadd.f32 %v1154, %v1162
  %v1165 = vtanh.pop %v1164
  %1167 = vrot.lane.b32.xlu0 %v1165, 64
  %v1168 = vpop.permute.xlu0 %1167
  %v1170 = vmul.f32 %v1152, %v1168
  %1172 = vrot.lane.b32.xlu0 %v1170, 64
  %v1173 = vpop.permute.xlu0 %1172
  %1175 = vst.msk [vmem:[%s618] sm:$0x3] %vm378, %v1173
  %s1176 = scalar_lea.vmem [#allocation2], 12
  %v1177 = vld [vmem:[%s1176] sm:$0x3]
  %v1178 = vpack.c.bf16 %v1091, %v1091
  %1180 = vrot.lane.b32.xlu0 %v1178, 32
  %v1181 = vpop.permute.xlu0 %1180
  %v1183 = vsel %vm219, %v1181, 0
  %1185 = vmatprep.subr.bf16.mxu0 0
  %1186 = vmatpush1.bf16.msra.mxu0 %v215
  %1187 = vmatprep.subr.bf16.mxu0 0
  %1188 = vmatpush1.bf16.msra.mxu0 %v216
  %1189 = vmatprep.subr.bf16.mxu0 0
  %1190 = vmatpush1.bf16.msra.mxu0 0
  %1191 = vmatprep.subr.bf16.mxu0 0
  %1192 = vmatpush1.bf16.msra.mxu0 0
  %1193 = vmatprep.subr.bf16.mxu0 0
  %1194 = vmatpush1.bf16.msra.mxu0 0
  %1195 = vmatprep.subr.bf16.mxu0 0
  %1196 = vmatpush1.bf16.msra.mxu0 0
  %1197 = vmatprep.subr.bf16.mxu0 0
  %1198 = vmatpush1.bf16.msra.mxu0 0
  %1199 = vmatprep.subr.bf16.mxu0 0
  %1200 = vmatpush1.bf16.msra.mxu0 0
  %1201 = vmatprep.subr.bf16.mxu0 0
  %1202 = vmatpush1.bf16.msra.mxu0 0
  %1203 = vmatprep.subr.bf16.mxu0 0
  %1204 = vmatpush1.bf16.msra.mxu0 0
  %1205 = vmatprep.subr.bf16.mxu0 0
  %1206 = vmatpush1.bf16.msra.mxu0 0
  %1207 = vmatprep.subr.bf16.mxu0 0
  %1208 = vmatpush1.bf16.msra.mxu0 0
  %1209 = vmatprep.subr.bf16.mxu0 0
  %1210 = vmatpush1.bf16.msra.mxu0 0
  %1211 = vmatprep.subr.bf16.mxu0 0
  %1212 = vmatpush1.bf16.msra.mxu0 0
  %1213 = vmatprep.subr.bf16.mxu0 0
  %1214 = vmatpush1.bf16.msra.mxu0 0
  %1215 = vmatprep.subr.bf16.mxu0 0
  %1216 = vmatpush1.bf16.msra.mxu0 0
  %1217 = vmatprep.mubr.bf16.mxu0 0
  %1218 = vmatmul.mubr.bf16.gmra.mrb[0].mxu0 %v1183
  %v1219 = vpop.f32.mrb[0].mxu0
  %v1220 = vadd.f32 0.0, %v1219
  %v1221 = vpop.f32.mrb[0].mxu0
  %v1222 = vpop.f32.mrb[0].mxu0
  %v1223 = vpop.f32.mrb[0].mxu0
  %1224 = vdwg.mxu0
  %v1225 = vadd.f32 %v1177, %v1220
  %v1226 = vxor.u32 %v1225, 2147483648
  %v1227 = vmul.f32 %v1226, 1.442695
  %v1228 = vpow.pop %v1227
  %v1229 = vadd.f32 %v1228, 1.0
  %v1230 = vrcp.pop %v1229
  %v1231 = vmul.f32 1.0, %v1230
  %v1232 = vtanh.pop %v1225
  %v1233 = vmul.f32 %v1231, %v1085
  %1235 = vrot.lane.b32.xlu0 %v1232, 64
  %v1236 = vpop.permute.xlu0 %1235
  %v1238 = vmul.f32 %v1231, %v1236
  %1240 = vrot.lane.b32.xlu0 %v1238, 32
  %v1241 = vpop.permute.xlu0 %1240
  %v1243 = vadd.f32 %v1233, %v1241
  %v1244 = vtanh.pop %v1243
  %1246 = vrot.lane.b32.xlu0 %v1244, 64
  %v1247 = vpop.permute.xlu0 %1246
  %v1249 = vmul.f32 %v1231, %v1247
  %1251 = vrot.lane.b32.xlu0 %v1249, 32
  %v1252 = vpop.permute.xlu0 %1251
  %1254 = vst.msk [vmem:[%s538] sm:$0x3] %vm292, %v1252
  %s1255 = scalar_lea.vmem [#allocation3], 2
  %v1256 = vld [vmem:[%s1255] sm:$0x3]
  %v1257 = vpack.c.bf16 %v1170, %v1170
  %1259 = vrot.lane.b32.xlu0 %v1257, 32
  %v1260 = vpop.permute.xlu0 %1259
  %v1262 = vsel %vm219, %v1260, 0
  %1264 = vmatprep.subr.bf16.mxu0 0
  %1265 = vmatpush1.bf16.msra.mxu0 %v304
  %1266 = vmatprep.subr.bf16.mxu0 0
  %1267 = vmatpush1.bf16.msra.mxu0 %v305
  %1268 = vmatprep.subr.bf16.mxu0 0
  %1269 = vmatpush1.bf16.msra.mxu0 0
  %1270 = vmatprep.subr.bf16.mxu0 0
  %1271 = vmatpush1.bf16.msra.mxu0 0
  %1272 = vmatprep.subr.bf16.mxu0 0
  %1273 = vmatpush1.bf16.msra.mxu0 0
  %1274 = vmatprep.subr.bf16.mxu0 0
  %1275 = vmatpush1.bf16.msra.mxu0 0
  %1276 = vmatprep.subr.bf16.mxu0 0
  %1277 = vmatpush1.bf16.msra.mxu0 0
  %1278 = vmatprep.subr.bf16.mxu0 0
  %1279 = vmatpush1.bf16.msra.mxu0 0
  %1280 = vmatprep.subr.bf16.mxu0 0
  %1281 = vmatpush1.bf16.msra.mxu0 0
  %1282 = vmatprep.subr.bf16.mxu0 0
  %1283 = vmatpush1.bf16.msra.mxu0 0
  %1284 = vmatprep.subr.bf16.mxu0 0
  %1285 = vmatpush1.bf16.msra.mxu0 0
  %1286 = vmatprep.subr.bf16.mxu0 0
  %1287 = vmatpush1.bf16.msra.mxu0 0
  %1288 = vmatprep.subr.bf16.mxu0 0
  %1289 = vmatpush1.bf16.msra.mxu0 0
  %1290 = vmatprep.subr.bf16.mxu0 0
  %1291 = vmatpush1.bf16.msra.mxu0 0
  %1292 = vmatprep.subr.bf16.mxu0 0
  %1293 = vmatpush1.bf16.msra.mxu0 0
  %1294 = vmatprep.subr.bf16.mxu0 0
  %1295 = vmatpush1.bf16.msra.mxu0 0
  %1296 = vmatprep.mubr.bf16.mxu0 0
  %1297 = vmatmul.mubr.bf16.gmra.mrb[0].mxu0 %v1262
  %v1298 = vpop.f32.mrb[0].mxu0
  %v1299 = vadd.f32 0.0, %v1298
  %v1300 = vpop.f32.mrb[0].mxu0
  %v1301 = vpop.f32.mrb[0].mxu0
  %v1302 = vpop.f32.mrb[0].mxu0
  %1303 = vdwg.mxu0
  %v1304 = vadd.f32 %v1256, %v1299
  %v1305 = vxor.u32 %v1304, 2147483648
  %v1306 = vmul.f32 %v1305, 1.442695
  %v1307 = vpow.pop %v1306
  %v1308 = vadd.f32 %v1307, 1.0
  %v1309 = vrcp.pop %v1308
  %v1310 = vmul.f32 1.0, %v1309
  %v1311 = vtanh.pop %v1304
  %v1312 = vmul.f32 %v1310, %v1164
  %1314 = vrot.lane.b32.xlu0 %v1311, 64
  %v1315 = vpop.permute.xlu0 %1314
  %v1317 = vmul.f32 %v1310, %v1315
  %1319 = vrot.lane.b32.xlu0 %v1317, 32
  %v1320 = vpop.permute.xlu0 %1319
  %v1322 = vadd.f32 %v1312, %v1320
  %v1323 = vtanh.pop %v1322
  %1325 = vrot.lane.b32.xlu0 %v1323, 64
  %v1326 = vpop.permute.xlu0 %1325
  %v1328 = vmul.f32 %v1310, %v1326
  %1330 = vrot.lane.b32.xlu0 %v1328, 64
  %v1331 = vpop.permute.xlu0 %1330
  %1333 = vst.msk [vmem:[%s458] sm:$0x3] %vm378, %v1331
  %s1334 = scalar_lea.vmem [#allocation2], 14
  %v1335 = vld [vmem:[%s1334] sm:$0x3]
  %v1336 = vpack.c.bf16 %v1249, %v1249
  %1338 = vrot.lane.b32.xlu0 %v1336, 32
  %v1339 = vpop.permute.xlu0 %1338
  %v1341 = vsel %vm219, %v1339, 0
  %1343 = vmatprep.subr.bf16.mxu0 0
  %1344 = vmatpush1.bf16.msra.mxu0 %v215
  %1345 = vmatprep.subr.bf16.mxu0 0
  %1346 = vmatpush1.bf16.msra.mxu0 %v216
  %1347 = vmatprep.subr.bf16.mxu0 0
  %1348 = vmatpush1.bf16.msra.mxu0 0
  %1349 = vmatprep.subr.bf16.mxu0 0
  %1350 = vmatpush1.bf16.msra.mxu0 0
  %1351 = vmatprep.subr.bf16.mxu0 0
  %1352 = vmatpush1.bf16.msra.mxu0 0
  %1353 = vmatprep.subr.bf16.mxu0 0
  %1354 = vmatpush1.bf16.msra.mxu0 0
  %1355 = vmatprep.subr.bf16.mxu0 0
  %1356 = vmatpush1.bf16.msra.mxu0 0
  %1357 = vmatprep.subr.bf16.mxu0 0
  %1358 = vmatpush1.bf16.msra.mxu0 0
  %1359 = vmatprep.subr.bf16.mxu0 0
  %1360 = vmatpush1.bf16.msra.mxu0 0
  %1361 = vmatprep.subr.bf16.mxu0 0
  %1362 = vmatpush1.bf16.msra.mxu0 0
  %1363 = vmatprep.subr.bf16.mxu0 0
  %1364 = vmatpush1.bf16.msra.mxu0 0
  %1365 = vmatprep.subr.bf16.mxu0 0
  %1366 = vmatpush1.bf16.msra.mxu0 0
  %1367 = vmatprep.subr.bf16.mxu0 0
  %1368 = vmatpush1.bf16.msra.mxu0 0
  %1369 = vmatprep.subr.bf16.mxu0 0
  %1370 = vmatpush1.bf16.msra.mxu0 0
  %1371 = vmatprep.subr.bf16.mxu0 0
  %1372 = vmatpush1.bf16.msra.mxu0 0
  %1373 = vmatprep.subr.bf16.mxu0 0
  %1374 = vmatpush1.bf16.msra.mxu0 0
  %1375 = vmatprep.mubr.bf16.mxu0 0
  %1376 = vmatmul.mubr.bf16.gmra.mrb[0].mxu0 %v1341
  %v1377 = vpop.f32.mrb[0].mxu0
  %v1378 = vadd.f32 0.0, %v1377
  %v1379 = vpop.f32.mrb[0].mxu0
  %v1380 = vpop.f32.mrb[0].mxu0
  %v1381 = vpop.f32.mrb[0].mxu0
  %1382 = vdwg.mxu0
  %v1383 = vadd.f32 %v1335, %v1378
  %v1384 = vxor.u32 %v1383, 2147483648
  %v1385 = vmul.f32 %v1384, 1.442695
  %v1386 = vpow.pop %v1385
  %v1387 = vadd.f32 %v1386, 1.0
  %v1388 = vrcp.pop %v1387
  %v1389 = vmul.f32 1.0, %v1388
  %v1390 = vtanh.pop %v1383
  %v1391 = vmul.f32 %v1389, %v1243
  %1393 = vrot.lane.b32.xlu0 %v1390, 64
  %v1394 = vpop.permute.xlu0 %1393
  %v1396 = vmul.f32 %v1389, %v1394
  %1398 = vrot.lane.b32.xlu0 %v1396, 32
  %v1399 = vpop.permute.xlu0 %1398
  %v1401 = vadd.f32 %v1391, %v1399
  %v1402 = vtanh.pop %v1401
  %1404 = vrot.lane.b32.xlu0 %v1402, 64
  %v1405 = vpop.permute.xlu0 %1404
  %v1407 = vmul.f32 %v1389, %v1405
  %1409 = vrot.lane.b32.xlu0 %v1407, 32
  %v1410 = vpop.permute.xlu0 %1409
  %1412 = vst.msk [vmem:[%s377] sm:$0x3] %vm292, %v1410
  %v1413 = vld [vmem:[#allocation3] sm:$0x3]
  %v1414 = vpack.c.bf16 %v1328, %v1328
  %1416 = vrot.lane.b32.xlu0 %v1414, 32
  %v1417 = vpop.permute.xlu0 %1416
  %v1419 = vsel %vm219, %v1417, 0
  %1421 = vmatprep.subr.bf16.mxu0 0
  %1422 = vmatpush1.bf16.msra.mxu0 %v304
  %1423 = vmatprep.subr.bf16.mxu0 0
  %1424 = vmatpush1.bf16.msra.mxu0 %v305
  %1425 = vmatprep.subr.bf16.mxu0 0
  %1426 = vmatpush1.bf16.msra.mxu0 0
  %1427 = vmatprep.subr.bf16.mxu0 0
  %1428 = vmatpush1.bf16.msra.mxu0 0
  %1429 = vmatprep.subr.bf16.mxu0 0
  %1430 = vmatpush1.bf16.msra.mxu0 0
  %1431 = vmatprep.subr.bf16.mxu0 0
  %1432 = vmatpush1.bf16.msra.mxu0 0
  %1433 = vmatprep.subr.bf16.mxu0 0
  %1434 = vmatpush1.bf16.msra.mxu0 0
  %1435 = vmatprep.subr.bf16.mxu0 0
  %1436 = vmatpush1.bf16.msra.mxu0 0
  %1437 = vmatprep.subr.bf16.mxu0 0
  %1438 = vmatpush1.bf16.msra.mxu0 0
  %1439 = vmatprep.subr.bf16.mxu0 0
  %1440 = vmatpush1.bf16.msra.mxu0 0
  %1441 = vmatprep.subr.bf16.mxu0 0
  %1442 = vmatpush1.bf16.msra.mxu0 0
  %1443 = vmatprep.subr.bf16.mxu0 0
  %1444 = vmatpush1.bf16.msra.mxu0 0
  %1445 = vmatprep.subr.bf16.mxu0 0
  %1446 = vmatpush1.bf16.msra.mxu0 0
  %1447 = vmatprep.subr.bf16.mxu0 0
  %1448 = vmatpush1.bf16.msra.mxu0 0
  %1449 = vmatprep.subr.bf16.mxu0 0
  %1450 = vmatpush1.bf16.msra.mxu0 0
  %1451 = vmatprep.subr.bf16.mxu0 0
  %1452 = vmatpush1.bf16.msra.mxu0 0
  %1453 = vmatprep.mubr.bf16.mxu0 0
  %1454 = vmatmul.mubr.bf16.gmra.mrb[0].mxu0 %v1419
  %v1455 = vpop.f32.mrb[0].mxu0
  %v1456 = vadd.f32 0.0, %v1455
  %v1457 = vpop.f32.mrb[0].mxu0
  %v1458 = vpop.f32.mrb[0].mxu0
  %v1459 = vpop.f32.mrb[0].mxu0
  %1460 = vdwg.mxu0
  %v1461 = vadd.f32 %v1413, %v1456
  %v1462 = vxor.u32 %v1461, 2147483648
  %v1463 = vmul.f32 %v1462, 1.442695
  %v1464 = vpow.pop %v1463
  %v1465 = vadd.f32 %v1464, 1.0
  %v1466 = vrcp.pop %v1465
  %v1467 = vmul.f32 1.0, %v1466
  %v1468 = vtanh.pop %v1461
  %v1469 = vmul.f32 %v1467, %v1322
  %1471 = vrot.lane.b32.xlu0 %v1468, 64
  %v1472 = vpop.permute.xlu0 %1471
  %v1474 = vmul.f32 %v1467, %v1472
  %1476 = vrot.lane.b32.xlu0 %v1474, 32
  %v1477 = vpop.permute.xlu0 %1476
  %v1479 = vadd.f32 %v1469, %v1477
  %v1480 = vtanh.pop %v1479
  %1482 = vrot.lane.b32.xlu0 %v1480, 64
  %v1483 = vpop.permute.xlu0 %1482
  %v1485 = vmul.f32 %v1467, %v1483
  %1487 = vrot.lane.b32.xlu0 %v1485, 64
  %v1488 = vpop.permute.xlu0 %1487
  %1490 = vst.msk [vmem:[%s7] sm:$0x3] %vm378, %v1488
  // Predicated region
  $region30: #{lstm_sentence_encoding.3} parent=0 // pred_check
    _
  $region31: #{lstm_sentence_encoding.3} parent=0 // pred_check_branch
    %1492 = sbr.rel (0) target = $region33
  $region32: #{lstm_sentence_encoding.3} parent=0 // pred_region
    _
  $region33: #{lstm_sentence_encoding.3} parent=0 // pred_fallthru
    _
  // Predicated region
  $region34: #{lstm_sentence_encoding.3} parent=0 // pred_check
    _
  $region35: #{lstm_sentence_encoding.3} parent=0 // pred_check_branch
    %1494 = sbr.rel (0) target = $region37
  $region36: #{lstm_sentence_encoding.3} parent=0 // pred_region
    _
  $region37: #{lstm_sentence_encoding.3} parent=0 // pred_fallthru
    _

</llo_original>
